<compile_context>
chip_gen: v6e
topology: v6e:2x2x1
jax: 0.10.0
libtpu: 0.0.40
codegen_flags: <defaults>
</compile_context>

<pallas_src>
import jax
import jax.numpy as jnp
import numpy as np
from jax.experimental import pallas as pl
from jax.experimental.pallas import tpu as pltpu


# ----------------------------------------------------------------------------
# Fused Pallas kernel:
#   conv1 -> pool -> relu -> conv2 -> pool -> relu -> fc1 -> relu -> fc2
#   -> log_softmax
# ----------------------------------------------------------------------------
def fused_net_kernel(x_ref, t1_ref, b1_ref, t2_ref, b2_ref,
                     w1g_ref, fc1b_ref, fc2w_ref, fc2b_ref, out_ref):
    f32 = jnp.float32
    TB = x_ref.shape[1]          # batch tile (multiple of 8, on the sublane axis)

    # ---- conv1: 5x5, 1 -> 10 channels, as 5 banded matmuls over W ----------
    # rows: (i, b) = i*TB + b   (i = conv1 output row, 0..23)
    # cols: (j, c) = j*10 + c   (j = conv1 output col, 0..23; c = channel)
    c1 = jnp.zeros((24 * TB, 240), f32)
    for ky in range(5):
        xk = x_ref[ky:ky + 24, :, :].reshape(24 * TB, 28)
        c1 = c1 + jnp.dot(xk, t1_ref[ky], preferred_element_type=f32)
    c1 = c1 + b1_ref[...]

    # ---- 2x2 max-pool + ReLU (pool+bias commute; relu after pool) ----------
    c1 = c1.reshape(12, 2 * TB, 240)
    c1 = jnp.maximum(c1[:, :TB, :], c1[:, TB:, :])        # pool rows -> (12, TB, 240)
    h1 = jnp.maximum(c1[:, :, :230], c1[:, :, 10:])       # pool cols (valid @ col%20 < 10)
    h1 = jnp.maximum(h1, 0.0)                             # (12, TB, 230)

    # ---- conv2: 5x5, 10 -> 20 channels (dead cols killed by zeros in t2) ---
    # TODO(synk): Dropout2d on the conv2 output is identity (eval mode).
    c2 = jnp.zeros((8 * TB, 160), f32)
    for ky in range(5):
        hk = h1[ky:ky + 8].reshape(8 * TB, 230)
        c2 = c2 + jnp.dot(hk, t2_ref[ky], preferred_element_type=f32)
    c2 = c2 + b2_ref[...]

    # ---- 2x2 max-pool + ReLU ------------------------------------------------
    c2 = c2.reshape(4, 2 * TB, 160)
    c2 = jnp.maximum(c2[:, :TB, :], c2[:, TB:, :])        # (4, TB, 160)
    h2 = jnp.maximum(c2[:, :, :140], c2[:, :, 20:])       # (4, TB, 140)
    h2 = jnp.maximum(h2, 0.0)

    # ---- fc1 (320 -> 50) as 4 matmuls over the pooled-row axis, + ReLU -----
    # TODO(synk): F.dropout(p=0.25) after fc1 is identity (eval mode).
    a1 = jnp.zeros((TB, 50), f32)
    for h in range(4):
        a1 = a1 + jnp.dot(h2[h], w1g_ref[h], preferred_element_type=f32)
    a1 = jnp.maximum(a1 + fc1b_ref[...], 0.0)

    # ---- fc2 (50 -> 10, padded to 128 lanes) + log_softmax -----------------
    logits = jnp.dot(a1, fc2w_ref[...], preferred_element_type=f32) + fc2b_ref[...]
    m = jnp.max(logits, axis=-1, keepdims=True)
    lse = m + jnp.log(jnp.sum(jnp.exp(logits - m), axis=-1, keepdims=True))
    out_ref[...] = logits - lse


# ----------------------------------------------------------------------------
# Host-side weight preparation (O(weights), batch independent)
# ----------------------------------------------------------------------------
def _prepare_weights(params):
    """Fold conv/fc weights into the banded, lane-packed matrices the kernel uses."""
    f32 = jnp.float32
    w1, b1 = params["conv1_w"], params["conv1_b"]          # (10,1,5,5), (10,)
    w2, b2 = params["conv2_w"], params["conv2_b"]          # (20,10,5,5), (20,)
    fc1w, fc1b = params["fc1_w"], params["fc1_b"]          # (50,320), (50,)
    fc2w, fc2b = params["fc2_w"], params["fc2_b"]          # (10,50), (10,)

    # conv1 band: t1[ky, w, 10*j + c] = w1[c, 0, ky, w - j]  for 0 <= w-j < 5.
    kx = jnp.arange(28)[:, None] - jnp.arange(24)[None, :]            # (28, 24)
    valid1 = (kx >= 0) & (kx < 5)
    w1p = w1[:, 0].transpose(1, 2, 0)                                 # (ky, kx, c)
    t1 = jnp.where(valid1[None, :, :, None], w1p[:, jnp.clip(kx, 0, 4)], 0.0)
    t1 = t1.reshape(5, 28, 240).astype(f32)
    b1t = jnp.tile(b1, 24)[None, :].astype(f32)                       # (1, 240)

    # conv2 band: t2[ky, 20*jW + r, 20*j2 + c] = w2[c, r, ky, jW - j2]
    #             if r < 10 and 0 <= jW - j2 < 5, else 0  (kills pooled-garbage cols).
    l = jnp.arange(230)
    jW, r = l // 20, l % 20
    kx2 = jW[:, None] - jnp.arange(8)[None, :]                        # (230, 8)
    valid2 = (r[:, None] < 10) & (kx2 >= 0) & (kx2 < 5)
    w2p = w2.transpose(2, 1, 3, 0)                                    # (ky, ci, kx, c)
    vals2 = w2p[:, jnp.clip(r, 0, 9)[:, None], jnp.clip(kx2, 0, 4), :]  # (5,230,8,20)
    t2 = jnp.where(valid2[None, :, :, None], vals2, 0.0).reshape(5, 230, 160).astype(f32)
    b2t = jnp.tile(b2, 8)[None, :].astype(f32)                        # (1, 160)

    # fc1 grouped by pooled row h: w1g[h, 40*j + c, o] = fc1w[o, c*16 + h*4 + j].
    lf = jnp.arange(140)
    j2p, rf = lf // 40, lf % 40
    h = jnp.arange(4)
    f = jnp.clip(rf, 0, 19)[None, :] * 16 + h[:, None] * 4 + j2p[None, :]   # (4, 140)
    w1g = jnp.where((rf < 20)[None, :, None], fc1w.T[f], 0.0).astype(f32)   # (4,140,50)
    fc1bt = fc1b[None, :].astype(f32)                                  # (1, 50)

    # fc2 padded to 128 output lanes; padded logits pinned to -1e30 via the bias.
    fc2wp = jnp.zeros((50, 128), f32).at[:, :10].set(fc2w.T.astype(f32))
    fc2bp = jnp.full((1, 128), -1e30, f32).at[0, :10].set(fc2b.astype(f32))

    return t1, b1t, t2, b2t, w1g, fc1bt, fc2wp, fc2bp


@jax.jit
def net_forward(x, params):
    """Pallas forward pass. x: (B, 1, 28, 28) float32 -> (B, 10) log-probs."""
    B = x.shape[0]
    # Sublane-aligned batch tile.  64 keeps worst-case per-step VMEM ~14 MiB
    # (intermediates + resident banded weights) while amortizing per-step
    # overhead and maximizing the MXU M-dimension of the banded matmuls.
    TB = min(64, ((B + 7) // 8) * 8)
    Bp = ((B + TB - 1) // TB) * TB

    weights = _prepare_weights(params)

    # Internal layout (H, B, W): batch on the sublane axis of every block.
    xk = x.reshape(B, 28, 28).transpose(1, 0, 2)          # (28, B, 28)
    if Bp != B:
        xk = jnp.pad(xk, ((0, 0), (0, Bp - B), (0, 0)))

    out = pl.pallas_call(
        fused_net_kernel,
        out_shape=jax.ShapeDtypeStruct((Bp, 128), jnp.float32),
        grid_spec=pltpu.PrefetchScalarGridSpec(
            num_scalar_prefetch=0,
            grid=(Bp // TB,),
            in_specs=[
                pl.BlockSpec((28, TB, 28), lambda b: (0, b, 0)),     # image tile
                pl.BlockSpec((5, 28, 240), lambda b: (0, 0, 0)),     # conv1 band (resident)
                pl.BlockSpec((1, 240), lambda b: (0, 0)),            # conv1 bias
                pl.BlockSpec((5, 230, 160), lambda b: (0, 0, 0)),    # conv2 band (resident)
                pl.BlockSpec((1, 160), lambda b: (0, 0)),            # conv2 bias
                pl.BlockSpec((4, 140, 50), lambda b: (0, 0, 0)),     # fc1 grouped (resident)
                pl.BlockSpec((1, 50), lambda b: (0, 0)),             # fc1 bias
                pl.BlockSpec((50, 128), lambda b: (0, 0)),           # fc2 (lane-padded)
                pl.BlockSpec((1, 128), lambda b: (0, 0)),            # fc2 bias (lane-padded)
            ],
            out_specs=pl.BlockSpec((TB, 128), lambda b: (b, 0)),
        ),
        compiler_params=pltpu.CompilerParams(
            dimension_semantics=("parallel",),
            vmem_limit_bytes=32 * 1024 * 1024,   # explicit headroom for v5e/v7x
        ),
    )(xk, *weights)

    return out[:B, :10]


# ----------------------------------------------------------------------------
# Pure-JAX reference (for validation)
# ----------------------------------------------------------------------------
def ref_forward(x, params):
    def conv(x, w, b):
        y = jax.lax.conv_general_dilated(
            x, w, (1, 1), "VALID", dimension_numbers=("NCHW", "OIHW", "NCHW"))
        return y + b[None, :, None, None]

    def pool(x):
        return jax.lax.reduce_window(
            x, -jnp.inf, jax.lax.max, (1, 1, 2, 2), (1, 1, 2, 2), "VALID")

    y = jnp.maximum(pool(conv(x, params["conv1_w"], params["conv1_b"])), 0.0)
    y = jnp.maximum(pool(conv(y, params["conv2_w"], params["conv2_b"])), 0.0)
    flat = y.reshape(x.shape[0], -1)
    h = jnp.maximum(flat @ params["fc1_w"].T + params["fc1_b"], 0.0)
    logits = h @ params["fc2_w"].T + params["fc2_b"]
    return jax.nn.log_softmax(logits, axis=-1)


# ----------------------------------------------------------------------------
# Deterministic parameter init (PyTorch-default-style uniform +-1/sqrt(fan_in))
# ----------------------------------------------------------------------------
def init_params(key):
    def uniform(key, shape, fan_in):
        bound = 1.0 / np.sqrt(fan_in)
        return jax.random.uniform(key, shape, jnp.float32, -bound, bound)

    ks = jax.random.split(key, 8)
    return {
        "conv1_w": uniform(ks[0], (10, 1, 5, 5), 1 * 25),
        "conv1_b": uniform(ks[1], (10,), 1 * 25),
        "conv2_w": uniform(ks[2], (20, 10, 5, 5), 10 * 25),
        "conv2_b": uniform(ks[3], (20,), 10 * 25),
        "fc1_w": uniform(ks[4], (50, 320), 320),
        "fc1_b": uniform(ks[5], (50,), 320),
        "fc2_w": uniform(ks[6], (10, 50), 50),
        "fc2_b": uniform(ks[7], (10,), 50),
    }


if __name__ == "__main__":
    key = jax.random.PRNGKey(0)
    pkey, xkey = jax.random.split(key)
    params = init_params(pkey)

    # MNIST-shaped inputs (the hard-coded 320 = 20*4*4 flatten requires 1x28x28).
    # B=4: batch-padding path; B=64: single full tile; B=144: multi-step grid
    # with a partially padded last tile.
    for B in (4, 64, 144):
        x = jax.random.normal(jax.random.fold_in(xkey, B), (B, 1, 28, 28),
                              dtype=jnp.float32)
        out = jax.block_until_ready(net_forward(x, params))
        ref = jax.block_until_ready(ref_forward(x, params))
        np.testing.assert_allclose(np.asarray(out), np.asarray(ref),
                                   rtol=1e-3, atol=1e-4)

    print("KERNEL_OK")
</pallas_src>

<mosaic_0001>
module attributes {stable_mosaic.version = 11 : i64} {
  func.func @fused_net_kernel(%arg0: i32, %arg1: memref<28x8x28xf32, #tpu.memory_space<vmem>>, %arg2: memref<5x28x240xf32, #tpu.memory_space<vmem>>, %arg3: memref<1x240xf32, #tpu.memory_space<vmem>>, %arg4: memref<5x230x160xf32, #tpu.memory_space<vmem>>, %arg5: memref<1x160xf32, #tpu.memory_space<vmem>>, %arg6: memref<4x140x50xf32, #tpu.memory_space<vmem>>, %arg7: memref<1x50xf32, #tpu.memory_space<vmem>>, %arg8: memref<50x128xf32, #tpu.memory_space<vmem>>, %arg9: memref<1x128xf32, #tpu.memory_space<vmem>>, %arg10: memref<8x128xf32, #tpu.memory_space<vmem>>) attributes {dimension_semantics = [#tpu.dimension_semantics<parallel>], iteration_bounds = array<i64: 1>, scalar_prefetch = 0 : i64, scratch_operands = 0 : i64, tpu.core_type = #tpu.core_type<tc>, window_params = [{transform_indices = @transform_0, window_bounds = array<i64: 28, 8, 28>}, {pipeline_mode = #tpu.pipeline_mode<synchronous>, transform_indices = @transform_1, window_bounds = array<i64: 5, 28, 240>}, {pipeline_mode = #tpu.pipeline_mode<synchronous>, transform_indices = @transform_2, window_bounds = array<i64: 1, 240>}, {pipeline_mode = #tpu.pipeline_mode<synchronous>, transform_indices = @transform_3, window_bounds = array<i64: 5, 230, 160>}, {pipeline_mode = #tpu.pipeline_mode<synchronous>, transform_indices = @transform_4, window_bounds = array<i64: 1, 160>}, {pipeline_mode = #tpu.pipeline_mode<synchronous>, transform_indices = @transform_5, window_bounds = array<i64: 4, 140, 50>}, {pipeline_mode = #tpu.pipeline_mode<synchronous>, transform_indices = @transform_6, window_bounds = array<i64: 1, 50>}, {pipeline_mode = #tpu.pipeline_mode<synchronous>, transform_indices = @transform_7, window_bounds = array<i64: 50, 128>}, {pipeline_mode = #tpu.pipeline_mode<synchronous>, transform_indices = @transform_8, window_bounds = array<i64: 1, 128>}, {transform_indices = @transform_9, window_bounds = array<i64: 8, 128>}]} {
    %cst = arith.constant 0.000000e+00 : f32
    %0 = vector.broadcast %cst : f32 to vector<192x240xf32>
    %c0 = arith.constant 0 : index
    %c0_0 = arith.constant 0 : index
    %c0_1 = arith.constant 0 : index
    %1 = vector.load %arg1[%c0, %c0_0, %c0_1] : memref<28x8x28xf32, #tpu.memory_space<vmem>>, vector<24x8x28xf32>
    %2 = vector.shape_cast %1 : vector<24x8x28xf32> to vector<192x28xf32>
    %c0_2 = arith.constant 0 : index
    %c0_3 = arith.constant 0 : index
    %c0_4 = arith.constant 0 : index
    %3 = vector.load %arg2[%c0_2, %c0_3, %c0_4] : memref<5x28x240xf32, #tpu.memory_space<vmem>>, vector<1x28x240xf32>
    %4 = vector.shape_cast %3 : vector<1x28x240xf32> to vector<28x240xf32>
    %cst_5 = arith.constant dense<0.000000e+00> : vector<192x240xf32>
    %5 = tpu.matmul %2, %4, %cst_5 {dimension_numbers = #tpu.dot_dimension_numbers<[1], [0], [0], [1], [0, 0, 1, 1], [], []>} : vector<192x28xf32>, vector<28x240xf32>, vector<192x240xf32> -> vector<192x240xf32>
    %6 = arith.addf %0, %5 : vector<192x240xf32>
    %c1 = arith.constant 1 : index
    %c0_6 = arith.constant 0 : index
    %c0_7 = arith.constant 0 : index
    %7 = vector.load %arg1[%c1, %c0_6, %c0_7] : memref<28x8x28xf32, #tpu.memory_space<vmem>>, vector<24x8x28xf32>
    %8 = vector.shape_cast %7 : vector<24x8x28xf32> to vector<192x28xf32>
    %c1_8 = arith.constant 1 : index
    %c0_9 = arith.constant 0 : index
    %c0_10 = arith.constant 0 : index
    %9 = vector.load %arg2[%c1_8, %c0_9, %c0_10] : memref<5x28x240xf32, #tpu.memory_space<vmem>>, vector<1x28x240xf32>
    %10 = vector.shape_cast %9 : vector<1x28x240xf32> to vector<28x240xf32>
    %cst_11 = arith.constant dense<0.000000e+00> : vector<192x240xf32>
    %11 = tpu.matmul %8, %10, %cst_11 {dimension_numbers = #tpu.dot_dimension_numbers<[1], [0], [0], [1], [0, 0, 1, 1], [], []>} : vector<192x28xf32>, vector<28x240xf32>, vector<192x240xf32> -> vector<192x240xf32>
    %12 = arith.addf %6, %11 : vector<192x240xf32>
    %c2 = arith.constant 2 : index
    %c0_12 = arith.constant 0 : index
    %c0_13 = arith.constant 0 : index
    %13 = vector.load %arg1[%c2, %c0_12, %c0_13] : memref<28x8x28xf32, #tpu.memory_space<vmem>>, vector<24x8x28xf32>
    %14 = vector.shape_cast %13 : vector<24x8x28xf32> to vector<192x28xf32>
    %c2_14 = arith.constant 2 : index
    %c0_15 = arith.constant 0 : index
    %c0_16 = arith.constant 0 : index
    %15 = vector.load %arg2[%c2_14, %c0_15, %c0_16] : memref<5x28x240xf32, #tpu.memory_space<vmem>>, vector<1x28x240xf32>
    %16 = vector.shape_cast %15 : vector<1x28x240xf32> to vector<28x240xf32>
    %cst_17 = arith.constant dense<0.000000e+00> : vector<192x240xf32>
    %17 = tpu.matmul %14, %16, %cst_17 {dimension_numbers = #tpu.dot_dimension_numbers<[1], [0], [0], [1], [0, 0, 1, 1], [], []>} : vector<192x28xf32>, vector<28x240xf32>, vector<192x240xf32> -> vector<192x240xf32>
    %18 = arith.addf %12, %17 : vector<192x240xf32>
    %c3 = arith.constant 3 : index
    %c0_18 = arith.constant 0 : index
    %c0_19 = arith.constant 0 : index
    %19 = vector.load %arg1[%c3, %c0_18, %c0_19] : memref<28x8x28xf32, #tpu.memory_space<vmem>>, vector<24x8x28xf32>
    %20 = vector.shape_cast %19 : vector<24x8x28xf32> to vector<192x28xf32>
    %c3_20 = arith.constant 3 : index
    %c0_21 = arith.constant 0 : index
    %c0_22 = arith.constant 0 : index
    %21 = vector.load %arg2[%c3_20, %c0_21, %c0_22] : memref<5x28x240xf32, #tpu.memory_space<vmem>>, vector<1x28x240xf32>
    %22 = vector.shape_cast %21 : vector<1x28x240xf32> to vector<28x240xf32>
    %cst_23 = arith.constant dense<0.000000e+00> : vector<192x240xf32>
    %23 = tpu.matmul %20, %22, %cst_23 {dimension_numbers = #tpu.dot_dimension_numbers<[1], [0], [0], [1], [0, 0, 1, 1], [], []>} : vector<192x28xf32>, vector<28x240xf32>, vector<192x240xf32> -> vector<192x240xf32>
    %24 = arith.addf %18, %23 : vector<192x240xf32>
    %c4 = arith.constant 4 : index
    %c0_24 = arith.constant 0 : index
    %c0_25 = arith.constant 0 : index
    %25 = vector.load %arg1[%c4, %c0_24, %c0_25] : memref<28x8x28xf32, #tpu.memory_space<vmem>>, vector<24x8x28xf32>
    %26 = vector.shape_cast %25 : vector<24x8x28xf32> to vector<192x28xf32>
    %c4_26 = arith.constant 4 : index
    %c0_27 = arith.constant 0 : index
    %c0_28 = arith.constant 0 : index
    %27 = vector.load %arg2[%c4_26, %c0_27, %c0_28] : memref<5x28x240xf32, #tpu.memory_space<vmem>>, vector<1x28x240xf32>
    %28 = vector.shape_cast %27 : vector<1x28x240xf32> to vector<28x240xf32>
    %cst_29 = arith.constant dense<0.000000e+00> : vector<192x240xf32>
    %29 = tpu.matmul %26, %28, %cst_29 {dimension_numbers = #tpu.dot_dimension_numbers<[1], [0], [0], [1], [0, 0, 1, 1], [], []>} : vector<192x28xf32>, vector<28x240xf32>, vector<192x240xf32> -> vector<192x240xf32>
    %30 = arith.addf %24, %29 : vector<192x240xf32>
    %c0_30 = arith.constant 0 : index
    %c0_31 = arith.constant 0 : index
    %31 = vector.load %arg3[%c0_30, %c0_31] : memref<1x240xf32, #tpu.memory_space<vmem>>, vector<1x240xf32>
    %32 = vector.broadcast %31 : vector<1x240xf32> to vector<192x240xf32>
    %33 = arith.addf %30, %32 : vector<192x240xf32>
    %34 = vector.shape_cast %33 : vector<192x240xf32> to vector<12x16x240xf32>
    %35 = vector.extract_strided_slice %34 {offsets = [0, 0, 0], sizes = [12, 8, 240], strides = [1, 1, 1]} : vector<12x16x240xf32> to vector<12x8x240xf32>
    %36 = vector.extract_strided_slice %34 {offsets = [0, 8, 0], sizes = [12, 8, 240], strides = [1, 1, 1]} : vector<12x16x240xf32> to vector<12x8x240xf32>
    %37 = arith.maximumf %35, %36 : vector<12x8x240xf32>
    %38 = vector.extract_strided_slice %37 {offsets = [0, 0, 0], sizes = [12, 8, 230], strides = [1, 1, 1]} : vector<12x8x240xf32> to vector<12x8x230xf32>
    %39 = vector.extract_strided_slice %37 {offsets = [0, 0, 10], sizes = [12, 8, 230], strides = [1, 1, 1]} : vector<12x8x240xf32> to vector<12x8x230xf32>
    %40 = arith.maximumf %38, %39 : vector<12x8x230xf32>
    %cst_32 = arith.constant 0.000000e+00 : f32
    %41 = vector.broadcast %cst_32 : f32 to vector<12x8x230xf32>
    %42 = arith.maximumf %40, %41 : vector<12x8x230xf32>
    %cst_33 = arith.constant 0.000000e+00 : f32
    %43 = vector.broadcast %cst_33 : f32 to vector<64x160xf32>
    %44 = vector.extract_strided_slice %42 {offsets = [0, 0, 0], sizes = [8, 8, 230], strides = [1, 1, 1]} : vector<12x8x230xf32> to vector<8x8x230xf32>
    %45 = vector.shape_cast %44 : vector<8x8x230xf32> to vector<64x230xf32>
    %c0_34 = arith.constant 0 : index
    %c0_35 = arith.constant 0 : index
    %c0_36 = arith.constant 0 : index
    %46 = vector.load %arg4[%c0_34, %c0_35, %c0_36] : memref<5x230x160xf32, #tpu.memory_space<vmem>>, vector<1x230x160xf32>
    %47 = vector.shape_cast %46 : vector<1x230x160xf32> to vector<230x160xf32>
    %cst_37 = arith.constant dense<0.000000e+00> : vector<64x160xf32>
    %48 = tpu.matmul %45, %47, %cst_37 {dimension_numbers = #tpu.dot_dimension_numbers<[1], [0], [0], [1], [0, 0, 1, 1], [], []>} : vector<64x230xf32>, vector<230x160xf32>, vector<64x160xf32> -> vector<64x160xf32>
    %49 = arith.addf %43, %48 : vector<64x160xf32>
    %50 = vector.extract_strided_slice %42 {offsets = [1, 0, 0], sizes = [8, 8, 230], strides = [1, 1, 1]} : vector<12x8x230xf32> to vector<8x8x230xf32>
    %51 = vector.shape_cast %50 : vector<8x8x230xf32> to vector<64x230xf32>
    %c1_38 = arith.constant 1 : index
    %c0_39 = arith.constant 0 : index
    %c0_40 = arith.constant 0 : index
    %52 = vector.load %arg4[%c1_38, %c0_39, %c0_40] : memref<5x230x160xf32, #tpu.memory_space<vmem>>, vector<1x230x160xf32>
    %53 = vector.shape_cast %52 : vector<1x230x160xf32> to vector<230x160xf32>
    %cst_41 = arith.constant dense<0.000000e+00> : vector<64x160xf32>
    %54 = tpu.matmul %51, %53, %cst_41 {dimension_numbers = #tpu.dot_dimension_numbers<[1], [0], [0], [1], [0, 0, 1, 1], [], []>} : vector<64x230xf32>, vector<230x160xf32>, vector<64x160xf32> -> vector<64x160xf32>
    %55 = arith.addf %49, %54 : vector<64x160xf32>
    %56 = vector.extract_strided_slice %42 {offsets = [2, 0, 0], sizes = [8, 8, 230], strides = [1, 1, 1]} : vector<12x8x230xf32> to vector<8x8x230xf32>
    %57 = vector.shape_cast %56 : vector<8x8x230xf32> to vector<64x230xf32>
    %c2_42 = arith.constant 2 : index
    %c0_43 = arith.constant 0 : index
    %c0_44 = arith.constant 0 : index
    %58 = vector.load %arg4[%c2_42, %c0_43, %c0_44] : memref<5x230x160xf32, #tpu.memory_space<vmem>>, vector<1x230x160xf32>
    %59 = vector.shape_cast %58 : vector<1x230x160xf32> to vector<230x160xf32>
    %cst_45 = arith.constant dense<0.000000e+00> : vector<64x160xf32>
    %60 = tpu.matmul %57, %59, %cst_45 {dimension_numbers = #tpu.dot_dimension_numbers<[1], [0], [0], [1], [0, 0, 1, 1], [], []>} : vector<64x230xf32>, vector<230x160xf32>, vector<64x160xf32> -> vector<64x160xf32>
    %61 = arith.addf %55, %60 : vector<64x160xf32>
    %62 = vector.extract_strided_slice %42 {offsets = [3, 0, 0], sizes = [8, 8, 230], strides = [1, 1, 1]} : vector<12x8x230xf32> to vector<8x8x230xf32>
    %63 = vector.shape_cast %62 : vector<8x8x230xf32> to vector<64x230xf32>
    %c3_46 = arith.constant 3 : index
    %c0_47 = arith.constant 0 : index
    %c0_48 = arith.constant 0 : index
    %64 = vector.load %arg4[%c3_46, %c0_47, %c0_48] : memref<5x230x160xf32, #tpu.memory_space<vmem>>, vector<1x230x160xf32>
    %65 = vector.shape_cast %64 : vector<1x230x160xf32> to vector<230x160xf32>
    %cst_49 = arith.constant dense<0.000000e+00> : vector<64x160xf32>
    %66 = tpu.matmul %63, %65, %cst_49 {dimension_numbers = #tpu.dot_dimension_numbers<[1], [0], [0], [1], [0, 0, 1, 1], [], []>} : vector<64x230xf32>, vector<230x160xf32>, vector<64x160xf32> -> vector<64x160xf32>
    %67 = arith.addf %61, %66 : vector<64x160xf32>
    %68 = vector.extract_strided_slice %42 {offsets = [4, 0, 0], sizes = [8, 8, 230], strides = [1, 1, 1]} : vector<12x8x230xf32> to vector<8x8x230xf32>
    %69 = vector.shape_cast %68 : vector<8x8x230xf32> to vector<64x230xf32>
    %c4_50 = arith.constant 4 : index
    %c0_51 = arith.constant 0 : index
    %c0_52 = arith.constant 0 : index
    %70 = vector.load %arg4[%c4_50, %c0_51, %c0_52] : memref<5x230x160xf32, #tpu.memory_space<vmem>>, vector<1x230x160xf32>
    %71 = vector.shape_cast %70 : vector<1x230x160xf32> to vector<230x160xf32>
    %cst_53 = arith.constant dense<0.000000e+00> : vector<64x160xf32>
    %72 = tpu.matmul %69, %71, %cst_53 {dimension_numbers = #tpu.dot_dimension_numbers<[1], [0], [0], [1], [0, 0, 1, 1], [], []>} : vector<64x230xf32>, vector<230x160xf32>, vector<64x160xf32> -> vector<64x160xf32>
    %73 = arith.addf %67, %72 : vector<64x160xf32>
    %c0_54 = arith.constant 0 : index
    %c0_55 = arith.constant 0 : index
    %74 = vector.load %arg5[%c0_54, %c0_55] : memref<1x160xf32, #tpu.memory_space<vmem>>, vector<1x160xf32>
    %75 = vector.broadcast %74 : vector<1x160xf32> to vector<64x160xf32>
    %76 = arith.addf %73, %75 : vector<64x160xf32>
    %77 = vector.shape_cast %76 : vector<64x160xf32> to vector<4x16x160xf32>
    %78 = vector.extract_strided_slice %77 {offsets = [0, 0, 0], sizes = [4, 8, 160], strides = [1, 1, 1]} : vector<4x16x160xf32> to vector<4x8x160xf32>
    %79 = vector.extract_strided_slice %77 {offsets = [0, 8, 0], sizes = [4, 8, 160], strides = [1, 1, 1]} : vector<4x16x160xf32> to vector<4x8x160xf32>
    %80 = arith.maximumf %78, %79 : vector<4x8x160xf32>
    %81 = vector.extract_strided_slice %80 {offsets = [0, 0, 0], sizes = [4, 8, 140], strides = [1, 1, 1]} : vector<4x8x160xf32> to vector<4x8x140xf32>
    %82 = vector.extract_strided_slice %80 {offsets = [0, 0, 20], sizes = [4, 8, 140], strides = [1, 1, 1]} : vector<4x8x160xf32> to vector<4x8x140xf32>
    %83 = arith.maximumf %81, %82 : vector<4x8x140xf32>
    %cst_56 = arith.constant 0.000000e+00 : f32
    %84 = vector.broadcast %cst_56 : f32 to vector<4x8x140xf32>
    %85 = arith.maximumf %83, %84 : vector<4x8x140xf32>
    %cst_57 = arith.constant 0.000000e+00 : f32
    %86 = vector.broadcast %cst_57 : f32 to vector<8x50xf32>
    %87 = vector.extract_strided_slice %85 {offsets = [0, 0, 0], sizes = [1, 8, 140], strides = [1, 1, 1]} : vector<4x8x140xf32> to vector<1x8x140xf32>
    %88 = vector.shape_cast %87 : vector<1x8x140xf32> to vector<8x140xf32>
    %c0_58 = arith.constant 0 : index
    %c0_59 = arith.constant 0 : index
    %c0_60 = arith.constant 0 : index
    %89 = vector.load %arg6[%c0_58, %c0_59, %c0_60] : memref<4x140x50xf32, #tpu.memory_space<vmem>>, vector<1x140x50xf32>
    %90 = vector.shape_cast %89 : vector<1x140x50xf32> to vector<140x50xf32>
    %cst_61 = arith.constant dense<0.000000e+00> : vector<8x50xf32>
    %91 = tpu.matmul %88, %90, %cst_61 {dimension_numbers = #tpu.dot_dimension_numbers<[1], [0], [0], [1], [0, 0, 1, 1], [], []>} : vector<8x140xf32>, vector<140x50xf32>, vector<8x50xf32> -> vector<8x50xf32>
    %92 = arith.addf %86, %91 : vector<8x50xf32>
    %93 = vector.extract_strided_slice %85 {offsets = [1, 0, 0], sizes = [1, 8, 140], strides = [1, 1, 1]} : vector<4x8x140xf32> to vector<1x8x140xf32>
    %94 = vector.shape_cast %93 : vector<1x8x140xf32> to vector<8x140xf32>
    %c1_62 = arith.constant 1 : index
    %c0_63 = arith.constant 0 : index
    %c0_64 = arith.constant 0 : index
    %95 = vector.load %arg6[%c1_62, %c0_63, %c0_64] : memref<4x140x50xf32, #tpu.memory_space<vmem>>, vector<1x140x50xf32>
    %96 = vector.shape_cast %95 : vector<1x140x50xf32> to vector<140x50xf32>
    %cst_65 = arith.constant dense<0.000000e+00> : vector<8x50xf32>
    %97 = tpu.matmul %94, %96, %cst_65 {dimension_numbers = #tpu.dot_dimension_numbers<[1], [0], [0], [1], [0, 0, 1, 1], [], []>} : vector<8x140xf32>, vector<140x50xf32>, vector<8x50xf32> -> vector<8x50xf32>
    %98 = arith.addf %92, %97 : vector<8x50xf32>
    %99 = vector.extract_strided_slice %85 {offsets = [2, 0, 0], sizes = [1, 8, 140], strides = [1, 1, 1]} : vector<4x8x140xf32> to vector<1x8x140xf32>
    %100 = vector.shape_cast %99 : vector<1x8x140xf32> to vector<8x140xf32>
    %c2_66 = arith.constant 2 : index
    %c0_67 = arith.constant 0 : index
    %c0_68 = arith.constant 0 : index
    %101 = vector.load %arg6[%c2_66, %c0_67, %c0_68] : memref<4x140x50xf32, #tpu.memory_space<vmem>>, vector<1x140x50xf32>
    %102 = vector.shape_cast %101 : vector<1x140x50xf32> to vector<140x50xf32>
    %cst_69 = arith.constant dense<0.000000e+00> : vector<8x50xf32>
    %103 = tpu.matmul %100, %102, %cst_69 {dimension_numbers = #tpu.dot_dimension_numbers<[1], [0], [0], [1], [0, 0, 1, 1], [], []>} : vector<8x140xf32>, vector<140x50xf32>, vector<8x50xf32> -> vector<8x50xf32>
    %104 = arith.addf %98, %103 : vector<8x50xf32>
    %105 = vector.extract_strided_slice %85 {offsets = [3, 0, 0], sizes = [1, 8, 140], strides = [1, 1, 1]} : vector<4x8x140xf32> to vector<1x8x140xf32>
    %106 = vector.shape_cast %105 : vector<1x8x140xf32> to vector<8x140xf32>
    %c3_70 = arith.constant 3 : index
    %c0_71 = arith.constant 0 : index
    %c0_72 = arith.constant 0 : index
    %107 = vector.load %arg6[%c3_70, %c0_71, %c0_72] : memref<4x140x50xf32, #tpu.memory_space<vmem>>, vector<1x140x50xf32>
    %108 = vector.shape_cast %107 : vector<1x140x50xf32> to vector<140x50xf32>
    %cst_73 = arith.constant dense<0.000000e+00> : vector<8x50xf32>
    %109 = tpu.matmul %106, %108, %cst_73 {dimension_numbers = #tpu.dot_dimension_numbers<[1], [0], [0], [1], [0, 0, 1, 1], [], []>} : vector<8x140xf32>, vector<140x50xf32>, vector<8x50xf32> -> vector<8x50xf32>
    %110 = arith.addf %104, %109 : vector<8x50xf32>
    %c0_74 = arith.constant 0 : index
    %c0_75 = arith.constant 0 : index
    %111 = vector.load %arg7[%c0_74, %c0_75] : memref<1x50xf32, #tpu.memory_space<vmem>>, vector<1x50xf32>
    %112 = vector.broadcast %111 : vector<1x50xf32> to vector<8x50xf32>
    %113 = arith.addf %110, %112 : vector<8x50xf32>
    %cst_76 = arith.constant 0.000000e+00 : f32
    %114 = vector.broadcast %cst_76 : f32 to vector<8x50xf32>
    %115 = arith.maximumf %113, %114 : vector<8x50xf32>
    %c0_77 = arith.constant 0 : index
    %c0_78 = arith.constant 0 : index
    %116 = vector.load %arg8[%c0_77, %c0_78] : memref<50x128xf32, #tpu.memory_space<vmem>>, vector<50x128xf32>
    %cst_79 = arith.constant dense<0.000000e+00> : vector<8x128xf32>
    %117 = tpu.matmul %115, %116, %cst_79 {dimension_numbers = #tpu.dot_dimension_numbers<[1], [0], [0], [1], [0, 0, 1, 1], [], []>} : vector<8x50xf32>, vector<50x128xf32>, vector<8x128xf32> -> vector<8x128xf32>
    %c0_80 = arith.constant 0 : index
    %c0_81 = arith.constant 0 : index
    %118 = vector.load %arg9[%c0_80, %c0_81] : memref<1x128xf32, #tpu.memory_space<vmem>>, vector<1x128xf32>
    %119 = vector.broadcast %118 : vector<1x128xf32> to vector<8x128xf32>
    %120 = arith.addf %117, %119 : vector<8x128xf32>
    %cst_82 = arith.constant dense<0xFF800000> : vector<8xf32>
    %121 = vector.multi_reduction <maximumf>, %120, %cst_82 [1] : vector<8x128xf32> to vector<8xf32>
    %122 = vector.shape_cast %121 : vector<8xf32> to vector<8x1xf32>
    %123 = vector.broadcast %122 : vector<8x1xf32> to vector<8x128xf32>
    %124 = arith.subf %120, %123 : vector<8x128xf32>
    %125 = math.exp %124 : vector<8x128xf32>
    %cst_83 = arith.constant dense<0.000000e+00> : vector<8xf32>
    %126 = vector.multi_reduction <add>, %125, %cst_83 [1] : vector<8x128xf32> to vector<8xf32>
    %127 = vector.shape_cast %126 : vector<8xf32> to vector<8x1xf32>
    %128 = math.log %127 : vector<8x1xf32>
    %129 = arith.addf %122, %128 : vector<8x1xf32>
    %130 = vector.broadcast %129 : vector<8x1xf32> to vector<8x128xf32>
    %131 = arith.subf %120, %130 : vector<8x128xf32>
    %c0_84 = arith.constant 0 : index
    %c0_85 = arith.constant 0 : index
    %132 = vector.load %arg10[%c0_84, %c0_85] : memref<8x128xf32, #tpu.memory_space<vmem>>, vector<8x128xf32>
    tpu.vector_store %arg10[%c0_84, %c0_85], %131 {strides = array<i32>} : memref<8x128xf32, #tpu.memory_space<vmem>>, vector<8x128xf32>,
    return
  }
  func.func @transform_0(%arg0: i32) -> (i32, i32, i32) {
    %c0_i32 = arith.constant 0 : i32
    %c0_i32_0 = arith.constant 0 : i32
    %c0_i32_1 = arith.constant 0 : i32
    return %c0_i32, %arg0, %c0_i32_0 : i32, i32, i32
  }
  func.func @transform_1(%arg0: i32) -> (i32, i32, i32) {
    %c0_i32 = arith.constant 0 : i32
    %c0_i32_0 = arith.constant 0 : i32
    %c0_i32_1 = arith.constant 0 : i32
    %c0_i32_2 = arith.constant 0 : i32
    return %c0_i32, %c0_i32_0, %c0_i32_1 : i32, i32, i32
  }
  func.func @transform_2(%arg0: i32) -> (i32, i32) {
    %c0_i32 = arith.constant 0 : i32
    %c0_i32_0 = arith.constant 0 : i32
    %c0_i32_1 = arith.constant 0 : i32
    return %c0_i32, %c0_i32_0 : i32, i32
  }
  func.func @transform_3(%arg0: i32) -> (i32, i32, i32) {
    %c0_i32 = arith.constant 0 : i32
    %c0_i32_0 = arith.constant 0 : i32
    %c0_i32_1 = arith.constant 0 : i32
    %c0_i32_2 = arith.constant 0 : i32
    return %c0_i32, %c0_i32_0, %c0_i32_1 : i32, i32, i32
  }
  func.func @transform_4(%arg0: i32) -> (i32, i32) {
    %c0_i32 = arith.constant 0 : i32
    %c0_i32_0 = arith.constant 0 : i32
    %c0_i32_1 = arith.constant 0 : i32
    return %c0_i32, %c0_i32_0 : i32, i32
  }
  func.func @transform_5(%arg0: i32) -> (i32, i32, i32) {
    %c0_i32 = arith.constant 0 : i32
    %c0_i32_0 = arith.constant 0 : i32
    %c0_i32_1 = arith.constant 0 : i32
    %c0_i32_2 = arith.constant 0 : i32
    return %c0_i32, %c0_i32_0, %c0_i32_1 : i32, i32, i32
  }
  func.func @transform_6(%arg0: i32) -> (i32, i32) {
    %c0_i32 = arith.constant 0 : i32
    %c0_i32_0 = arith.constant 0 : i32
    %c0_i32_1 = arith.constant 0 : i32
    return %c0_i32, %c0_i32_0 : i32, i32
  }
  func.func @transform_7(%arg0: i32) -> (i32, i32) {
    %c0_i32 = arith.constant 0 : i32
    %c0_i32_0 = arith.constant 0 : i32
    %c0_i32_1 = arith.constant 0 : i32
    return %c0_i32, %c0_i32_0 : i32, i32
  }
  func.func @transform_8(%arg0: i32) -> (i32, i32) {
    %c0_i32 = arith.constant 0 : i32
    %c0_i32_0 = arith.constant 0 : i32
    %c0_i32_1 = arith.constant 0 : i32
    return %c0_i32, %c0_i32_0 : i32, i32
  }
  func.func @transform_9(%arg0: i32) -> (i32, i32) {
    %c0_i32 = arith.constant 0 : i32
    %c0_i32_0 = arith.constant 0 : i32
    return %arg0, %c0_i32 : i32, i32
  }
}

</mosaic_0001>

<llo_original>
// kernel: tile.13
$region0: #{tile.13}
  #allocation0 [shape = 's32[1]{0}', space=sflag, size = 0x4, scoped, tag = 'scoped memory for tile.13']
  %s0 = inlined_call_operand.vmem [shape: f32[10], index: 0, kind: input, shape index: {}]
  %s1 = inlined_call_operand.vmem [shape: f32[24,10], index: 1, kind: output, shape index: {}]
  // Predicated region
  $region2: #{tile.13} parent=0 // pred_check
    _
  $region3: #{tile.13} parent=0 // pred_check_branch
    %3 = sbr.rel (0) target = $region5
  $region4: #{tile.13} parent=0 // pred_region
    _
  $region5: #{tile.13} parent=0 // pred_fallthru
    _
  %v4 = vld [vmem:[%s0] ss:$0 sm:$0xff]
  %5 = vst [vmem:[%s1] sm:$0xff] %v4
  %s6 = scalar_lea.vmem %s1, 8
  %7 = vst [vmem:[%s6] sm:$0xff] %v4
  %s8 = scalar_lea.vmem %s1, 16
  %9 = vst [vmem:[%s8] sm:$0xff] %v4

// kernel: tile.14
$region0: #{tile.14}
  %s0 = inlined_call_operand.vmem [shape: f32[24,10], index: 0, kind: input, shape index: {}]
  %s1 = inlined_call_operand.vmem [shape: f32[1,240], index: 1, kind: output, shape index: {}]
  $region1: #{tile.14} parent=0
    #allocation0 [shape = 'u8[8192]{0}', space=vmem, size = 0x2000, scoped, tag = 'scoped mem for output reshape']
    %v2 = vld [vmem:[%s0] sm:$0x1]
    %vm3 = vcmask 80896
    %4 = vst.msk [vmem:[#allocation0] sm:$0x1] %vm3, %v2
    %s5 = scalar_lea.vmem %s0, 12
    %v6 = vld [vmem:[%s5] sm:$0x1]
    %s7 = scalar_lea.vmem %s0, 12
    %v8 = vld [vmem:[%s7] sm:$0x1]
    %vm9 = vcmask 64512
    %v10 = vsel %vm9, %v8, %v6
    %11 = vrot.lane.b32.xlu0 %v10, 120
    %v12 = vpop.permute.xlu0 %11
    %vm13 = vcmask 15360
    %s14 = scalar_lea.vmem [#allocation0], 8
    %15 = vst.msk [vmem:[%s14] sm:$0x1] %vm13, %v12
    %vm16 = vcmask 1048512
    %17 = vst.msk [vmem:[#allocation0] sm:$0x1] %vm16, %v12
    %s18 = scalar_lea.vmem %s0, 11
    %v19 = vld [vmem:[%s18] sm:$0x1]
    %20 = vrot.lane.b32.xlu0 %v19, 110
    %v21 = vpop.permute.xlu0 %20
    %vm22 = vcmask 982896
    %23 = vst.msk [vmem:[#allocation0] sm:$0x1] %vm22, %v21
    %s24 = scalar_lea.vmem %s0, 23
    %v25 = vld [vmem:[%s24] sm:$0x1]
    %26 = vrot.lane.b32.xlu0 %v25, 102
    %v27 = vpop.permute.xlu0 %26
    %vm28 = vcmask 917296
    %s29 = scalar_lea.vmem [#allocation0], 8
    %30 = vst.msk [vmem:[%s29] sm:$0x1] %vm28, %v27
    %s31 = scalar_lea.vmem %s0, 10
    %v32 = vld [vmem:[%s31] sm:$0x1]
    %33 = vrot.lane.b32.xlu0 %v32, 100
    %v34 = vpop.permute.xlu0 %33
    %vm35 = vcmask 900896
    %36 = vst.msk [vmem:[#allocation0] sm:$0x1] %vm35, %v34
    %s37 = scalar_lea.vmem %s0, 22
    %v38 = vld [vmem:[%s37] sm:$0x1]
    %39 = vrot.lane.b32.xlu0 %v38, 92
    %v40 = vpop.permute.xlu0 %39
    %vm41 = vcmask 835296
    %s42 = scalar_lea.vmem [#allocation0], 8
    %43 = vst.msk [vmem:[%s42] sm:$0x1] %vm41, %v40
    %s44 = scalar_lea.vmem %s0, 9
    %v45 = vld [vmem:[%s44] sm:$0x1]
    %46 = vrot.lane.b32.xlu0 %v45, 90
    %v47 = vpop.permute.xlu0 %46
    %vm48 = vcmask 818896
    %49 = vst.msk [vmem:[#allocation0] sm:$0x1] %vm48, %v47
    %s50 = scalar_lea.vmem %s0, 21
    %v51 = vld [vmem:[%s50] sm:$0x1]
    %52 = vrot.lane.b32.xlu0 %v51, 82
    %v53 = vpop.permute.xlu0 %52
    %vm54 = vcmask 753296
    %s55 = scalar_lea.vmem [#allocation0], 8
    %56 = vst.msk [vmem:[%s55] sm:$0x1] %vm54, %v53
    %s57 = scalar_lea.vmem %s0, 8
    %v58 = vld [vmem:[%s57] sm:$0x1]
    %59 = vrot.lane.b32.xlu0 %v58, 80
    %v60 = vpop.permute.xlu0 %59
    %vm61 = vcmask 736896
    %62 = vst.msk [vmem:[#allocation0] sm:$0x1] %vm61, %v60
    %s63 = scalar_lea.vmem %s0, 20
    %v64 = vld [vmem:[%s63] sm:$0x1]
    %65 = vrot.lane.b32.xlu0 %v64, 72
    %v66 = vpop.permute.xlu0 %65
    %vm67 = vcmask 671296
    %s68 = scalar_lea.vmem [#allocation0], 8
    %69 = vst.msk [vmem:[%s68] sm:$0x1] %vm67, %v66
    %s70 = scalar_lea.vmem %s0, 7
    %v71 = vld [vmem:[%s70] sm:$0x1]
    %72 = vrot.lane.b32.xlu0 %v71, 70
    %v73 = vpop.permute.xlu0 %72
    %vm74 = vcmask 654896
    %75 = vst.msk [vmem:[#allocation0] sm:$0x1] %vm74, %v73
    %s76 = scalar_lea.vmem %s0, 19
    %v77 = vld [vmem:[%s76] sm:$0x1]
    %78 = vrot.lane.b32.xlu0 %v77, 62
    %v79 = vpop.permute.xlu0 %78
    %vm80 = vcmask 589296
    %s81 = scalar_lea.vmem [#allocation0], 8
    %82 = vst.msk [vmem:[%s81] sm:$0x1] %vm80, %v79
    %s83 = scalar_lea.vmem %s0, 6
    %v84 = vld [vmem:[%s83] sm:$0x1]
    %85 = vrot.lane.b32.xlu0 %v84, 60
    %v86 = vpop.permute.xlu0 %85
    %vm87 = vcmask 572896
    %88 = vst.msk [vmem:[#allocation0] sm:$0x1] %vm87, %v86
    %s89 = scalar_lea.vmem %s0, 18
    %v90 = vld [vmem:[%s89] sm:$0x1]
    %91 = vrot.lane.b32.xlu0 %v90, 52
    %v92 = vpop.permute.xlu0 %91
    %vm93 = vcmask 507296
    %s94 = scalar_lea.vmem [#allocation0], 8
    %95 = vst.msk [vmem:[%s94] sm:$0x1] %vm93, %v92
    %s96 = scalar_lea.vmem %s0, 5
    %v97 = vld [vmem:[%s96] sm:$0x1]
    %98 = vrot.lane.b32.xlu0 %v97, 50
    %v99 = vpop.permute.xlu0 %98
    %vm100 = vcmask 490896
    %101 = vst.msk [vmem:[#allocation0] sm:$0x1] %vm100, %v99
    %s102 = scalar_lea.vmem %s0, 17
    %v103 = vld [vmem:[%s102] sm:$0x1]
    %104 = vrot.lane.b32.xlu0 %v103, 42
    %v105 = vpop.permute.xlu0 %104
    %vm106 = vcmask 425296
    %s107 = scalar_lea.vmem [#allocation0], 8
    %108 = vst.msk [vmem:[%s107] sm:$0x1] %vm106, %v105
    %s109 = scalar_lea.vmem %s0, 4
    %v110 = vld [vmem:[%s109] sm:$0x1]
    %111 = vrot.lane.b32.xlu0 %v110, 40
    %v112 = vpop.permute.xlu0 %111
    %vm113 = vcmask 408896
    %114 = vst.msk [vmem:[#allocation0] sm:$0x1] %vm113, %v112
    %s115 = scalar_lea.vmem %s0, 16
    %v116 = vld [vmem:[%s115] sm:$0x1]
    %117 = vrot.lane.b32.xlu0 %v116, 32
    %v118 = vpop.permute.xlu0 %117
    %vm119 = vcmask 343296
    %s120 = scalar_lea.vmem [#allocation0], 8
    %121 = vst.msk [vmem:[%s120] sm:$0x1] %vm119, %v118
    %s122 = scalar_lea.vmem %s0, 3
    %v123 = vld [vmem:[%s122] sm:$0x1]
    %124 = vrot.lane.b32.xlu0 %v123, 30
    %v125 = vpop.permute.xlu0 %124
    %vm126 = vcmask 326896
    %127 = vst.msk [vmem:[#allocation0] sm:$0x1] %vm126, %v125
    %s128 = scalar_lea.vmem %s0, 15
    %v129 = vld [vmem:[%s128] sm:$0x1]
    %130 = vrot.lane.b32.xlu0 %v129, 22
    %v131 = vpop.permute.xlu0 %130
    %vm132 = vcmask 261296
    %s133 = scalar_lea.vmem [#allocation0], 8
    %134 = vst.msk [vmem:[%s133] sm:$0x1] %vm132, %v131
    %s135 = scalar_lea.vmem %s0, 2
    %v136 = vld [vmem:[%s135] sm:$0x1]
    %137 = vrot.lane.b32.xlu0 %v136, 20
    %v138 = vpop.permute.xlu0 %137
    %vm139 = vcmask 244896
    %140 = vst.msk [vmem:[#allocation0] sm:$0x1] %vm139, %v138
    %s141 = scalar_lea.vmem %s0, 14
    %v142 = vld [vmem:[%s141] sm:$0x1]
    %143 = vrot.lane.b32.xlu0 %v142, 12
    %v144 = vpop.permute.xlu0 %143
    %vm145 = vcmask 179296
    %s146 = scalar_lea.vmem [#allocation0], 8
    %147 = vst.msk [vmem:[%s146] sm:$0x1] %vm145, %v144
    %s148 = scalar_lea.vmem %s0, 1
    %v149 = vld [vmem:[%s148] sm:$0x1]
    %150 = vrot.lane.b32.xlu0 %v149, 10
    %v151 = vpop.permute.xlu0 %150
    %vm152 = vcmask 162896
    %153 = vst.msk [vmem:[#allocation0] sm:$0x1] %vm152, %v151
    %s154 = scalar_lea.vmem %s0, 13
    %v155 = vld [vmem:[%s154] sm:$0x1]
    %156 = vrot.lane.b32.xlu0 %v155, 2
    %v157 = vpop.permute.xlu0 %156
    %vm158 = vcmask 97296
    %s159 = scalar_lea.vmem [#allocation0], 8
    %160 = vst.msk [vmem:[%s159] sm:$0x1] %vm158, %v157
    %s162 = sshll.u32 1, 1
    %s163 = ssub.s32 %s162, 1
    %v165 = vld [vmem:[#allocation0] sm:%s163]
    %s166 = sshll.u32 1, 1
    %s167 = ssub.s32 %s166, 1
    %168 = vst [vmem:[%s1] sm:%s167] %v165
    %s169 = scalar_lea.vmem [#allocation0], 8
    %v170 = vld [vmem:[%s169] sm:%s163]
    %s171 = sshll.u32 1, 1
    %s172 = ssub.s32 %s171, 1
    %s173 = scalar_lea.vmem %s1, 1
    %174 = vst [vmem:[%s173] sm:%s172] %v170

// kernel: tile.18
$region0: #{tile.18}
  #allocation0 [shape = 's32[1]{0}', space=sflag, size = 0x4, scoped, tag = 'scoped memory for tile.18']
  %s0 = inlined_call_operand.vmem [shape: f32[20], index: 0, kind: input, shape index: {}]
  %s1 = inlined_call_operand.vmem [shape: f32[8,20], index: 1, kind: output, shape index: {}]
  // Predicated region
  $region2: #{tile.18} parent=0 // pred_check
    _
  $region3: #{tile.18} parent=0 // pred_check_branch
    %3 = sbr.rel (0) target = $region5
  $region4: #{tile.18} parent=0 // pred_region
    _
  $region5: #{tile.18} parent=0 // pred_fallthru
    _
  %v4 = vld [vmem:[%s0] ss:$0 sm:$0xff]
  %5 = vst [vmem:[%s1] sm:$0xff] %v4

// kernel: tile.19
$region0: #{tile.19}
  %s0 = inlined_call_operand.vmem [shape: f32[8,20], index: 0, kind: input, shape index: {}]
  %s1 = inlined_call_operand.vmem [shape: f32[1,160], index: 1, kind: output, shape index: {}]
  $region1: #{tile.19} parent=0
    #allocation0 [shape = 'u8[8192]{0}', space=vmem, size = 0x2000, scoped, tag = 'scoped mem for output reshape']
    %v2 = vld [vmem:[%s0] sm:$0x1]
    %vm3 = vcmask 162816
    %4 = vst.msk [vmem:[#allocation0] sm:$0x1] %vm3, %v2
    %s5 = scalar_lea.vmem %s0, 6
    %v6 = vld [vmem:[%s5] sm:$0x1]
    %s7 = scalar_lea.vmem %s0, 6
    %v8 = vld [vmem:[%s7] sm:$0x1]
    %vm9 = vcmask 64512
    %v10 = vsel %vm9, %v8, %v6
    %11 = vrot.lane.b32.xlu0 %v10, 120
    %v12 = vpop.permute.xlu0 %11
    %vm13 = vcmask 97280
    %s14 = scalar_lea.vmem [#allocation0], 8
    %15 = vst.msk [vmem:[%s14] sm:$0x1] %vm13, %v12
    %vm16 = vcmask 1048512
    %17 = vst.msk [vmem:[#allocation0] sm:$0x1] %vm16, %v12
    %s18 = scalar_lea.vmem %s0, 5
    %v19 = vld [vmem:[%s18] sm:$0x1]
    %20 = vrot.lane.b32.xlu0 %v19, 100
    %v21 = vpop.permute.xlu0 %20
    %vm22 = vcmask 982816
    %23 = vst.msk [vmem:[#allocation0] sm:$0x1] %vm22, %v21
    %s24 = scalar_lea.vmem %s0, 4
    %v25 = vld [vmem:[%s24] sm:$0x1]
    %26 = vrot.lane.b32.xlu0 %v25, 80
    %v27 = vpop.permute.xlu0 %26
    %vm28 = vcmask 818816
    %29 = vst.msk [vmem:[#allocation0] sm:$0x1] %vm28, %v27
    %s30 = scalar_lea.vmem %s0, 3
    %v31 = vld [vmem:[%s30] sm:$0x1]
    %32 = vrot.lane.b32.xlu0 %v31, 60
    %v33 = vpop.permute.xlu0 %32
    %vm34 = vcmask 654816
    %35 = vst.msk [vmem:[#allocation0] sm:$0x1] %vm34, %v33
    %s36 = scalar_lea.vmem %s0, 2
    %v37 = vld [vmem:[%s36] sm:$0x1]
    %38 = vrot.lane.b32.xlu0 %v37, 40
    %v39 = vpop.permute.xlu0 %38
    %vm40 = vcmask 490816
    %41 = vst.msk [vmem:[#allocation0] sm:$0x1] %vm40, %v39
    %s42 = scalar_lea.vmem %s0, 1
    %v43 = vld [vmem:[%s42] sm:$0x1]
    %44 = vrot.lane.b32.xlu0 %v43, 20
    %v45 = vpop.permute.xlu0 %44
    %vm46 = vcmask 326816
    %47 = vst.msk [vmem:[#allocation0] sm:$0x1] %vm46, %v45
    %s48 = scalar_lea.vmem %s0, 7
    %v49 = vld [vmem:[%s48] sm:$0x1]
    %50 = vrot.lane.b32.xlu0 %v49, 12
    %v51 = vpop.permute.xlu0 %50
    %vm52 = vcmask 261216
    %s53 = scalar_lea.vmem [#allocation0], 8
    %54 = vst.msk [vmem:[%s53] sm:$0x1] %vm52, %v51
    %s56 = sshll.u32 1, 1
    %s57 = ssub.s32 %s56, 1
    %v59 = vld [vmem:[#allocation0] sm:%s57]
    %s60 = sshll.u32 1, 1
    %s61 = ssub.s32 %s60, 1
    %62 = vst [vmem:[%s1] sm:%s61] %v59
    %s63 = scalar_lea.vmem [#allocation0], 8
    %v64 = vld [vmem:[%s63] sm:%s57]
    %s65 = sshll.u32 1, 1
    %s66 = ssub.s32 %s65, 1
    %s67 = scalar_lea.vmem %s1, 1
    %68 = vst [vmem:[%s67] sm:%s66] %v64

// kernel: net_forward.1
$region0: #{net_forward.1}
  #allocation0 [shape = 'u32[]', space=smem, size = 0x4, offset = 0x4, fixed_abs, tag = 'smem constant byte address 0x4 - core index']
  #allocation1 [shape = 'u32[144,128]{1,0:T(1,128)}', space=vmem, size = 0x12000, scoped, tag = 'internal scratch']
  %s0 = inlined_call_operand.vmem [shape: f32[28,8,28], index: 0, kind: input, shape index: {}]
  %s1 = inlined_call_operand.vmem [shape: f32[5,28,240], index: 1, kind: input, shape index: {}]
  %s2 = inlined_call_operand.vmem [shape: f32[1,240], index: 2, kind: input, shape index: {}]
  %s3 = inlined_call_operand.vmem [shape: f32[5,230,160], index: 3, kind: input, shape index: {}]
  %s4 = inlined_call_operand.vmem [shape: f32[1,160], index: 4, kind: input, shape index: {}]
  %s5 = inlined_call_operand.vmem [shape: f32[4,140,50], index: 5, kind: input, shape index: {}]
  %s6 = inlined_call_operand.vmem [shape: f32[1,50], index: 6, kind: input, shape index: {}]
  %s7 = inlined_call_operand.vmem [shape: f32[50,128], index: 7, kind: input, shape index: {}]
  %s8 = inlined_call_operand.vmem [shape: f32[1,128], index: 8, kind: input, shape index: {}]
  %s9 = inlined_call_operand.vmem [shape: f32[8,128], index: 9, kind: output, shape index: {}]
  %s10 = sld [smem:[#allocation0]]
  $region46: #{net_forward.1} parent=0
    _
  %s12 = ssub.s32 1, %s10
  %s13 = scalar_select 0, %s12, %s10
  // Predicated region
  $region2: #{net_forward.1} parent=0 // pred_check
    _
  $region3: #{net_forward.1} parent=0 // pred_check_branch
    %15 = sbr.rel (0) target = $region5
  $region4: #{net_forward.1} parent=0 // pred_region
    _
  $region5: #{net_forward.1} parent=0 // pred_fallthru
    _
  // Predicated region
  $region6: #{net_forward.1} parent=0 // pred_check
    _
  $region7: #{net_forward.1} parent=0 // pred_check_branch
    %17 = sbr.rel (0) target = $region9
  $region8: #{net_forward.1} parent=0 // pred_region
    _
  $region9: #{net_forward.1} parent=0 // pred_fallthru
    _
  // Predicated region
  $region10: #{net_forward.1} parent=0 // pred_check
    _
  $region11: #{net_forward.1} parent=0 // pred_check_branch
    %19 = sbr.rel (0) target = $region13
  $region12: #{net_forward.1} parent=0 // pred_region
    _
  $region13: #{net_forward.1} parent=0 // pred_fallthru
    _
  // Predicated region
  $region14: #{net_forward.1} parent=0 // pred_check
    _
  $region15: #{net_forward.1} parent=0 // pred_check_branch
    %21 = sbr.rel (0) target = $region17
  $region16: #{net_forward.1} parent=0 // pred_region
    _
  $region17: #{net_forward.1} parent=0 // pred_fallthru
    _
  // Predicated region
  $region18: #{net_forward.1} parent=0 // pred_check
    _
  $region19: #{net_forward.1} parent=0 // pred_check_branch
    %23 = sbr.rel (0) target = $region21
  $region20: #{net_forward.1} parent=0 // pred_region
    _
  $region21: #{net_forward.1} parent=0 // pred_fallthru
    _
  // Predicated region
  $region22: #{net_forward.1} parent=0 // pred_check
    _
  $region23: #{net_forward.1} parent=0 // pred_check_branch
    %25 = sbr.rel (0) target = $region25
  $region24: #{net_forward.1} parent=0 // pred_region
    _
  $region25: #{net_forward.1} parent=0 // pred_fallthru
    _
  // Predicated region
  $region26: #{net_forward.1} parent=0 // pred_check
    _
  $region27: #{net_forward.1} parent=0 // pred_check_branch
    %27 = sbr.rel (0) target = $region29
  $region28: #{net_forward.1} parent=0 // pred_region
    _
  $region29: #{net_forward.1} parent=0 // pred_fallthru
    _
  // Predicated region
  $region30: #{net_forward.1} parent=0 // pred_check
    _
  $region31: #{net_forward.1} parent=0 // pred_check_branch
    %29 = sbr.rel (0) target = $region33
  $region32: #{net_forward.1} parent=0 // pred_region
    _
  $region33: #{net_forward.1} parent=0 // pred_fallthru
    _
  // Predicated region
  $region34: #{net_forward.1} parent=0 // pred_check
    _
  $region35: #{net_forward.1} parent=0 // pred_check_branch
    %31 = sbr.rel (0) target = $region37
  $region36: #{net_forward.1} parent=0 // pred_region
    _
  $region37: #{net_forward.1} parent=0 // pred_fallthru
    _
  %v32 = vld [vmem:[%s0] sm:$0xff]
  %v33 = vld [vmem:[%s0 + $0x8] sm:$0xff]
  %v34 = vld [vmem:[%s0 + $0x10] sm:$0xff]
  %v35 = vld [vmem:[%s0 + $0x18] sm:$0xff]
  %v36 = vld [vmem:[%s0 + $0x20] sm:$0xff]
  %v37 = vld [vmem:[%s0 + $0x28] sm:$0xff]
  %v38 = vld [vmem:[%s0 + $0x30] sm:$0xff]
  %v39 = vld [vmem:[%s0 + $0x38] sm:$0xff]
  %v40 = vld [vmem:[%s0 + $0x40] sm:$0xff]
  %v41 = vld [vmem:[%s0 + $0x48] sm:$0xff]
  %v42 = vld [vmem:[%s0 + $0x50] sm:$0xff]
  %v43 = vld [vmem:[%s0 + $0x58] sm:$0xff]
  %v44 = vld [vmem:[%s0 + $0x60] sm:$0xff]
  %v45 = vld [vmem:[%s0 + $0x68] sm:$0xff]
  %v46 = vld [vmem:[%s0 + $0x70] sm:$0xff]
  %v47 = vld [vmem:[%s0 + $0x78] sm:$0xff]
  %v48 = vld [vmem:[%s0 + $0x80] sm:$0xff]
  %v49 = vld [vmem:[%s0 + $0x88] sm:$0xff]
  %v50 = vld [vmem:[%s0 + $0x90] sm:$0xff]
  %v51 = vld [vmem:[%s0 + $0x98] sm:$0xff]
  %v52 = vld [vmem:[%s0 + $0xa0] sm:$0xff]
  %v53 = vld [vmem:[%s0 + $0xa8] sm:$0xff]
  %v54 = vld [vmem:[%s0 + $0xb0] sm:$0xff]
  %v55 = vld [vmem:[%s0 + $0xb8] sm:$0xff]
  %v56 = vld [vmem:[%s1] sm:$0xff]
  %v57 = vld [vmem:[%s1 + $0x8] sm:$0xff]
  %v58 = vld [vmem:[%s1 + $0x10] sm:$0xff]
  %v59 = vld [vmem:[%s1 + $0x18] sm:$0xff]
  %v60 = vld [vmem:[%s1 + $0x20] sm:$0xff]
  %v61 = vld [vmem:[%s1 + $0x28] sm:$0xff]
  %v62 = vld [vmem:[%s1 + $0x30] sm:$0xf]
  %v63 = vld [vmem:[%s1 + $0x38] sm:$0xf]
  %s64 = scalar_lea.vmem %s0, 8
  %v65 = vld [vmem:[%s64] sm:$0xff]
  %v66 = vld [vmem:[%s64 + $0x8] sm:$0xff]
  %v67 = vld [vmem:[%s64 + $0x10] sm:$0xff]
  %v68 = vld [vmem:[%s64 + $0x18] sm:$0xff]
  %v69 = vld [vmem:[%s64 + $0x20] sm:$0xff]
  %v70 = vld [vmem:[%s64 + $0x28] sm:$0xff]
  %v71 = vld [vmem:[%s64 + $0x30] sm:$0xff]
  %v72 = vld [vmem:[%s64 + $0x38] sm:$0xff]
  %v73 = vld [vmem:[%s64 + $0x40] sm:$0xff]
  %v74 = vld [vmem:[%s64 + $0x48] sm:$0xff]
  %v75 = vld [vmem:[%s64 + $0x50] sm:$0xff]
  %v76 = vld [vmem:[%s64 + $0x58] sm:$0xff]
  %v77 = vld [vmem:[%s64 + $0x60] sm:$0xff]
  %v78 = vld [vmem:[%s64 + $0x68] sm:$0xff]
  %v79 = vld [vmem:[%s64 + $0x70] sm:$0xff]
  %v80 = vld [vmem:[%s64 + $0x78] sm:$0xff]
  %v81 = vld [vmem:[%s64 + $0x80] sm:$0xff]
  %v82 = vld [vmem:[%s64 + $0x88] sm:$0xff]
  %v83 = vld [vmem:[%s64 + $0x90] sm:$0xff]
  %v84 = vld [vmem:[%s64 + $0x98] sm:$0xff]
  %v85 = vld [vmem:[%s64 + $0xa0] sm:$0xff]
  %v86 = vld [vmem:[%s64 + $0xa8] sm:$0xff]
  %v87 = vld [vmem:[%s64 + $0xb0] sm:$0xff]
  %v88 = vld [vmem:[%s64 + $0xb8] sm:$0xff]
  %s89 = scalar_lea.vmem %s1, 64
  %v90 = vld [vmem:[%s89] sm:$0xff]
  %v91 = vld [vmem:[%s89 + $0x8] sm:$0xff]
  %v92 = vld [vmem:[%s89 + $0x10] sm:$0xff]
  %v93 = vld [vmem:[%s89 + $0x18] sm:$0xff]
  %v94 = vld [vmem:[%s89 + $0x20] sm:$0xff]
  %v95 = vld [vmem:[%s89 + $0x28] sm:$0xff]
  %v96 = vld [vmem:[%s89 + $0x30] sm:$0xf]
  %v97 = vld [vmem:[%s89 + $0x38] sm:$0xf]
  %vm98 = vcmask 228352
  %v100 = vsel %vm98, %v65, 0
  %v103 = vsel %vm98, %v66, 0
  %v106 = vsel %vm98, %v67, 0
  %v109 = vsel %vm98, %v68, 0
  %v112 = vsel %vm98, %v69, 0
  %v115 = vsel %vm98, %v70, 0
  %v118 = vsel %vm98, %v71, 0
  %v121 = vsel %vm98, %v72, 0
  %v124 = vsel %vm98, %v73, 0
  %v127 = vsel %vm98, %v74, 0
  %v130 = vsel %vm98, %v75, 0
  %v133 = vsel %vm98, %v76, 0
  %v136 = vsel %vm98, %v77, 0
  %v139 = vsel %vm98, %v78, 0
  %v142 = vsel %vm98, %v79, 0
  %v145 = vsel %vm98, %v80, 0
  %v148 = vsel %vm98, %v81, 0
  %v151 = vsel %vm98, %v82, 0
  %v154 = vsel %vm98, %v83, 0
  %v157 = vsel %vm98, %v84, 0
  %v160 = vsel %vm98, %v85, 0
  %v163 = vsel %vm98, %v86, 0
  %v166 = vsel %vm98, %v87, 0
  %v169 = vsel %vm98, %v88, 0
  %vm171 = vcmask 1043456
  %v173 = vsel %vm171, %v96, 0
  %v176 = vsel %vm171, %v97, 0
  %178 = vmatprep.subr.mxu0 0.0
  %179 = vmatpush1.msra.mxu0 0.0
  %180 = vmatprep.subr.mxu0 0.0
  %181 = vmatpush1.msra.mxu0 0.0
  %182 = vmatprep.subr.mxu0 0.0
  %183 = vmatpush1.msra.mxu0 0.0
  %184 = vmatprep.subr.mxu0 0.0
  %185 = vmatpush1.msra.mxu0 0.0
  %186 = vmatprep.subr.mxu0 0.0
  %187 = vmatpush1.msra.mxu0 0.0
  %188 = vmatprep.subr.mxu0 0.0
  %189 = vmatpush1.msra.mxu0 0.0
  %190 = vmatprep.subr.mxu0 0.0
  %191 = vmatpush1.msra.mxu0 0.0
  %192 = vmatprep.subr.mxu0 0.0
  %193 = vmatpush1.msra.mxu0 0.0
  %194 = vmatprep.subr.mxu0 0.0
  %195 = vmatpush1.msra.mxu0 0.0
  %196 = vmatprep.subr.mxu0 0.0
  %197 = vmatpush1.msra.mxu0 0.0
  %198 = vmatprep.subr.mxu0 0.0
  %199 = vmatpush1.msra.mxu0 0.0
  %200 = vmatprep.subr.mxu0 0.0
  %201 = vmatpush1.msra.mxu0 0.0
  %202 = vmatprep.subr.mxu0 %v176
  %203 = vmatpush1.msra.mxu0 %v173
  %204 = vmatprep.subr.mxu0 %v95
  %205 = vmatpush1.msra.mxu0 %v94
  %206 = vmatprep.subr.mxu0 %v93
  %207 = vmatpush1.msra.mxu0 %v92
  %208 = vmatprep.subr.mxu0 %v91
  %209 = vmatpush1.msra.mxu0 %v90
  %210 = vmatprep.subr.mxu0 0.0
  %211 = vmatpush2.msra.mxu0 0.0
  %212 = vmatprep.subr.mxu0 0.0
  %213 = vmatpush2.msra.mxu0 0.0
  %214 = vmatprep.subr.mxu0 0.0
  %215 = vmatpush2.msra.mxu0 0.0
  %216 = vmatprep.subr.mxu0 0.0
  %217 = vmatpush2.msra.mxu0 0.0
  %218 = vmatprep.subr.mxu0 0.0
  %219 = vmatpush2.msra.mxu0 0.0
  %220 = vmatprep.subr.mxu0 0.0
  %221 = vmatpush2.msra.mxu0 0.0
  %222 = vmatprep.subr.mxu0 0.0
  %223 = vmatpush2.msra.mxu0 0.0
  %224 = vmatprep.subr.mxu0 0.0
  %225 = vmatpush2.msra.mxu0 0.0
  %226 = vmatprep.subr.mxu0 0.0
  %227 = vmatpush2.msra.mxu0 0.0
  %228 = vmatprep.subr.mxu0 0.0
  %229 = vmatpush2.msra.mxu0 0.0
  %230 = vmatprep.subr.mxu0 0.0
  %231 = vmatpush2.msra.mxu0 0.0
  %232 = vmatprep.subr.mxu0 0.0
  %233 = vmatpush2.msra.mxu0 0.0
  %234 = vmatprep.subr.mxu0 0.0
  %235 = vmatpush2.msra.mxu0 0.0
  %236 = vmatprep.subr.mxu0 0.0
  %237 = vmatpush2.msra.mxu0 0.0
  %238 = vmatprep.subr.mxu0 0.0
  %239 = vmatpush2.msra.mxu0 0.0
  %240 = vmatprep.subr.mxu0 0.0
  %241 = vmatpush2.msra.mxu0 0.0
  %242 = vmatprep.mubr.f32.mxu0 0.0
  %243 = vmatmul.mubr.f32.gmra.mxu0 %v100
  %v244 = vpop.f32.mrf.mxu0
  %v245 = vadd.f32 0.0, %v244
  %v246 = vpop.f32.mrf.mxu0
  %v247 = vadd.f32 0.0, %v246
  %248 = vmatprep.mubr.f32.mxu0 0.0
  %249 = vmatmul.mubr.f32.gmra.mxu0 %v103
  %v250 = vpop.f32.mrf.mxu0
  %v251 = vadd.f32 0.0, %v250
  %v252 = vpop.f32.mrf.mxu0
  %v253 = vadd.f32 0.0, %v252
  %254 = vmatprep.mubr.f32.mxu0 0.0
  %255 = vmatmul.mubr.f32.gmra.mxu0 %v106
  %v256 = vpop.f32.mrf.mxu0
  %v257 = vadd.f32 0.0, %v256
  %v258 = vpop.f32.mrf.mxu0
  %v259 = vadd.f32 0.0, %v258
  %260 = vmatprep.mubr.f32.mxu0 0.0
  %261 = vmatmul.mubr.f32.gmra.mxu0 %v109
  %v262 = vpop.f32.mrf.mxu0
  %v263 = vadd.f32 0.0, %v262
  %v264 = vpop.f32.mrf.mxu0
  %v265 = vadd.f32 0.0, %v264
  %266 = vmatprep.mubr.f32.mxu0 0.0
  %267 = vmatmul.mubr.f32.gmra.mxu0 %v112
  %v268 = vpop.f32.mrf.mxu0
  %v269 = vadd.f32 0.0, %v268
  %v270 = vpop.f32.mrf.mxu0
  %v271 = vadd.f32 0.0, %v270
  %272 = vmatprep.mubr.f32.mxu0 0.0
  %273 = vmatmul.mubr.f32.gmra.mxu0 %v115
  %v274 = vpop.f32.mrf.mxu0
  %v275 = vadd.f32 0.0, %v274
  %v276 = vpop.f32.mrf.mxu0
  %v277 = vadd.f32 0.0, %v276
  %278 = vmatprep.mubr.f32.mxu0 0.0
  %279 = vmatmul.mubr.f32.gmra.mxu0 %v118
  %v280 = vpop.f32.mrf.mxu0
  %v281 = vadd.f32 0.0, %v280
  %v282 = vpop.f32.mrf.mxu0
  %v283 = vadd.f32 0.0, %v282
  %284 = vmatprep.mubr.f32.mxu0 0.0
  %285 = vmatmul.mubr.f32.gmra.mxu0 %v121
  %v286 = vpop.f32.mrf.mxu0
  %v287 = vadd.f32 0.0, %v286
  %v288 = vpop.f32.mrf.mxu0
  %v289 = vadd.f32 0.0, %v288
  %290 = vmatprep.mubr.f32.mxu0 0.0
  %291 = vmatmul.mubr.f32.gmra.mxu0 %v124
  %v292 = vpop.f32.mrf.mxu0
  %v293 = vadd.f32 0.0, %v292
  %v294 = vpop.f32.mrf.mxu0
  %v295 = vadd.f32 0.0, %v294
  %296 = vmatprep.mubr.f32.mxu0 0.0
  %297 = vmatmul.mubr.f32.gmra.mxu0 %v127
  %v298 = vpop.f32.mrf.mxu0
  %v299 = vadd.f32 0.0, %v298
  %v300 = vpop.f32.mrf.mxu0
  %v301 = vadd.f32 0.0, %v300
  %302 = vmatprep.mubr.f32.mxu0 0.0
  %303 = vmatmul.mubr.f32.gmra.mxu0 %v130
  %v304 = vpop.f32.mrf.mxu0
  %v305 = vadd.f32 0.0, %v304
  %v306 = vpop.f32.mrf.mxu0
  %v307 = vadd.f32 0.0, %v306
  %308 = vmatprep.mubr.f32.mxu0 0.0
  %309 = vmatmul.mubr.f32.gmra.mxu0 %v133
  %v310 = vpop.f32.mrf.mxu0
  %v311 = vadd.f32 0.0, %v310
  %v312 = vpop.f32.mrf.mxu0
  %v313 = vadd.f32 0.0, %v312
  %314 = vmatprep.mubr.f32.mxu0 0.0
  %315 = vmatmul.mubr.f32.gmra.mxu0 %v136
  %v316 = vpop.f32.mrf.mxu0
  %v317 = vadd.f32 0.0, %v316
  %v318 = vpop.f32.mrf.mxu0
  %v319 = vadd.f32 0.0, %v318
  %320 = vmatprep.mubr.f32.mxu0 0.0
  %321 = vmatmul.mubr.f32.gmra.mxu0 %v139
  %v322 = vpop.f32.mrf.mxu0
  %v323 = vadd.f32 0.0, %v322
  %v324 = vpop.f32.mrf.mxu0
  %v325 = vadd.f32 0.0, %v324
  %326 = vmatprep.mubr.f32.mxu0 0.0
  %327 = vmatmul.mubr.f32.gmra.mxu0 %v142
  %v328 = vpop.f32.mrf.mxu0
  %v329 = vadd.f32 0.0, %v328
  %v330 = vpop.f32.mrf.mxu0
  %v331 = vadd.f32 0.0, %v330
  %332 = vmatprep.mubr.f32.mxu0 0.0
  %333 = vmatmul.mubr.f32.gmra.mxu0 %v145
  %v334 = vpop.f32.mrf.mxu0
  %v335 = vadd.f32 0.0, %v334
  %v336 = vpop.f32.mrf.mxu0
  %v337 = vadd.f32 0.0, %v336
  %338 = vmatprep.mubr.f32.mxu0 0.0
  %339 = vmatmul.mubr.f32.gmra.mxu0 %v148
  %v340 = vpop.f32.mrf.mxu0
  %v341 = vadd.f32 0.0, %v340
  %v342 = vpop.f32.mrf.mxu0
  %v343 = vadd.f32 0.0, %v342
  %344 = vmatprep.mubr.f32.mxu0 0.0
  %345 = vmatmul.mubr.f32.gmra.mxu0 %v151
  %v346 = vpop.f32.mrf.mxu0
  %v347 = vadd.f32 0.0, %v346
  %v348 = vpop.f32.mrf.mxu0
  %v349 = vadd.f32 0.0, %v348
  %350 = vmatprep.mubr.f32.mxu0 0.0
  %351 = vmatmul.mubr.f32.gmra.mxu0 %v154
  %v352 = vpop.f32.mrf.mxu0
  %v353 = vadd.f32 0.0, %v352
  %v354 = vpop.f32.mrf.mxu0
  %v355 = vadd.f32 0.0, %v354
  %356 = vmatprep.mubr.f32.mxu0 0.0
  %357 = vmatmul.mubr.f32.gmra.mxu0 %v157
  %v358 = vpop.f32.mrf.mxu0
  %v359 = vadd.f32 0.0, %v358
  %v360 = vpop.f32.mrf.mxu0
  %v361 = vadd.f32 0.0, %v360
  %362 = vmatprep.mubr.f32.mxu0 0.0
  %363 = vmatmul.mubr.f32.gmra.mxu0 %v160
  %v364 = vpop.f32.mrf.mxu0
  %v365 = vadd.f32 0.0, %v364
  %v366 = vpop.f32.mrf.mxu0
  %v367 = vadd.f32 0.0, %v366
  %368 = vmatprep.mubr.f32.mxu0 0.0
  %369 = vmatmul.mubr.f32.gmra.mxu0 %v163
  %v370 = vpop.f32.mrf.mxu0
  %v371 = vadd.f32 0.0, %v370
  %v372 = vpop.f32.mrf.mxu0
  %v373 = vadd.f32 0.0, %v372
  %374 = vmatprep.mubr.f32.mxu0 0.0
  %375 = vmatmul.mubr.f32.gmra.mxu0 %v166
  %v376 = vpop.f32.mrf.mxu0
  %v377 = vadd.f32 0.0, %v376
  %v378 = vpop.f32.mrf.mxu0
  %v379 = vadd.f32 0.0, %v378
  %380 = vmatprep.mubr.f32.mxu0 0.0
  %381 = vmatmul.mubr.f32.gmra.mxu0 %v169
  %v382 = vpop.f32.mrf.mxu0
  %v383 = vadd.f32 0.0, %v382
  %v384 = vpop.f32.mrf.mxu0
  %v385 = vadd.f32 0.0, %v384
  %386 = vdwg.mxu0
  %v388 = vsel %vm98, %v32, 0
  %v391 = vsel %vm98, %v33, 0
  %v394 = vsel %vm98, %v34, 0
  %v397 = vsel %vm98, %v35, 0
  %v400 = vsel %vm98, %v36, 0
  %v403 = vsel %vm98, %v37, 0
  %v406 = vsel %vm98, %v38, 0
  %v409 = vsel %vm98, %v39, 0
  %v412 = vsel %vm98, %v40, 0
  %v415 = vsel %vm98, %v41, 0
  %v418 = vsel %vm98, %v42, 0
  %v421 = vsel %vm98, %v43, 0
  %v424 = vsel %vm98, %v44, 0
  %v427 = vsel %vm98, %v45, 0
  %v430 = vsel %vm98, %v46, 0
  %v433 = vsel %vm98, %v47, 0
  %v436 = vsel %vm98, %v48, 0
  %v439 = vsel %vm98, %v49, 0
  %v442 = vsel %vm98, %v50, 0
  %v445 = vsel %vm98, %v51, 0
  %v448 = vsel %vm98, %v52, 0
  %v451 = vsel %vm98, %v53, 0
  %v454 = vsel %vm98, %v54, 0
  %v457 = vsel %vm98, %v55, 0
  %v460 = vsel %vm171, %v62, 0
  %v463 = vsel %vm171, %v63, 0
  %465 = vmatprep.subr.mxu0 0.0
  %466 = vmatpush1.msra.mxu0 0.0
  %467 = vmatprep.subr.mxu0 0.0
  %468 = vmatpush1.msra.mxu0 0.0
  %469 = vmatprep.subr.mxu0 0.0
  %470 = vmatpush1.msra.mxu0 0.0
  %471 = vmatprep.subr.mxu0 0.0
  %472 = vmatpush1.msra.mxu0 0.0
  %473 = vmatprep.subr.mxu0 0.0
  %474 = vmatpush1.msra.mxu0 0.0
  %475 = vmatprep.subr.mxu0 0.0
  %476 = vmatpush1.msra.mxu0 0.0
  %477 = vmatprep.subr.mxu0 0.0
  %478 = vmatpush1.msra.mxu0 0.0
  %479 = vmatprep.subr.mxu0 0.0
  %480 = vmatpush1.msra.mxu0 0.0
  %481 = vmatprep.subr.mxu0 0.0
  %482 = vmatpush1.msra.mxu0 0.0
  %483 = vmatprep.subr.mxu0 0.0
  %484 = vmatpush1.msra.mxu0 0.0
  %485 = vmatprep.subr.mxu0 0.0
  %486 = vmatpush1.msra.mxu0 0.0
  %487 = vmatprep.subr.mxu0 0.0
  %488 = vmatpush1.msra.mxu0 0.0
  %489 = vmatprep.subr.mxu0 %v463
  %490 = vmatpush1.msra.mxu0 %v460
  %491 = vmatprep.subr.mxu0 %v61
  %492 = vmatpush1.msra.mxu0 %v60
  %493 = vmatprep.subr.mxu0 %v59
  %494 = vmatpush1.msra.mxu0 %v58
  %495 = vmatprep.subr.mxu0 %v57
  %496 = vmatpush1.msra.mxu0 %v56
  %497 = vmatprep.subr.mxu0 0.0
  %498 = vmatpush2.msra.mxu0 0.0
  %499 = vmatprep.subr.mxu0 0.0
  %500 = vmatpush2.msra.mxu0 0.0
  %501 = vmatprep.subr.mxu0 0.0
  %502 = vmatpush2.msra.mxu0 0.0
  %503 = vmatprep.subr.mxu0 0.0
  %504 = vmatpush2.msra.mxu0 0.0
  %505 = vmatprep.subr.mxu0 0.0
  %506 = vmatpush2.msra.mxu0 0.0
  %507 = vmatprep.subr.mxu0 0.0
  %508 = vmatpush2.msra.mxu0 0.0
  %509 = vmatprep.subr.mxu0 0.0
  %510 = vmatpush2.msra.mxu0 0.0
  %511 = vmatprep.subr.mxu0 0.0
  %512 = vmatpush2.msra.mxu0 0.0
  %513 = vmatprep.subr.mxu0 0.0
  %514 = vmatpush2.msra.mxu0 0.0
  %515 = vmatprep.subr.mxu0 0.0
  %516 = vmatpush2.msra.mxu0 0.0
  %517 = vmatprep.subr.mxu0 0.0
  %518 = vmatpush2.msra.mxu0 0.0
  %519 = vmatprep.subr.mxu0 0.0
  %520 = vmatpush2.msra.mxu0 0.0
  %521 = vmatprep.subr.mxu0 0.0
  %522 = vmatpush2.msra.mxu0 0.0
  %523 = vmatprep.subr.mxu0 0.0
  %524 = vmatpush2.msra.mxu0 0.0
  %525 = vmatprep.subr.mxu0 0.0
  %526 = vmatpush2.msra.mxu0 0.0
  %527 = vmatprep.subr.mxu0 0.0
  %528 = vmatpush2.msra.mxu0 0.0
  %529 = vmatprep.mubr.f32.mxu0 0.0
  %530 = vmatmul.mubr.f32.gmra.mxu0 %v388
  %v531 = vpop.f32.mrf.mxu0
  %v532 = vadd.f32 %v245, %v531
  %v533 = vpop.f32.mrf.mxu0
  %v534 = vadd.f32 %v247, %v533
  %535 = vmatprep.mubr.f32.mxu0 0.0
  %536 = vmatmul.mubr.f32.gmra.mxu0 %v391
  %v537 = vpop.f32.mrf.mxu0
  %v538 = vadd.f32 %v251, %v537
  %v539 = vpop.f32.mrf.mxu0
  %v540 = vadd.f32 %v253, %v539
  %541 = vmatprep.mubr.f32.mxu0 0.0
  %542 = vmatmul.mubr.f32.gmra.mxu0 %v394
  %v543 = vpop.f32.mrf.mxu0
  %v544 = vadd.f32 %v257, %v543
  %v545 = vpop.f32.mrf.mxu0
  %v546 = vadd.f32 %v259, %v545
  %547 = vmatprep.mubr.f32.mxu0 0.0
  %548 = vmatmul.mubr.f32.gmra.mxu0 %v397
  %v549 = vpop.f32.mrf.mxu0
  %v550 = vadd.f32 %v263, %v549
  %v551 = vpop.f32.mrf.mxu0
  %v552 = vadd.f32 %v265, %v551
  %553 = vmatprep.mubr.f32.mxu0 0.0
  %554 = vmatmul.mubr.f32.gmra.mxu0 %v400
  %v555 = vpop.f32.mrf.mxu0
  %v556 = vadd.f32 %v269, %v555
  %v557 = vpop.f32.mrf.mxu0
  %v558 = vadd.f32 %v271, %v557
  %559 = vmatprep.mubr.f32.mxu0 0.0
  %560 = vmatmul.mubr.f32.gmra.mxu0 %v403
  %v561 = vpop.f32.mrf.mxu0
  %v562 = vadd.f32 %v275, %v561
  %v563 = vpop.f32.mrf.mxu0
  %v564 = vadd.f32 %v277, %v563
  %565 = vmatprep.mubr.f32.mxu0 0.0
  %566 = vmatmul.mubr.f32.gmra.mxu0 %v406
  %v567 = vpop.f32.mrf.mxu0
  %v568 = vadd.f32 %v281, %v567
  %v569 = vpop.f32.mrf.mxu0
  %v570 = vadd.f32 %v283, %v569
  %571 = vmatprep.mubr.f32.mxu0 0.0
  %572 = vmatmul.mubr.f32.gmra.mxu0 %v409
  %v573 = vpop.f32.mrf.mxu0
  %v574 = vadd.f32 %v287, %v573
  %v575 = vpop.f32.mrf.mxu0
  %v576 = vadd.f32 %v289, %v575
  %577 = vmatprep.mubr.f32.mxu0 0.0
  %578 = vmatmul.mubr.f32.gmra.mxu0 %v412
  %v579 = vpop.f32.mrf.mxu0
  %v580 = vadd.f32 %v293, %v579
  %v581 = vpop.f32.mrf.mxu0
  %v582 = vadd.f32 %v295, %v581
  %583 = vmatprep.mubr.f32.mxu0 0.0
  %584 = vmatmul.mubr.f32.gmra.mxu0 %v415
  %v585 = vpop.f32.mrf.mxu0
  %v586 = vadd.f32 %v299, %v585
  %v587 = vpop.f32.mrf.mxu0
  %v588 = vadd.f32 %v301, %v587
  %589 = vmatprep.mubr.f32.mxu0 0.0
  %590 = vmatmul.mubr.f32.gmra.mxu0 %v418
  %v591 = vpop.f32.mrf.mxu0
  %v592 = vadd.f32 %v305, %v591
  %v593 = vpop.f32.mrf.mxu0
  %v594 = vadd.f32 %v307, %v593
  %595 = vmatprep.mubr.f32.mxu0 0.0
  %596 = vmatmul.mubr.f32.gmra.mxu0 %v421
  %v597 = vpop.f32.mrf.mxu0
  %v598 = vadd.f32 %v311, %v597
  %v599 = vpop.f32.mrf.mxu0
  %v600 = vadd.f32 %v313, %v599
  %601 = vmatprep.mubr.f32.mxu0 0.0
  %602 = vmatmul.mubr.f32.gmra.mxu0 %v424
  %v603 = vpop.f32.mrf.mxu0
  %v604 = vadd.f32 %v317, %v603
  %v605 = vpop.f32.mrf.mxu0
  %v606 = vadd.f32 %v319, %v605
  %607 = vmatprep.mubr.f32.mxu0 0.0
  %608 = vmatmul.mubr.f32.gmra.mxu0 %v427
  %v609 = vpop.f32.mrf.mxu0
  %v610 = vadd.f32 %v323, %v609
  %v611 = vpop.f32.mrf.mxu0
  %v612 = vadd.f32 %v325, %v611
  %613 = vmatprep.mubr.f32.mxu0 0.0
  %614 = vmatmul.mubr.f32.gmra.mxu0 %v430
  %v615 = vpop.f32.mrf.mxu0
  %v616 = vadd.f32 %v329, %v615
  %v617 = vpop.f32.mrf.mxu0
  %v618 = vadd.f32 %v331, %v617
  %619 = vmatprep.mubr.f32.mxu0 0.0
  %620 = vmatmul.mubr.f32.gmra.mxu0 %v433
  %v621 = vpop.f32.mrf.mxu0
  %v622 = vadd.f32 %v335, %v621
  %v623 = vpop.f32.mrf.mxu0
  %v624 = vadd.f32 %v337, %v623
  %625 = vmatprep.mubr.f32.mxu0 0.0
  %626 = vmatmul.mubr.f32.gmra.mxu0 %v436
  %v627 = vpop.f32.mrf.mxu0
  %v628 = vadd.f32 %v341, %v627
  %v629 = vpop.f32.mrf.mxu0
  %v630 = vadd.f32 %v343, %v629
  %631 = vmatprep.mubr.f32.mxu0 0.0
  %632 = vmatmul.mubr.f32.gmra.mxu0 %v439
  %v633 = vpop.f32.mrf.mxu0
  %v634 = vadd.f32 %v347, %v633
  %v635 = vpop.f32.mrf.mxu0
  %v636 = vadd.f32 %v349, %v635
  %637 = vmatprep.mubr.f32.mxu0 0.0
  %638 = vmatmul.mubr.f32.gmra.mxu0 %v442
  %v639 = vpop.f32.mrf.mxu0
  %v640 = vadd.f32 %v353, %v639
  %v641 = vpop.f32.mrf.mxu0
  %v642 = vadd.f32 %v355, %v641
  %643 = vmatprep.mubr.f32.mxu0 0.0
  %644 = vmatmul.mubr.f32.gmra.mxu0 %v445
  %v645 = vpop.f32.mrf.mxu0
  %v646 = vadd.f32 %v359, %v645
  %v647 = vpop.f32.mrf.mxu0
  %v648 = vadd.f32 %v361, %v647
  %649 = vmatprep.mubr.f32.mxu0 0.0
  %650 = vmatmul.mubr.f32.gmra.mxu0 %v448
  %v651 = vpop.f32.mrf.mxu0
  %v652 = vadd.f32 %v365, %v651
  %v653 = vpop.f32.mrf.mxu0
  %v654 = vadd.f32 %v367, %v653
  %655 = vmatprep.mubr.f32.mxu0 0.0
  %656 = vmatmul.mubr.f32.gmra.mxu0 %v451
  %v657 = vpop.f32.mrf.mxu0
  %v658 = vadd.f32 %v371, %v657
  %v659 = vpop.f32.mrf.mxu0
  %v660 = vadd.f32 %v373, %v659
  %661 = vmatprep.mubr.f32.mxu0 0.0
  %662 = vmatmul.mubr.f32.gmra.mxu0 %v454
  %v663 = vpop.f32.mrf.mxu0
  %v664 = vadd.f32 %v377, %v663
  %v665 = vpop.f32.mrf.mxu0
  %v666 = vadd.f32 %v379, %v665
  %667 = vmatprep.mubr.f32.mxu0 0.0
  %668 = vmatmul.mubr.f32.gmra.mxu0 %v457
  %v669 = vpop.f32.mrf.mxu0
  %v670 = vadd.f32 %v383, %v669
  %v671 = vpop.f32.mrf.mxu0
  %v672 = vadd.f32 %v385, %v671
  %673 = vdwg.mxu0
  %s674 = scalar_lea.vmem %s0, 16
  %v675 = vld [vmem:[%s674] sm:$0xff]
  %v676 = vld [vmem:[%s674 + $0x8] sm:$0xff]
  %v677 = vld [vmem:[%s674 + $0x10] sm:$0xff]
  %v678 = vld [vmem:[%s674 + $0x18] sm:$0xff]
  %v679 = vld [vmem:[%s674 + $0x20] sm:$0xff]
  %v680 = vld [vmem:[%s674 + $0x28] sm:$0xff]
  %v681 = vld [vmem:[%s674 + $0x30] sm:$0xff]
  %v682 = vld [vmem:[%s674 + $0x38] sm:$0xff]
  %v683 = vld [vmem:[%s674 + $0x40] sm:$0xff]
  %v684 = vld [vmem:[%s674 + $0x48] sm:$0xff]
  %v685 = vld [vmem:[%s674 + $0x50] sm:$0xff]
  %v686 = vld [vmem:[%s674 + $0x58] sm:$0xff]
  %v687 = vld [vmem:[%s674 + $0x60] sm:$0xff]
  %v688 = vld [vmem:[%s674 + $0x68] sm:$0xff]
  %v689 = vld [vmem:[%s674 + $0x70] sm:$0xff]
  %v690 = vld [vmem:[%s674 + $0x78] sm:$0xff]
  %v691 = vld [vmem:[%s674 + $0x80] sm:$0xff]
  %v692 = vld [vmem:[%s674 + $0x88] sm:$0xff]
  %v693 = vld [vmem:[%s674 + $0x90] sm:$0xff]
  %v694 = vld [vmem:[%s674 + $0x98] sm:$0xff]
  %v695 = vld [vmem:[%s674 + $0xa0] sm:$0xff]
  %v696 = vld [vmem:[%s674 + $0xa8] sm:$0xff]
  %v697 = vld [vmem:[%s674 + $0xb0] sm:$0xff]
  %v698 = vld [vmem:[%s674 + $0xb8] sm:$0xff]
  %s699 = scalar_lea.vmem %s1, 128
  %v700 = vld [vmem:[%s699] sm:$0xff]
  %v701 = vld [vmem:[%s699 + $0x8] sm:$0xff]
  %v702 = vld [vmem:[%s699 + $0x10] sm:$0xff]
  %v703 = vld [vmem:[%s699 + $0x18] sm:$0xff]
  %v704 = vld [vmem:[%s699 + $0x20] sm:$0xff]
  %v705 = vld [vmem:[%s699 + $0x28] sm:$0xff]
  %v706 = vld [vmem:[%s699 + $0x30] sm:$0xf]
  %v707 = vld [vmem:[%s699 + $0x38] sm:$0xf]
  %v709 = vsel %vm98, %v675, 0
  %v712 = vsel %vm98, %v676, 0
  %v715 = vsel %vm98, %v677, 0
  %v718 = vsel %vm98, %v678, 0
  %v721 = vsel %vm98, %v679, 0
  %v724 = vsel %vm98, %v680, 0
  %v727 = vsel %vm98, %v681, 0
  %v730 = vsel %vm98, %v682, 0
  %v733 = vsel %vm98, %v683, 0
  %v736 = vsel %vm98, %v684, 0
  %v739 = vsel %vm98, %v685, 0
  %v742 = vsel %vm98, %v686, 0
  %v745 = vsel %vm98, %v687, 0
  %v748 = vsel %vm98, %v688, 0
  %v751 = vsel %vm98, %v689, 0
  %v754 = vsel %vm98, %v690, 0
  %v757 = vsel %vm98, %v691, 0
  %v760 = vsel %vm98, %v692, 0
  %v763 = vsel %vm98, %v693, 0
  %v766 = vsel %vm98, %v694, 0
  %v769 = vsel %vm98, %v695, 0
  %v772 = vsel %vm98, %v696, 0
  %v775 = vsel %vm98, %v697, 0
  %v778 = vsel %vm98, %v698, 0
  %v781 = vsel %vm171, %v706, 0
  %v784 = vsel %vm171, %v707, 0
  %786 = vmatprep.subr.mxu0 0.0
  %787 = vmatpush1.msra.mxu0 0.0
  %788 = vmatprep.subr.mxu0 0.0
  %789 = vmatpush1.msra.mxu0 0.0
  %790 = vmatprep.subr.mxu0 0.0
  %791 = vmatpush1.msra.mxu0 0.0
  %792 = vmatprep.subr.mxu0 0.0
  %793 = vmatpush1.msra.mxu0 0.0
  %794 = vmatprep.subr.mxu0 0.0
  %795 = vmatpush1.msra.mxu0 0.0
  %796 = vmatprep.subr.mxu0 0.0
  %797 = vmatpush1.msra.mxu0 0.0
  %798 = vmatprep.subr.mxu0 0.0
  %799 = vmatpush1.msra.mxu0 0.0
  %800 = vmatprep.subr.mxu0 0.0
  %801 = vmatpush1.msra.mxu0 0.0
  %802 = vmatprep.subr.mxu0 0.0
  %803 = vmatpush1.msra.mxu0 0.0
  %804 = vmatprep.subr.mxu0 0.0
  %805 = vmatpush1.msra.mxu0 0.0
  %806 = vmatprep.subr.mxu0 0.0
  %807 = vmatpush1.msra.mxu0 0.0
  %808 = vmatprep.subr.mxu0 0.0
  %809 = vmatpush1.msra.mxu0 0.0
  %810 = vmatprep.subr.mxu0 %v784
  %811 = vmatpush1.msra.mxu0 %v781
  %812 = vmatprep.subr.mxu0 %v705
  %813 = vmatpush1.msra.mxu0 %v704
  %814 = vmatprep.subr.mxu0 %v703
  %815 = vmatpush1.msra.mxu0 %v702
  %816 = vmatprep.subr.mxu0 %v701
  %817 = vmatpush1.msra.mxu0 %v700
  %818 = vmatprep.subr.mxu0 0.0
  %819 = vmatpush2.msra.mxu0 0.0
  %820 = vmatprep.subr.mxu0 0.0
  %821 = vmatpush2.msra.mxu0 0.0
  %822 = vmatprep.subr.mxu0 0.0
  %823 = vmatpush2.msra.mxu0 0.0
  %824 = vmatprep.subr.mxu0 0.0
  %825 = vmatpush2.msra.mxu0 0.0
  %826 = vmatprep.subr.mxu0 0.0
  %827 = vmatpush2.msra.mxu0 0.0
  %828 = vmatprep.subr.mxu0 0.0
  %829 = vmatpush2.msra.mxu0 0.0
  %830 = vmatprep.subr.mxu0 0.0
  %831 = vmatpush2.msra.mxu0 0.0
  %832 = vmatprep.subr.mxu0 0.0
  %833 = vmatpush2.msra.mxu0 0.0
  %834 = vmatprep.subr.mxu0 0.0
  %835 = vmatpush2.msra.mxu0 0.0
  %836 = vmatprep.subr.mxu0 0.0
  %837 = vmatpush2.msra.mxu0 0.0
  %838 = vmatprep.subr.mxu0 0.0
  %839 = vmatpush2.msra.mxu0 0.0
  %840 = vmatprep.subr.mxu0 0.0
  %841 = vmatpush2.msra.mxu0 0.0
  %842 = vmatprep.subr.mxu0 0.0
  %843 = vmatpush2.msra.mxu0 0.0
  %844 = vmatprep.subr.mxu0 0.0
  %845 = vmatpush2.msra.mxu0 0.0
  %846 = vmatprep.subr.mxu0 0.0
  %847 = vmatpush2.msra.mxu0 0.0
  %848 = vmatprep.subr.mxu0 0.0
  %849 = vmatpush2.msra.mxu0 0.0
  %850 = vmatprep.mubr.f32.mxu0 0.0
  %851 = vmatmul.mubr.f32.gmra.mxu0 %v709
  %v852 = vpop.f32.mrf.mxu0
  %v853 = vadd.f32 0.0, %v852
  %v854 = vpop.f32.mrf.mxu0
  %v855 = vadd.f32 0.0, %v854
  %856 = vmatprep.mubr.f32.mxu0 0.0
  %857 = vmatmul.mubr.f32.gmra.mxu0 %v712
  %v858 = vpop.f32.mrf.mxu0
  %v859 = vadd.f32 0.0, %v858
  %v860 = vpop.f32.mrf.mxu0
  %v861 = vadd.f32 0.0, %v860
  %862 = vmatprep.mubr.f32.mxu0 0.0
  %863 = vmatmul.mubr.f32.gmra.mxu0 %v715
  %v864 = vpop.f32.mrf.mxu0
  %v865 = vadd.f32 0.0, %v864
  %v866 = vpop.f32.mrf.mxu0
  %v867 = vadd.f32 0.0, %v866
  %868 = vmatprep.mubr.f32.mxu0 0.0
  %869 = vmatmul.mubr.f32.gmra.mxu0 %v718
  %v870 = vpop.f32.mrf.mxu0
  %v871 = vadd.f32 0.0, %v870
  %v872 = vpop.f32.mrf.mxu0
  %v873 = vadd.f32 0.0, %v872
  %874 = vmatprep.mubr.f32.mxu0 0.0
  %875 = vmatmul.mubr.f32.gmra.mxu0 %v721
  %v876 = vpop.f32.mrf.mxu0
  %v877 = vadd.f32 0.0, %v876
  %v878 = vpop.f32.mrf.mxu0
  %v879 = vadd.f32 0.0, %v878
  %880 = vmatprep.mubr.f32.mxu0 0.0
  %881 = vmatmul.mubr.f32.gmra.mxu0 %v724
  %v882 = vpop.f32.mrf.mxu0
  %v883 = vadd.f32 0.0, %v882
  %v884 = vpop.f32.mrf.mxu0
  %v885 = vadd.f32 0.0, %v884
  %886 = vmatprep.mubr.f32.mxu0 0.0
  %887 = vmatmul.mubr.f32.gmra.mxu0 %v727
  %v888 = vpop.f32.mrf.mxu0
  %v889 = vadd.f32 0.0, %v888
  %v890 = vpop.f32.mrf.mxu0
  %v891 = vadd.f32 0.0, %v890
  %892 = vmatprep.mubr.f32.mxu0 0.0
  %893 = vmatmul.mubr.f32.gmra.mxu0 %v730
  %v894 = vpop.f32.mrf.mxu0
  %v895 = vadd.f32 0.0, %v894
  %v896 = vpop.f32.mrf.mxu0
  %v897 = vadd.f32 0.0, %v896
  %898 = vmatprep.mubr.f32.mxu0 0.0
  %899 = vmatmul.mubr.f32.gmra.mxu0 %v733
  %v900 = vpop.f32.mrf.mxu0
  %v901 = vadd.f32 0.0, %v900
  %v902 = vpop.f32.mrf.mxu0
  %v903 = vadd.f32 0.0, %v902
  %904 = vmatprep.mubr.f32.mxu0 0.0
  %905 = vmatmul.mubr.f32.gmra.mxu0 %v736
  %v906 = vpop.f32.mrf.mxu0
  %v907 = vadd.f32 0.0, %v906
  %v908 = vpop.f32.mrf.mxu0
  %v909 = vadd.f32 0.0, %v908
  %910 = vmatprep.mubr.f32.mxu0 0.0
  %911 = vmatmul.mubr.f32.gmra.mxu0 %v739
  %v912 = vpop.f32.mrf.mxu0
  %v913 = vadd.f32 0.0, %v912
  %v914 = vpop.f32.mrf.mxu0
  %v915 = vadd.f32 0.0, %v914
  %916 = vmatprep.mubr.f32.mxu0 0.0
  %917 = vmatmul.mubr.f32.gmra.mxu0 %v742
  %v918 = vpop.f32.mrf.mxu0
  %v919 = vadd.f32 0.0, %v918
  %v920 = vpop.f32.mrf.mxu0
  %v921 = vadd.f32 0.0, %v920
  %922 = vmatprep.mubr.f32.mxu0 0.0
  %923 = vmatmul.mubr.f32.gmra.mxu0 %v745
  %v924 = vpop.f32.mrf.mxu0
  %v925 = vadd.f32 0.0, %v924
  %v926 = vpop.f32.mrf.mxu0
  %v927 = vadd.f32 0.0, %v926
  %928 = vmatprep.mubr.f32.mxu0 0.0
  %929 = vmatmul.mubr.f32.gmra.mxu0 %v748
  %v930 = vpop.f32.mrf.mxu0
  %v931 = vadd.f32 0.0, %v930
  %v932 = vpop.f32.mrf.mxu0
  %v933 = vadd.f32 0.0, %v932
  %934 = vmatprep.mubr.f32.mxu0 0.0
  %935 = vmatmul.mubr.f32.gmra.mxu0 %v751
  %v936 = vpop.f32.mrf.mxu0
  %v937 = vadd.f32 0.0, %v936
  %v938 = vpop.f32.mrf.mxu0
  %v939 = vadd.f32 0.0, %v938
  %940 = vmatprep.mubr.f32.mxu0 0.0
  %941 = vmatmul.mubr.f32.gmra.mxu0 %v754
  %v942 = vpop.f32.mrf.mxu0
  %v943 = vadd.f32 0.0, %v942
  %v944 = vpop.f32.mrf.mxu0
  %v945 = vadd.f32 0.0, %v944
  %946 = vmatprep.mubr.f32.mxu0 0.0
  %947 = vmatmul.mubr.f32.gmra.mxu0 %v757
  %v948 = vpop.f32.mrf.mxu0
  %v949 = vadd.f32 0.0, %v948
  %v950 = vpop.f32.mrf.mxu0
  %v951 = vadd.f32 0.0, %v950
  %952 = vmatprep.mubr.f32.mxu0 0.0
  %953 = vmatmul.mubr.f32.gmra.mxu0 %v760
  %v954 = vpop.f32.mrf.mxu0
  %v955 = vadd.f32 0.0, %v954
  %v956 = vpop.f32.mrf.mxu0
  %v957 = vadd.f32 0.0, %v956
  %958 = vmatprep.mubr.f32.mxu0 0.0
  %959 = vmatmul.mubr.f32.gmra.mxu0 %v763
  %v960 = vpop.f32.mrf.mxu0
  %v961 = vadd.f32 0.0, %v960
  %v962 = vpop.f32.mrf.mxu0
  %v963 = vadd.f32 0.0, %v962
  %964 = vmatprep.mubr.f32.mxu0 0.0
  %965 = vmatmul.mubr.f32.gmra.mxu0 %v766
  %v966 = vpop.f32.mrf.mxu0
  %v967 = vadd.f32 0.0, %v966
  %v968 = vpop.f32.mrf.mxu0
  %v969 = vadd.f32 0.0, %v968
  %970 = vmatprep.mubr.f32.mxu0 0.0
  %971 = vmatmul.mubr.f32.gmra.mxu0 %v769
  %v972 = vpop.f32.mrf.mxu0
  %v973 = vadd.f32 0.0, %v972
  %v974 = vpop.f32.mrf.mxu0
  %v975 = vadd.f32 0.0, %v974
  %976 = vmatprep.mubr.f32.mxu0 0.0
  %977 = vmatmul.mubr.f32.gmra.mxu0 %v772
  %v978 = vpop.f32.mrf.mxu0
  %v979 = vadd.f32 0.0, %v978
  %v980 = vpop.f32.mrf.mxu0
  %v981 = vadd.f32 0.0, %v980
  %982 = vmatprep.mubr.f32.mxu0 0.0
  %983 = vmatmul.mubr.f32.gmra.mxu0 %v775
  %v984 = vpop.f32.mrf.mxu0
  %v985 = vadd.f32 0.0, %v984
  %v986 = vpop.f32.mrf.mxu0
  %v987 = vadd.f32 0.0, %v986
  %988 = vmatprep.mubr.f32.mxu0 0.0
  %989 = vmatmul.mubr.f32.gmra.mxu0 %v778
  %v990 = vpop.f32.mrf.mxu0
  %v991 = vadd.f32 0.0, %v990
  %v992 = vpop.f32.mrf.mxu0
  %v993 = vadd.f32 0.0, %v992
  %994 = vdwg.mxu0
  %v995 = vadd.f32 %v532, %v853
  %v996 = vadd.f32 %v534, %v855
  %v997 = vadd.f32 %v538, %v859
  %v998 = vadd.f32 %v540, %v861
  %v999 = vadd.f32 %v544, %v865
  %v1000 = vadd.f32 %v546, %v867
  %v1001 = vadd.f32 %v550, %v871
  %v1002 = vadd.f32 %v552, %v873
  %v1003 = vadd.f32 %v556, %v877
  %v1004 = vadd.f32 %v558, %v879
  %v1005 = vadd.f32 %v562, %v883
  %v1006 = vadd.f32 %v564, %v885
  %v1007 = vadd.f32 %v568, %v889
  %v1008 = vadd.f32 %v570, %v891
  %v1009 = vadd.f32 %v574, %v895
  %v1010 = vadd.f32 %v576, %v897
  %v1011 = vadd.f32 %v580, %v901
  %v1012 = vadd.f32 %v582, %v903
  %v1013 = vadd.f32 %v586, %v907
  %v1014 = vadd.f32 %v588, %v909
  %v1015 = vadd.f32 %v592, %v913
  %v1016 = vadd.f32 %v594, %v915
  %v1017 = vadd.f32 %v598, %v919
  %v1018 = vadd.f32 %v600, %v921
  %v1019 = vadd.f32 %v604, %v925
  %v1020 = vadd.f32 %v606, %v927
  %v1021 = vadd.f32 %v610, %v931
  %v1022 = vadd.f32 %v612, %v933
  %v1023 = vadd.f32 %v616, %v937
  %v1024 = vadd.f32 %v618, %v939
  %v1025 = vadd.f32 %v622, %v943
  %v1026 = vadd.f32 %v624, %v945
  %v1027 = vadd.f32 %v628, %v949
  %v1028 = vadd.f32 %v630, %v951
  %v1029 = vadd.f32 %v634, %v955
  %v1030 = vadd.f32 %v636, %v957
  %v1031 = vadd.f32 %v640, %v961
  %v1032 = vadd.f32 %v642, %v963
  %v1033 = vadd.f32 %v646, %v967
  %v1034 = vadd.f32 %v648, %v969
  %v1035 = vadd.f32 %v652, %v973
  %v1036 = vadd.f32 %v654, %v975
  %v1037 = vadd.f32 %v658, %v979
  %v1038 = vadd.f32 %v660, %v981
  %v1039 = vadd.f32 %v664, %v985
  %v1040 = vadd.f32 %v666, %v987
  %v1041 = vadd.f32 %v670, %v991
  %v1042 = vadd.f32 %v672, %v993
  %s1043 = scalar_lea.vmem %s0, 24
  %v1044 = vld [vmem:[%s1043] sm:$0xff]
  %v1045 = vld [vmem:[%s1043 + $0x8] sm:$0xff]
  %v1046 = vld [vmem:[%s1043 + $0x10] sm:$0xff]
  %v1047 = vld [vmem:[%s1043 + $0x18] sm:$0xff]
  %v1048 = vld [vmem:[%s1043 + $0x20] sm:$0xff]
  %v1049 = vld [vmem:[%s1043 + $0x28] sm:$0xff]
  %v1050 = vld [vmem:[%s1043 + $0x30] sm:$0xff]
  %v1051 = vld [vmem:[%s1043 + $0x38] sm:$0xff]
  %v1052 = vld [vmem:[%s1043 + $0x40] sm:$0xff]
  %v1053 = vld [vmem:[%s1043 + $0x48] sm:$0xff]
  %v1054 = vld [vmem:[%s1043 + $0x50] sm:$0xff]
  %v1055 = vld [vmem:[%s1043 + $0x58] sm:$0xff]
  %v1056 = vld [vmem:[%s1043 + $0x60] sm:$0xff]
  %v1057 = vld [vmem:[%s1043 + $0x68] sm:$0xff]
  %v1058 = vld [vmem:[%s1043 + $0x70] sm:$0xff]
  %v1059 = vld [vmem:[%s1043 + $0x78] sm:$0xff]
  %v1060 = vld [vmem:[%s1043 + $0x80] sm:$0xff]
  %v1061 = vld [vmem:[%s1043 + $0x88] sm:$0xff]
  %v1062 = vld [vmem:[%s1043 + $0x90] sm:$0xff]
  %v1063 = vld [vmem:[%s1043 + $0x98] sm:$0xff]
  %v1064 = vld [vmem:[%s1043 + $0xa0] sm:$0xff]
  %v1065 = vld [vmem:[%s1043 + $0xa8] sm:$0xff]
  %v1066 = vld [vmem:[%s1043 + $0xb0] sm:$0xff]
  %v1067 = vld [vmem:[%s1043 + $0xb8] sm:$0xff]
  %s1068 = scalar_lea.vmem %s1, 192
  %v1069 = vld [vmem:[%s1068] sm:$0xff]
  %v1070 = vld [vmem:[%s1068 + $0x8] sm:$0xff]
  %v1071 = vld [vmem:[%s1068 + $0x10] sm:$0xff]
  %v1072 = vld [vmem:[%s1068 + $0x18] sm:$0xff]
  %v1073 = vld [vmem:[%s1068 + $0x20] sm:$0xff]
  %v1074 = vld [vmem:[%s1068 + $0x28] sm:$0xff]
  %v1075 = vld [vmem:[%s1068 + $0x30] sm:$0xf]
  %v1076 = vld [vmem:[%s1068 + $0x38] sm:$0xf]
  %v1078 = vsel %vm98, %v1044, 0
  %v1081 = vsel %vm98, %v1045, 0
  %v1084 = vsel %vm98, %v1046, 0
  %v1087 = vsel %vm98, %v1047, 0
  %v1090 = vsel %vm98, %v1048, 0
  %v1093 = vsel %vm98, %v1049, 0
  %v1096 = vsel %vm98, %v1050, 0
  %v1099 = vsel %vm98, %v1051, 0
  %v1102 = vsel %vm98, %v1052, 0
  %v1105 = vsel %vm98, %v1053, 0
  %v1108 = vsel %vm98, %v1054, 0
  %v1111 = vsel %vm98, %v1055, 0
  %v1114 = vsel %vm98, %v1056, 0
  %v1117 = vsel %vm98, %v1057, 0
  %v1120 = vsel %vm98, %v1058, 0
  %v1123 = vsel %vm98, %v1059, 0
  %v1126 = vsel %vm98, %v1060, 0
  %v1129 = vsel %vm98, %v1061, 0
  %v1132 = vsel %vm98, %v1062, 0
  %v1135 = vsel %vm98, %v1063, 0
  %v1138 = vsel %vm98, %v1064, 0
  %v1141 = vsel %vm98, %v1065, 0
  %v1144 = vsel %vm98, %v1066, 0
  %v1147 = vsel %vm98, %v1067, 0
  %v1150 = vsel %vm171, %v1075, 0
  %v1153 = vsel %vm171, %v1076, 0
  %1155 = vmatprep.subr.mxu0 0.0
  %1156 = vmatpush1.msra.mxu0 0.0
  %1157 = vmatprep.subr.mxu0 0.0
  %1158 = vmatpush1.msra.mxu0 0.0
  %1159 = vmatprep.subr.mxu0 0.0
  %1160 = vmatpush1.msra.mxu0 0.0
  %1161 = vmatprep.subr.mxu0 0.0
  %1162 = vmatpush1.msra.mxu0 0.0
  %1163 = vmatprep.subr.mxu0 0.0
  %1164 = vmatpush1.msra.mxu0 0.0
  %1165 = vmatprep.subr.mxu0 0.0
  %1166 = vmatpush1.msra.mxu0 0.0
  %1167 = vmatprep.subr.mxu0 0.0
  %1168 = vmatpush1.msra.mxu0 0.0
  %1169 = vmatprep.subr.mxu0 0.0
  %1170 = vmatpush1.msra.mxu0 0.0
  %1171 = vmatprep.subr.mxu0 0.0
  %1172 = vmatpush1.msra.mxu0 0.0
  %1173 = vmatprep.subr.mxu0 0.0
  %1174 = vmatpush1.msra.mxu0 0.0
  %1175 = vmatprep.subr.mxu0 0.0
  %1176 = vmatpush1.msra.mxu0 0.0
  %1177 = vmatprep.subr.mxu0 0.0
  %1178 = vmatpush1.msra.mxu0 0.0
  %1179 = vmatprep.subr.mxu0 %v1153
  %1180 = vmatpush1.msra.mxu0 %v1150
  %1181 = vmatprep.subr.mxu0 %v1074
  %1182 = vmatpush1.msra.mxu0 %v1073
  %1183 = vmatprep.subr.mxu0 %v1072
  %1184 = vmatpush1.msra.mxu0 %v1071
  %1185 = vmatprep.subr.mxu0 %v1070
  %1186 = vmatpush1.msra.mxu0 %v1069
  %1187 = vmatprep.subr.mxu0 0.0
  %1188 = vmatpush2.msra.mxu0 0.0
  %1189 = vmatprep.subr.mxu0 0.0
  %1190 = vmatpush2.msra.mxu0 0.0
  %1191 = vmatprep.subr.mxu0 0.0
  %1192 = vmatpush2.msra.mxu0 0.0
  %1193 = vmatprep.subr.mxu0 0.0
  %1194 = vmatpush2.msra.mxu0 0.0
  %1195 = vmatprep.subr.mxu0 0.0
  %1196 = vmatpush2.msra.mxu0 0.0
  %1197 = vmatprep.subr.mxu0 0.0
  %1198 = vmatpush2.msra.mxu0 0.0
  %1199 = vmatprep.subr.mxu0 0.0
  %1200 = vmatpush2.msra.mxu0 0.0
  %1201 = vmatprep.subr.mxu0 0.0
  %1202 = vmatpush2.msra.mxu0 0.0
  %1203 = vmatprep.subr.mxu0 0.0
  %1204 = vmatpush2.msra.mxu0 0.0
  %1205 = vmatprep.subr.mxu0 0.0
  %1206 = vmatpush2.msra.mxu0 0.0
  %1207 = vmatprep.subr.mxu0 0.0
  %1208 = vmatpush2.msra.mxu0 0.0
  %1209 = vmatprep.subr.mxu0 0.0
  %1210 = vmatpush2.msra.mxu0 0.0
  %1211 = vmatprep.subr.mxu0 0.0
  %1212 = vmatpush2.msra.mxu0 0.0
  %1213 = vmatprep.subr.mxu0 0.0
  %1214 = vmatpush2.msra.mxu0 0.0
  %1215 = vmatprep.subr.mxu0 0.0
  %1216 = vmatpush2.msra.mxu0 0.0
  %1217 = vmatprep.subr.mxu0 0.0
  %1218 = vmatpush2.msra.mxu0 0.0
  %1219 = vmatprep.mubr.f32.mxu0 0.0
  %1220 = vmatmul.mubr.f32.gmra.mxu0 %v1078
  %v1221 = vpop.f32.mrf.mxu0
  %v1222 = vadd.f32 0.0, %v1221
  %v1223 = vpop.f32.mrf.mxu0
  %v1224 = vadd.f32 0.0, %v1223
  %1225 = vmatprep.mubr.f32.mxu0 0.0
  %1226 = vmatmul.mubr.f32.gmra.mxu0 %v1081
  %v1227 = vpop.f32.mrf.mxu0
  %v1228 = vadd.f32 0.0, %v1227
  %v1229 = vpop.f32.mrf.mxu0
  %v1230 = vadd.f32 0.0, %v1229
  %1231 = vmatprep.mubr.f32.mxu0 0.0
  %1232 = vmatmul.mubr.f32.gmra.mxu0 %v1084
  %v1233 = vpop.f32.mrf.mxu0
  %v1234 = vadd.f32 0.0, %v1233
  %v1235 = vpop.f32.mrf.mxu0
  %v1236 = vadd.f32 0.0, %v1235
  %1237 = vmatprep.mubr.f32.mxu0 0.0
  %1238 = vmatmul.mubr.f32.gmra.mxu0 %v1087
  %v1239 = vpop.f32.mrf.mxu0
  %v1240 = vadd.f32 0.0, %v1239
  %v1241 = vpop.f32.mrf.mxu0
  %v1242 = vadd.f32 0.0, %v1241
  %1243 = vmatprep.mubr.f32.mxu0 0.0
  %1244 = vmatmul.mubr.f32.gmra.mxu0 %v1090
  %v1245 = vpop.f32.mrf.mxu0
  %v1246 = vadd.f32 0.0, %v1245
  %v1247 = vpop.f32.mrf.mxu0
  %v1248 = vadd.f32 0.0, %v1247
  %1249 = vmatprep.mubr.f32.mxu0 0.0
  %1250 = vmatmul.mubr.f32.gmra.mxu0 %v1093
  %v1251 = vpop.f32.mrf.mxu0
  %v1252 = vadd.f32 0.0, %v1251
  %v1253 = vpop.f32.mrf.mxu0
  %v1254 = vadd.f32 0.0, %v1253
  %1255 = vmatprep.mubr.f32.mxu0 0.0
  %1256 = vmatmul.mubr.f32.gmra.mxu0 %v1096
  %v1257 = vpop.f32.mrf.mxu0
  %v1258 = vadd.f32 0.0, %v1257
  %v1259 = vpop.f32.mrf.mxu0
  %v1260 = vadd.f32 0.0, %v1259
  %1261 = vmatprep.mubr.f32.mxu0 0.0
  %1262 = vmatmul.mubr.f32.gmra.mxu0 %v1099
  %v1263 = vpop.f32.mrf.mxu0
  %v1264 = vadd.f32 0.0, %v1263
  %v1265 = vpop.f32.mrf.mxu0
  %v1266 = vadd.f32 0.0, %v1265
  %1267 = vmatprep.mubr.f32.mxu0 0.0
  %1268 = vmatmul.mubr.f32.gmra.mxu0 %v1102
  %v1269 = vpop.f32.mrf.mxu0
  %v1270 = vadd.f32 0.0, %v1269
  %v1271 = vpop.f32.mrf.mxu0
  %v1272 = vadd.f32 0.0, %v1271
  %1273 = vmatprep.mubr.f32.mxu0 0.0
  %1274 = vmatmul.mubr.f32.gmra.mxu0 %v1105
  %v1275 = vpop.f32.mrf.mxu0
  %v1276 = vadd.f32 0.0, %v1275
  %v1277 = vpop.f32.mrf.mxu0
  %v1278 = vadd.f32 0.0, %v1277
  %1279 = vmatprep.mubr.f32.mxu0 0.0
  %1280 = vmatmul.mubr.f32.gmra.mxu0 %v1108
  %v1281 = vpop.f32.mrf.mxu0
  %v1282 = vadd.f32 0.0, %v1281
  %v1283 = vpop.f32.mrf.mxu0
  %v1284 = vadd.f32 0.0, %v1283
  %1285 = vmatprep.mubr.f32.mxu0 0.0
  %1286 = vmatmul.mubr.f32.gmra.mxu0 %v1111
  %v1287 = vpop.f32.mrf.mxu0
  %v1288 = vadd.f32 0.0, %v1287
  %v1289 = vpop.f32.mrf.mxu0
  %v1290 = vadd.f32 0.0, %v1289
  %1291 = vmatprep.mubr.f32.mxu0 0.0
  %1292 = vmatmul.mubr.f32.gmra.mxu0 %v1114
  %v1293 = vpop.f32.mrf.mxu0
  %v1294 = vadd.f32 0.0, %v1293
  %v1295 = vpop.f32.mrf.mxu0
  %v1296 = vadd.f32 0.0, %v1295
  %1297 = vmatprep.mubr.f32.mxu0 0.0
  %1298 = vmatmul.mubr.f32.gmra.mxu0 %v1117
  %v1299 = vpop.f32.mrf.mxu0
  %v1300 = vadd.f32 0.0, %v1299
  %v1301 = vpop.f32.mrf.mxu0
  %v1302 = vadd.f32 0.0, %v1301
  %1303 = vmatprep.mubr.f32.mxu0 0.0
  %1304 = vmatmul.mubr.f32.gmra.mxu0 %v1120
  %v1305 = vpop.f32.mrf.mxu0
  %v1306 = vadd.f32 0.0, %v1305
  %v1307 = vpop.f32.mrf.mxu0
  %v1308 = vadd.f32 0.0, %v1307
  %1309 = vmatprep.mubr.f32.mxu0 0.0
  %1310 = vmatmul.mubr.f32.gmra.mxu0 %v1123
  %v1311 = vpop.f32.mrf.mxu0
  %v1312 = vadd.f32 0.0, %v1311
  %v1313 = vpop.f32.mrf.mxu0
  %v1314 = vadd.f32 0.0, %v1313
  %1315 = vmatprep.mubr.f32.mxu0 0.0
  %1316 = vmatmul.mubr.f32.gmra.mxu0 %v1126
  %v1317 = vpop.f32.mrf.mxu0
  %v1318 = vadd.f32 0.0, %v1317
  %v1319 = vpop.f32.mrf.mxu0
  %v1320 = vadd.f32 0.0, %v1319
  %1321 = vmatprep.mubr.f32.mxu0 0.0
  %1322 = vmatmul.mubr.f32.gmra.mxu0 %v1129
  %v1323 = vpop.f32.mrf.mxu0
  %v1324 = vadd.f32 0.0, %v1323
  %v1325 = vpop.f32.mrf.mxu0
  %v1326 = vadd.f32 0.0, %v1325
  %1327 = vmatprep.mubr.f32.mxu0 0.0
  %1328 = vmatmul.mubr.f32.gmra.mxu0 %v1132
  %v1329 = vpop.f32.mrf.mxu0
  %v1330 = vadd.f32 0.0, %v1329
  %v1331 = vpop.f32.mrf.mxu0
  %v1332 = vadd.f32 0.0, %v1331
  %1333 = vmatprep.mubr.f32.mxu0 0.0
  %1334 = vmatmul.mubr.f32.gmra.mxu0 %v1135
  %v1335 = vpop.f32.mrf.mxu0
  %v1336 = vadd.f32 0.0, %v1335
  %v1337 = vpop.f32.mrf.mxu0
  %v1338 = vadd.f32 0.0, %v1337
  %1339 = vmatprep.mubr.f32.mxu0 0.0
  %1340 = vmatmul.mubr.f32.gmra.mxu0 %v1138
  %v1341 = vpop.f32.mrf.mxu0
  %v1342 = vadd.f32 0.0, %v1341
  %v1343 = vpop.f32.mrf.mxu0
  %v1344 = vadd.f32 0.0, %v1343
  %1345 = vmatprep.mubr.f32.mxu0 0.0
  %1346 = vmatmul.mubr.f32.gmra.mxu0 %v1141
  %v1347 = vpop.f32.mrf.mxu0
  %v1348 = vadd.f32 0.0, %v1347
  %v1349 = vpop.f32.mrf.mxu0
  %v1350 = vadd.f32 0.0, %v1349
  %1351 = vmatprep.mubr.f32.mxu0 0.0
  %1352 = vmatmul.mubr.f32.gmra.mxu0 %v1144
  %v1353 = vpop.f32.mrf.mxu0
  %v1354 = vadd.f32 0.0, %v1353
  %v1355 = vpop.f32.mrf.mxu0
  %v1356 = vadd.f32 0.0, %v1355
  %1357 = vmatprep.mubr.f32.mxu0 0.0
  %1358 = vmatmul.mubr.f32.gmra.mxu0 %v1147
  %v1359 = vpop.f32.mrf.mxu0
  %v1360 = vadd.f32 0.0, %v1359
  %v1361 = vpop.f32.mrf.mxu0
  %v1362 = vadd.f32 0.0, %v1361
  %1363 = vdwg.mxu0
  %v1364 = vadd.f32 %v995, %v1222
  %v1365 = vadd.f32 %v996, %v1224
  %v1366 = vadd.f32 %v997, %v1228
  %v1367 = vadd.f32 %v998, %v1230
  %v1368 = vadd.f32 %v999, %v1234
  %v1369 = vadd.f32 %v1000, %v1236
  %v1370 = vadd.f32 %v1001, %v1240
  %v1371 = vadd.f32 %v1002, %v1242
  %v1372 = vadd.f32 %v1003, %v1246
  %v1373 = vadd.f32 %v1004, %v1248
  %v1374 = vadd.f32 %v1005, %v1252
  %v1375 = vadd.f32 %v1006, %v1254
  %v1376 = vadd.f32 %v1007, %v1258
  %v1377 = vadd.f32 %v1008, %v1260
  %v1378 = vadd.f32 %v1009, %v1264
  %v1379 = vadd.f32 %v1010, %v1266
  %v1380 = vadd.f32 %v1011, %v1270
  %v1381 = vadd.f32 %v1012, %v1272
  %v1382 = vadd.f32 %v1013, %v1276
  %v1383 = vadd.f32 %v1014, %v1278
  %v1384 = vadd.f32 %v1015, %v1282
  %v1385 = vadd.f32 %v1016, %v1284
  %v1386 = vadd.f32 %v1017, %v1288
  %v1387 = vadd.f32 %v1018, %v1290
  %v1388 = vadd.f32 %v1019, %v1294
  %v1389 = vadd.f32 %v1020, %v1296
  %v1390 = vadd.f32 %v1021, %v1300
  %v1391 = vadd.f32 %v1022, %v1302
  %v1392 = vadd.f32 %v1023, %v1306
  %v1393 = vadd.f32 %v1024, %v1308
  %v1394 = vadd.f32 %v1025, %v1312
  %v1395 = vadd.f32 %v1026, %v1314
  %v1396 = vadd.f32 %v1027, %v1318
  %v1397 = vadd.f32 %v1028, %v1320
  %v1398 = vadd.f32 %v1029, %v1324
  %v1399 = vadd.f32 %v1030, %v1326
  %v1400 = vadd.f32 %v1031, %v1330
  %v1401 = vadd.f32 %v1032, %v1332
  %v1402 = vadd.f32 %v1033, %v1336
  %v1403 = vadd.f32 %v1034, %v1338
  %v1404 = vadd.f32 %v1035, %v1342
  %v1405 = vadd.f32 %v1036, %v1344
  %v1406 = vadd.f32 %v1037, %v1348
  %v1407 = vadd.f32 %v1038, %v1350
  %v1408 = vadd.f32 %v1039, %v1354
  %v1409 = vadd.f32 %v1040, %v1356
  %v1410 = vadd.f32 %v1041, %v1360
  %v1411 = vadd.f32 %v1042, %v1362
  %s1412 = scalar_lea.vmem %s0, 32
  %v1413 = vld [vmem:[%s1412] sm:$0xff]
  %v1414 = vld [vmem:[%s1412 + $0x8] sm:$0xff]
  %v1415 = vld [vmem:[%s1412 + $0x10] sm:$0xff]
  %v1416 = vld [vmem:[%s1412 + $0x18] sm:$0xff]
  %v1417 = vld [vmem:[%s1412 + $0x20] sm:$0xff]
  %v1418 = vld [vmem:[%s1412 + $0x28] sm:$0xff]
  %v1419 = vld [vmem:[%s1412 + $0x30] sm:$0xff]
  %v1420 = vld [vmem:[%s1412 + $0x38] sm:$0xff]
  %v1421 = vld [vmem:[%s1412 + $0x40] sm:$0xff]
  %v1422 = vld [vmem:[%s1412 + $0x48] sm:$0xff]
  %v1423 = vld [vmem:[%s1412 + $0x50] sm:$0xff]
  %v1424 = vld [vmem:[%s1412 + $0x58] sm:$0xff]
  %v1425 = vld [vmem:[%s1412 + $0x60] sm:$0xff]
  %v1426 = vld [vmem:[%s1412 + $0x68] sm:$0xff]
  %v1427 = vld [vmem:[%s1412 + $0x70] sm:$0xff]
  %v1428 = vld [vmem:[%s1412 + $0x78] sm:$0xff]
  %v1429 = vld [vmem:[%s1412 + $0x80] sm:$0xff]
  %v1430 = vld [vmem:[%s1412 + $0x88] sm:$0xff]
  %v1431 = vld [vmem:[%s1412 + $0x90] sm:$0xff]
  %v1432 = vld [vmem:[%s1412 + $0x98] sm:$0xff]
  %v1433 = vld [vmem:[%s1412 + $0xa0] sm:$0xff]
  %v1434 = vld [vmem:[%s1412 + $0xa8] sm:$0xff]
  %v1435 = vld [vmem:[%s1412 + $0xb0] sm:$0xff]
  %v1436 = vld [vmem:[%s1412 + $0xb8] sm:$0xff]
  %s1437 = scalar_lea.vmem %s1, 256
  %v1438 = vld [vmem:[%s1437] sm:$0xff]
  %v1439 = vld [vmem:[%s1437 + $0x8] sm:$0xff]
  %v1440 = vld [vmem:[%s1437 + $0x10] sm:$0xff]
  %v1441 = vld [vmem:[%s1437 + $0x18] sm:$0xff]
  %v1442 = vld [vmem:[%s1437 + $0x20] sm:$0xff]
  %v1443 = vld [vmem:[%s1437 + $0x28] sm:$0xff]
  %v1444 = vld [vmem:[%s1437 + $0x30] sm:$0xf]
  %v1445 = vld [vmem:[%s1437 + $0x38] sm:$0xf]
  %v1447 = vsel %vm98, %v1413, 0
  %v1450 = vsel %vm98, %v1414, 0
  %v1453 = vsel %vm98, %v1415, 0
  %v1456 = vsel %vm98, %v1416, 0
  %v1459 = vsel %vm98, %v1417, 0
  %v1462 = vsel %vm98, %v1418, 0
  %v1465 = vsel %vm98, %v1419, 0
  %v1468 = vsel %vm98, %v1420, 0
  %v1471 = vsel %vm98, %v1421, 0
  %v1474 = vsel %vm98, %v1422, 0
  %v1477 = vsel %vm98, %v1423, 0
  %v1480 = vsel %vm98, %v1424, 0
  %v1483 = vsel %vm98, %v1425, 0
  %v1486 = vsel %vm98, %v1426, 0
  %v1489 = vsel %vm98, %v1427, 0
  %v1492 = vsel %vm98, %v1428, 0
  %v1495 = vsel %vm98, %v1429, 0
  %v1498 = vsel %vm98, %v1430, 0
  %v1501 = vsel %vm98, %v1431, 0
  %v1504 = vsel %vm98, %v1432, 0
  %v1507 = vsel %vm98, %v1433, 0
  %v1510 = vsel %vm98, %v1434, 0
  %v1513 = vsel %vm98, %v1435, 0
  %v1516 = vsel %vm98, %v1436, 0
  %v1519 = vsel %vm171, %v1444, 0
  %v1522 = vsel %vm171, %v1445, 0
  %1524 = vmatprep.subr.mxu0 0.0
  %1525 = vmatpush1.msra.mxu0 0.0
  %1526 = vmatprep.subr.mxu0 0.0
  %1527 = vmatpush1.msra.mxu0 0.0
  %1528 = vmatprep.subr.mxu0 0.0
  %1529 = vmatpush1.msra.mxu0 0.0
  %1530 = vmatprep.subr.mxu0 0.0
  %1531 = vmatpush1.msra.mxu0 0.0
  %1532 = vmatprep.subr.mxu0 0.0
  %1533 = vmatpush1.msra.mxu0 0.0
  %1534 = vmatprep.subr.mxu0 0.0
  %1535 = vmatpush1.msra.mxu0 0.0
  %1536 = vmatprep.subr.mxu0 0.0
  %1537 = vmatpush1.msra.mxu0 0.0
  %1538 = vmatprep.subr.mxu0 0.0
  %1539 = vmatpush1.msra.mxu0 0.0
  %1540 = vmatprep.subr.mxu0 0.0
  %1541 = vmatpush1.msra.mxu0 0.0
  %1542 = vmatprep.subr.mxu0 0.0
  %1543 = vmatpush1.msra.mxu0 0.0
  %1544 = vmatprep.subr.mxu0 0.0
  %1545 = vmatpush1.msra.mxu0 0.0
  %1546 = vmatprep.subr.mxu0 0.0
  %1547 = vmatpush1.msra.mxu0 0.0
  %1548 = vmatprep.subr.mxu0 %v1522
  %1549 = vmatpush1.msra.mxu0 %v1519
  %1550 = vmatprep.subr.mxu0 %v1443
  %1551 = vmatpush1.msra.mxu0 %v1442
  %1552 = vmatprep.subr.mxu0 %v1441
  %1553 = vmatpush1.msra.mxu0 %v1440
  %1554 = vmatprep.subr.mxu0 %v1439
  %1555 = vmatpush1.msra.mxu0 %v1438
  %1556 = vmatprep.subr.mxu0 0.0
  %1557 = vmatpush2.msra.mxu0 0.0
  %1558 = vmatprep.subr.mxu0 0.0
  %1559 = vmatpush2.msra.mxu0 0.0
  %1560 = vmatprep.subr.mxu0 0.0
  %1561 = vmatpush2.msra.mxu0 0.0
  %1562 = vmatprep.subr.mxu0 0.0
  %1563 = vmatpush2.msra.mxu0 0.0
  %1564 = vmatprep.subr.mxu0 0.0
  %1565 = vmatpush2.msra.mxu0 0.0
  %1566 = vmatprep.subr.mxu0 0.0
  %1567 = vmatpush2.msra.mxu0 0.0
  %1568 = vmatprep.subr.mxu0 0.0
  %1569 = vmatpush2.msra.mxu0 0.0
  %1570 = vmatprep.subr.mxu0 0.0
  %1571 = vmatpush2.msra.mxu0 0.0
  %1572 = vmatprep.subr.mxu0 0.0
  %1573 = vmatpush2.msra.mxu0 0.0
  %1574 = vmatprep.subr.mxu0 0.0
  %1575 = vmatpush2.msra.mxu0 0.0
  %1576 = vmatprep.subr.mxu0 0.0
  %1577 = vmatpush2.msra.mxu0 0.0
  %1578 = vmatprep.subr.mxu0 0.0
  %1579 = vmatpush2.msra.mxu0 0.0
  %1580 = vmatprep.subr.mxu0 0.0
  %1581 = vmatpush2.msra.mxu0 0.0
  %1582 = vmatprep.subr.mxu0 0.0
  %1583 = vmatpush2.msra.mxu0 0.0
  %1584 = vmatprep.subr.mxu0 0.0
  %1585 = vmatpush2.msra.mxu0 0.0
  %1586 = vmatprep.subr.mxu0 0.0
  %1587 = vmatpush2.msra.mxu0 0.0
  %1588 = vmatprep.mubr.f32.mxu0 0.0
  %1589 = vmatmul.mubr.f32.gmra.mxu0 %v1447
  %v1590 = vpop.f32.mrf.mxu0
  %v1591 = vadd.f32 0.0, %v1590
  %v1592 = vpop.f32.mrf.mxu0
  %v1593 = vadd.f32 0.0, %v1592
  %1594 = vmatprep.mubr.f32.mxu0 0.0
  %1595 = vmatmul.mubr.f32.gmra.mxu0 %v1450
  %v1596 = vpop.f32.mrf.mxu0
  %v1597 = vadd.f32 0.0, %v1596
  %v1598 = vpop.f32.mrf.mxu0
  %v1599 = vadd.f32 0.0, %v1598
  %1600 = vmatprep.mubr.f32.mxu0 0.0
  %1601 = vmatmul.mubr.f32.gmra.mxu0 %v1453
  %v1602 = vpop.f32.mrf.mxu0
  %v1603 = vadd.f32 0.0, %v1602
  %v1604 = vpop.f32.mrf.mxu0
  %v1605 = vadd.f32 0.0, %v1604
  %1606 = vmatprep.mubr.f32.mxu0 0.0
  %1607 = vmatmul.mubr.f32.gmra.mxu0 %v1456
  %v1608 = vpop.f32.mrf.mxu0
  %v1609 = vadd.f32 0.0, %v1608
  %v1610 = vpop.f32.mrf.mxu0
  %v1611 = vadd.f32 0.0, %v1610
  %1612 = vmatprep.mubr.f32.mxu0 0.0
  %1613 = vmatmul.mubr.f32.gmra.mxu0 %v1459
  %v1614 = vpop.f32.mrf.mxu0
  %v1615 = vadd.f32 0.0, %v1614
  %v1616 = vpop.f32.mrf.mxu0
  %v1617 = vadd.f32 0.0, %v1616
  %1618 = vmatprep.mubr.f32.mxu0 0.0
  %1619 = vmatmul.mubr.f32.gmra.mxu0 %v1462
  %v1620 = vpop.f32.mrf.mxu0
  %v1621 = vadd.f32 0.0, %v1620
  %v1622 = vpop.f32.mrf.mxu0
  %v1623 = vadd.f32 0.0, %v1622
  %1624 = vmatprep.mubr.f32.mxu0 0.0
  %1625 = vmatmul.mubr.f32.gmra.mxu0 %v1465
  %v1626 = vpop.f32.mrf.mxu0
  %v1627 = vadd.f32 0.0, %v1626
  %v1628 = vpop.f32.mrf.mxu0
  %v1629 = vadd.f32 0.0, %v1628
  %1630 = vmatprep.mubr.f32.mxu0 0.0
  %1631 = vmatmul.mubr.f32.gmra.mxu0 %v1468
  %v1632 = vpop.f32.mrf.mxu0
  %v1633 = vadd.f32 0.0, %v1632
  %v1634 = vpop.f32.mrf.mxu0
  %v1635 = vadd.f32 0.0, %v1634
  %1636 = vmatprep.mubr.f32.mxu0 0.0
  %1637 = vmatmul.mubr.f32.gmra.mxu0 %v1471
  %v1638 = vpop.f32.mrf.mxu0
  %v1639 = vadd.f32 0.0, %v1638
  %v1640 = vpop.f32.mrf.mxu0
  %v1641 = vadd.f32 0.0, %v1640
  %1642 = vmatprep.mubr.f32.mxu0 0.0
  %1643 = vmatmul.mubr.f32.gmra.mxu0 %v1474
  %v1644 = vpop.f32.mrf.mxu0
  %v1645 = vadd.f32 0.0, %v1644
  %v1646 = vpop.f32.mrf.mxu0
  %v1647 = vadd.f32 0.0, %v1646
  %1648 = vmatprep.mubr.f32.mxu0 0.0
  %1649 = vmatmul.mubr.f32.gmra.mxu0 %v1477
  %v1650 = vpop.f32.mrf.mxu0
  %v1651 = vadd.f32 0.0, %v1650
  %v1652 = vpop.f32.mrf.mxu0
  %v1653 = vadd.f32 0.0, %v1652
  %1654 = vmatprep.mubr.f32.mxu0 0.0
  %1655 = vmatmul.mubr.f32.gmra.mxu0 %v1480
  %v1656 = vpop.f32.mrf.mxu0
  %v1657 = vadd.f32 0.0, %v1656
  %v1658 = vpop.f32.mrf.mxu0
  %v1659 = vadd.f32 0.0, %v1658
  %1660 = vmatprep.mubr.f32.mxu0 0.0
  %1661 = vmatmul.mubr.f32.gmra.mxu0 %v1483
  %v1662 = vpop.f32.mrf.mxu0
  %v1663 = vadd.f32 0.0, %v1662
  %v1664 = vpop.f32.mrf.mxu0
  %v1665 = vadd.f32 0.0, %v1664
  %1666 = vmatprep.mubr.f32.mxu0 0.0
  %1667 = vmatmul.mubr.f32.gmra.mxu0 %v1486
  %v1668 = vpop.f32.mrf.mxu0
  %v1669 = vadd.f32 0.0, %v1668
  %v1670 = vpop.f32.mrf.mxu0
  %v1671 = vadd.f32 0.0, %v1670
  %1672 = vmatprep.mubr.f32.mxu0 0.0
  %1673 = vmatmul.mubr.f32.gmra.mxu0 %v1489
  %v1674 = vpop.f32.mrf.mxu0
  %v1675 = vadd.f32 0.0, %v1674
  %v1676 = vpop.f32.mrf.mxu0
  %v1677 = vadd.f32 0.0, %v1676
  %1678 = vmatprep.mubr.f32.mxu0 0.0
  %1679 = vmatmul.mubr.f32.gmra.mxu0 %v1492
  %v1680 = vpop.f32.mrf.mxu0
  %v1681 = vadd.f32 0.0, %v1680
  %v1682 = vpop.f32.mrf.mxu0
  %v1683 = vadd.f32 0.0, %v1682
  %1684 = vmatprep.mubr.f32.mxu0 0.0
  %1685 = vmatmul.mubr.f32.gmra.mxu0 %v1495
  %v1686 = vpop.f32.mrf.mxu0
  %v1687 = vadd.f32 0.0, %v1686
  %v1688 = vpop.f32.mrf.mxu0
  %v1689 = vadd.f32 0.0, %v1688
  %1690 = vmatprep.mubr.f32.mxu0 0.0
  %1691 = vmatmul.mubr.f32.gmra.mxu0 %v1498
  %v1692 = vpop.f32.mrf.mxu0
  %v1693 = vadd.f32 0.0, %v1692
  %v1694 = vpop.f32.mrf.mxu0
  %v1695 = vadd.f32 0.0, %v1694
  %1696 = vmatprep.mubr.f32.mxu0 0.0
  %1697 = vmatmul.mubr.f32.gmra.mxu0 %v1501
  %v1698 = vpop.f32.mrf.mxu0
  %v1699 = vadd.f32 0.0, %v1698
  %v1700 = vpop.f32.mrf.mxu0
  %v1701 = vadd.f32 0.0, %v1700
  %1702 = vmatprep.mubr.f32.mxu0 0.0
  %1703 = vmatmul.mubr.f32.gmra.mxu0 %v1504
  %v1704 = vpop.f32.mrf.mxu0
  %v1705 = vadd.f32 0.0, %v1704
  %v1706 = vpop.f32.mrf.mxu0
  %v1707 = vadd.f32 0.0, %v1706
  %1708 = vmatprep.mubr.f32.mxu0 0.0
  %1709 = vmatmul.mubr.f32.gmra.mxu0 %v1507
  %v1710 = vpop.f32.mrf.mxu0
  %v1711 = vadd.f32 0.0, %v1710
  %v1712 = vpop.f32.mrf.mxu0
  %v1713 = vadd.f32 0.0, %v1712
  %1714 = vmatprep.mubr.f32.mxu0 0.0
  %1715 = vmatmul.mubr.f32.gmra.mxu0 %v1510
  %v1716 = vpop.f32.mrf.mxu0
  %v1717 = vadd.f32 0.0, %v1716
  %v1718 = vpop.f32.mrf.mxu0
  %v1719 = vadd.f32 0.0, %v1718
  %1720 = vmatprep.mubr.f32.mxu0 0.0
  %1721 = vmatmul.mubr.f32.gmra.mxu0 %v1513
  %v1722 = vpop.f32.mrf.mxu0
  %v1723 = vadd.f32 0.0, %v1722
  %v1724 = vpop.f32.mrf.mxu0
  %v1725 = vadd.f32 0.0, %v1724
  %1726 = vmatprep.mubr.f32.mxu0 0.0
  %1727 = vmatmul.mubr.f32.gmra.mxu0 %v1516
  %v1728 = vpop.f32.mrf.mxu0
  %v1729 = vadd.f32 0.0, %v1728
  %v1730 = vpop.f32.mrf.mxu0
  %v1731 = vadd.f32 0.0, %v1730
  %1732 = vdwg.mxu0
  %v1733 = vadd.f32 %v1364, %v1591
  %v1734 = vadd.f32 %v1365, %v1593
  %v1735 = vadd.f32 %v1366, %v1597
  %v1736 = vadd.f32 %v1367, %v1599
  %v1737 = vadd.f32 %v1368, %v1603
  %v1738 = vadd.f32 %v1369, %v1605
  %v1739 = vadd.f32 %v1370, %v1609
  %v1740 = vadd.f32 %v1371, %v1611
  %v1741 = vadd.f32 %v1372, %v1615
  %v1742 = vadd.f32 %v1373, %v1617
  %v1743 = vadd.f32 %v1374, %v1621
  %v1744 = vadd.f32 %v1375, %v1623
  %v1745 = vadd.f32 %v1376, %v1627
  %v1746 = vadd.f32 %v1377, %v1629
  %v1747 = vadd.f32 %v1378, %v1633
  %v1748 = vadd.f32 %v1379, %v1635
  %v1749 = vadd.f32 %v1380, %v1639
  %v1750 = vadd.f32 %v1381, %v1641
  %v1751 = vadd.f32 %v1382, %v1645
  %v1752 = vadd.f32 %v1383, %v1647
  %v1753 = vadd.f32 %v1384, %v1651
  %v1754 = vadd.f32 %v1385, %v1653
  %v1755 = vadd.f32 %v1386, %v1657
  %v1756 = vadd.f32 %v1387, %v1659
  %v1757 = vadd.f32 %v1388, %v1663
  %v1758 = vadd.f32 %v1389, %v1665
  %v1759 = vadd.f32 %v1390, %v1669
  %v1760 = vadd.f32 %v1391, %v1671
  %v1761 = vadd.f32 %v1392, %v1675
  %v1762 = vadd.f32 %v1393, %v1677
  %v1763 = vadd.f32 %v1394, %v1681
  %v1764 = vadd.f32 %v1395, %v1683
  %v1765 = vadd.f32 %v1396, %v1687
  %v1766 = vadd.f32 %v1397, %v1689
  %v1767 = vadd.f32 %v1398, %v1693
  %v1768 = vadd.f32 %v1399, %v1695
  %v1769 = vadd.f32 %v1400, %v1699
  %v1770 = vadd.f32 %v1401, %v1701
  %v1771 = vadd.f32 %v1402, %v1705
  %v1772 = vadd.f32 %v1403, %v1707
  %v1773 = vadd.f32 %v1404, %v1711
  %v1774 = vadd.f32 %v1405, %v1713
  %v1775 = vadd.f32 %v1406, %v1717
  %v1776 = vadd.f32 %v1407, %v1719
  %v1777 = vadd.f32 %v1408, %v1723
  %v1778 = vadd.f32 %v1409, %v1725
  %v1779 = vadd.f32 %v1410, %v1729
  %v1780 = vadd.f32 %v1411, %v1731
  %v1781 = vld [vmem:[%s2] sm:$0x3]
  %v1783 = vlaneseq
  %v1784 = vshrl.u32 %v1783, 7
  %v1785 = vsub.s32 0, %v1784
  %v1786 = vrot.slane %v1781, %v1785
  %v1787 = vlaneseq
  %v1788 = vshrl.u32 %v1787, 7
  %v1789 = vsub.s32 1, %v1788
  %v1790 = vrot.slane %v1781, %v1789
  %v1793 = vadd.f32 %v1733, %v1786
  %v1794 = vadd.f32 %v1734, %v1790
  %v1795 = vadd.f32 %v1735, %v1786
  %v1796 = vadd.f32 %v1736, %v1790
  %v1797 = vadd.f32 %v1737, %v1786
  %v1798 = vadd.f32 %v1738, %v1790
  %v1799 = vadd.f32 %v1739, %v1786
  %v1800 = vadd.f32 %v1740, %v1790
  %v1801 = vadd.f32 %v1741, %v1786
  %v1802 = vadd.f32 %v1742, %v1790
  %v1803 = vadd.f32 %v1743, %v1786
  %v1804 = vadd.f32 %v1744, %v1790
  %v1805 = vadd.f32 %v1745, %v1786
  %v1806 = vadd.f32 %v1746, %v1790
  %v1807 = vadd.f32 %v1747, %v1786
  %v1808 = vadd.f32 %v1748, %v1790
  %v1809 = vadd.f32 %v1749, %v1786
  %v1810 = vadd.f32 %v1750, %v1790
  %v1811 = vadd.f32 %v1751, %v1786
  %v1812 = vadd.f32 %v1752, %v1790
  %v1813 = vadd.f32 %v1753, %v1786
  %v1814 = vadd.f32 %v1754, %v1790
  %v1815 = vadd.f32 %v1755, %v1786
  %v1816 = vadd.f32 %v1756, %v1790
  %v1817 = vadd.f32 %v1757, %v1786
  %v1818 = vadd.f32 %v1758, %v1790
  %v1819 = vadd.f32 %v1759, %v1786
  %v1820 = vadd.f32 %v1760, %v1790
  %v1821 = vadd.f32 %v1761, %v1786
  %v1822 = vadd.f32 %v1762, %v1790
  %v1823 = vadd.f32 %v1763, %v1786
  %v1824 = vadd.f32 %v1764, %v1790
  %v1825 = vadd.f32 %v1765, %v1786
  %v1826 = vadd.f32 %v1766, %v1790
  %v1827 = vadd.f32 %v1767, %v1786
  %v1828 = vadd.f32 %v1768, %v1790
  %v1829 = vadd.f32 %v1769, %v1786
  %v1830 = vadd.f32 %v1770, %v1790
  %v1831 = vadd.f32 %v1771, %v1786
  %v1832 = vadd.f32 %v1772, %v1790
  %v1833 = vadd.f32 %v1773, %v1786
  %v1834 = vadd.f32 %v1774, %v1790
  %v1835 = vadd.f32 %v1775, %v1786
  %v1836 = vadd.f32 %v1776, %v1790
  %v1837 = vadd.f32 %v1777, %v1786
  %v1838 = vadd.f32 %v1778, %v1790
  %v1839 = vadd.f32 %v1779, %v1786
  %v1840 = vadd.f32 %v1780, %v1790
  %v1841 = vmax.f32 %v1793, %v1795
  %v1842 = vmax.f32 %v1794, %v1796
  %v1843 = vmax.f32 %v1797, %v1799
  %v1844 = vmax.f32 %v1798, %v1800
  %v1845 = vmax.f32 %v1801, %v1803
  %v1846 = vmax.f32 %v1802, %v1804
  %v1847 = vmax.f32 %v1805, %v1807
  %v1848 = vmax.f32 %v1806, %v1808
  %v1849 = vmax.f32 %v1809, %v1811
  %v1850 = vmax.f32 %v1810, %v1812
  %v1851 = vmax.f32 %v1813, %v1815
  %v1852 = vmax.f32 %v1814, %v1816
  %v1853 = vmax.f32 %v1817, %v1819
  %v1854 = vmax.f32 %v1818, %v1820
  %v1855 = vmax.f32 %v1821, %v1823
  %v1856 = vmax.f32 %v1822, %v1824
  %v1857 = vmax.f32 %v1825, %v1827
  %v1858 = vmax.f32 %v1826, %v1828
  %v1859 = vmax.f32 %v1829, %v1831
  %v1860 = vmax.f32 %v1830, %v1832
  %v1861 = vmax.f32 %v1833, %v1835
  %v1862 = vmax.f32 %v1834, %v1836
  %v1863 = vmax.f32 %v1837, %v1839
  %v1864 = vmax.f32 %v1838, %v1840
  %1889 = vrot.lane.b32.xlu0 %v1841, 118
  %v1890 = vpop.permute.xlu0 %1889
  %1891 = vrot.lane.b32.xlu0 %v1842, 118
  %v1892 = vpop.permute.xlu0 %1891
  %1893 = vrot.lane.b32.xlu0 %v1843, 118
  %v1894 = vpop.permute.xlu0 %1893
  %1895 = vrot.lane.b32.xlu0 %v1844, 118
  %v1896 = vpop.permute.xlu0 %1895
  %1897 = vrot.lane.b32.xlu0 %v1845, 118
  %v1898 = vpop.permute.xlu0 %1897
  %1899 = vrot.lane.b32.xlu0 %v1846, 118
  %v1900 = vpop.permute.xlu0 %1899
  %1901 = vrot.lane.b32.xlu0 %v1847, 118
  %v1902 = vpop.permute.xlu0 %1901
  %1903 = vrot.lane.b32.xlu0 %v1848, 118
  %v1904 = vpop.permute.xlu0 %1903
  %1905 = vrot.lane.b32.xlu0 %v1849, 118
  %v1906 = vpop.permute.xlu0 %1905
  %1907 = vrot.lane.b32.xlu0 %v1850, 118
  %v1908 = vpop.permute.xlu0 %1907
  %1909 = vrot.lane.b32.xlu0 %v1851, 118
  %v1910 = vpop.permute.xlu0 %1909
  %1911 = vrot.lane.b32.xlu0 %v1852, 118
  %v1912 = vpop.permute.xlu0 %1911
  %1913 = vrot.lane.b32.xlu0 %v1853, 118
  %v1914 = vpop.permute.xlu0 %1913
  %1915 = vrot.lane.b32.xlu0 %v1854, 118
  %v1916 = vpop.permute.xlu0 %1915
  %1917 = vrot.lane.b32.xlu0 %v1855, 118
  %v1918 = vpop.permute.xlu0 %1917
  %1919 = vrot.lane.b32.xlu0 %v1856, 118
  %v1920 = vpop.permute.xlu0 %1919
  %1921 = vrot.lane.b32.xlu0 %v1857, 118
  %v1922 = vpop.permute.xlu0 %1921
  %1923 = vrot.lane.b32.xlu0 %v1858, 118
  %v1924 = vpop.permute.xlu0 %1923
  %1925 = vrot.lane.b32.xlu0 %v1859, 118
  %v1926 = vpop.permute.xlu0 %1925
  %1927 = vrot.lane.b32.xlu0 %v1860, 118
  %v1928 = vpop.permute.xlu0 %1927
  %1929 = vrot.lane.b32.xlu0 %v1861, 118
  %v1930 = vpop.permute.xlu0 %1929
  %1931 = vrot.lane.b32.xlu0 %v1862, 118
  %v1932 = vpop.permute.xlu0 %1931
  %1933 = vrot.lane.b32.xlu0 %v1863, 118
  %v1934 = vpop.permute.xlu0 %1933
  %1935 = vrot.lane.b32.xlu0 %v1864, 118
  %v1936 = vpop.permute.xlu0 %1935
  %vm1937 = vcmask 965632
  %v1938 = vsel %vm1937, %v1890, %v1892
  %v1939 = vsel %vm1937, %v1894, %v1896
  %v1940 = vsel %vm1937, %v1898, %v1900
  %v1941 = vsel %vm1937, %v1902, %v1904
  %v1942 = vsel %vm1937, %v1906, %v1908
  %v1943 = vsel %vm1937, %v1910, %v1912
  %v1944 = vsel %vm1937, %v1914, %v1916
  %v1945 = vsel %vm1937, %v1918, %v1920
  %v1946 = vsel %vm1937, %v1922, %v1924
  %v1947 = vsel %vm1937, %v1926, %v1928
  %v1948 = vsel %vm1937, %v1930, %v1932
  %v1949 = vsel %vm1937, %v1934, %v1936
  %v1974 = vmax.f32 %v1841, %v1938
  %v1975 = vmax.f32 %v1842, %v1892
  %v1976 = vmax.f32 %v1843, %v1939
  %v1977 = vmax.f32 %v1844, %v1896
  %v1978 = vmax.f32 %v1845, %v1940
  %v1979 = vmax.f32 %v1846, %v1900
  %v1980 = vmax.f32 %v1847, %v1941
  %v1981 = vmax.f32 %v1848, %v1904
  %v1982 = vmax.f32 %v1849, %v1942
  %v1983 = vmax.f32 %v1850, %v1908
  %v1984 = vmax.f32 %v1851, %v1943
  %v1985 = vmax.f32 %v1852, %v1912
  %v1986 = vmax.f32 %v1853, %v1944
  %v1987 = vmax.f32 %v1854, %v1916
  %v1988 = vmax.f32 %v1855, %v1945
  %v1989 = vmax.f32 %v1856, %v1920
  %v1990 = vmax.f32 %v1857, %v1946
  %v1991 = vmax.f32 %v1858, %v1924
  %v1992 = vmax.f32 %v1859, %v1947
  %v1993 = vmax.f32 %v1860, %v1928
  %v1994 = vmax.f32 %v1861, %v1948
  %v1995 = vmax.f32 %v1862, %v1932
  %v1996 = vmax.f32 %v1863, %v1949
  %v1997 = vmax.f32 %v1864, %v1936
  %v1998 = vmax.f32 %v1974, 0.0
  %v1999 = vmax.f32 %v1975, 0.0
  %v2000 = vmax.f32 %v1976, 0.0
  %v2001 = vmax.f32 %v1977, 0.0
  %v2002 = vmax.f32 %v1978, 0.0
  %v2003 = vmax.f32 %v1979, 0.0
  %v2004 = vmax.f32 %v1980, 0.0
  %v2005 = vmax.f32 %v1981, 0.0
  %v2006 = vmax.f32 %v1982, 0.0
  %v2007 = vmax.f32 %v1983, 0.0
  %v2008 = vmax.f32 %v1984, 0.0
  %v2009 = vmax.f32 %v1985, 0.0
  %v2010 = vmax.f32 %v1986, 0.0
  %v2011 = vmax.f32 %v1987, 0.0
  %v2012 = vmax.f32 %v1988, 0.0
  %v2013 = vmax.f32 %v1989, 0.0
  %v2014 = vmax.f32 %v1990, 0.0
  %v2015 = vmax.f32 %v1991, 0.0
  %v2016 = vmax.f32 %v1992, 0.0
  %v2017 = vmax.f32 %v1993, 0.0
  %v2018 = vmax.f32 %v1994, 0.0
  %v2019 = vmax.f32 %v1995, 0.0
  %v2020 = vmax.f32 %v1996, 0.0
  %v2021 = vmax.f32 %v1997, 0.0
  %v2022 = vld [vmem:[%s3] sm:$0xff]
  %v2023 = vld [vmem:[%s3 + $0x8] sm:$0xff]
  %v2024 = vld [vmem:[%s3 + $0x10] sm:$0xff]
  %v2025 = vld [vmem:[%s3 + $0x18] sm:$0xff]
  %v2026 = vld [vmem:[%s3 + $0x20] sm:$0xff]
  %v2027 = vld [vmem:[%s3 + $0x28] sm:$0xff]
  %v2028 = vld [vmem:[%s3 + $0x30] sm:$0xff]
  %v2029 = vld [vmem:[%s3 + $0x38] sm:$0xff]
  %v2030 = vld [vmem:[%s3 + $0x40] sm:$0xff]
  %v2031 = vld [vmem:[%s3 + $0x48] sm:$0xff]
  %v2032 = vld [vmem:[%s3 + $0x50] sm:$0xff]
  %v2033 = vld [vmem:[%s3 + $0x58] sm:$0xff]
  %v2034 = vld [vmem:[%s3 + $0x60] sm:$0xff]
  %v2035 = vld [vmem:[%s3 + $0x68] sm:$0xff]
  %v2036 = vld [vmem:[%s3 + $0x70] sm:$0xff]
  %v2037 = vld [vmem:[%s3 + $0x78] sm:$0xff]
  %v2038 = vld [vmem:[%s3 + $0x80] sm:$0xff]
  %v2039 = vld [vmem:[%s3 + $0x88] sm:$0xff]
  %v2040 = vld [vmem:[%s3 + $0x90] sm:$0xff]
  %v2041 = vld [vmem:[%s3 + $0x98] sm:$0xff]
  %v2042 = vld [vmem:[%s3 + $0xa0] sm:$0xff]
  %v2043 = vld [vmem:[%s3 + $0xa8] sm:$0xff]
  %v2044 = vld [vmem:[%s3 + $0xb0] sm:$0xff]
  %v2045 = vld [vmem:[%s3 + $0xb8] sm:$0xff]
  %v2046 = vld [vmem:[%s3 + $0xc0] sm:$0xff]
  %v2047 = vld [vmem:[%s3 + $0xc8] sm:$0xff]
  %v2048 = vld [vmem:[%s3 + $0xd0] sm:$0xff]
  %v2049 = vld [vmem:[%s3 + $0xd8] sm:$0xff]
  %v2050 = vld [vmem:[%s3 + $0xe0] sm:$0xff]
  %v2051 = vld [vmem:[%s3 + $0xe8] sm:$0xff]
  %v2052 = vld [vmem:[%s3 + $0xf0] sm:$0xff]
  %v2053 = vld [vmem:[%s3 + $0xf8] sm:$0xff]
  %v2054 = vld [vmem:[%s3 + $0x100] sm:$0xff]
  %v2055 = vld [vmem:[%s3 + $0x108] sm:$0xff]
  %v2056 = vld [vmem:[%s3 + $0x110] sm:$0xff]
  %v2057 = vld [vmem:[%s3 + $0x118] sm:$0xff]
  %v2058 = vld [vmem:[%s3 + $0x120] sm:$0xff]
  %v2059 = vld [vmem:[%s3 + $0x128] sm:$0xff]
  %v2060 = vld [vmem:[%s3 + $0x130] sm:$0xff]
  %v2061 = vld [vmem:[%s3 + $0x138] sm:$0xff]
  %v2062 = vld [vmem:[%s3 + $0x140] sm:$0xff]
  %v2063 = vld [vmem:[%s3 + $0x148] sm:$0xff]
  %v2064 = vld [vmem:[%s3 + $0x150] sm:$0xff]
  %v2065 = vld [vmem:[%s3 + $0x158] sm:$0xff]
  %v2066 = vld [vmem:[%s3 + $0x160] sm:$0xff]
  %v2067 = vld [vmem:[%s3 + $0x168] sm:$0xff]
  %v2068 = vld [vmem:[%s3 + $0x170] sm:$0xff]
  %v2069 = vld [vmem:[%s3 + $0x178] sm:$0xff]
  %v2070 = vld [vmem:[%s3 + $0x180] sm:$0xff]
  %v2071 = vld [vmem:[%s3 + $0x188] sm:$0xff]
  %v2072 = vld [vmem:[%s3 + $0x190] sm:$0xff]
  %v2073 = vld [vmem:[%s3 + $0x198] sm:$0xff]
  %v2074 = vld [vmem:[%s3 + $0x1a0] sm:$0xff]
  %v2075 = vld [vmem:[%s3 + $0x1a8] sm:$0xff]
  %v2076 = vld [vmem:[%s3 + $0x1b0] sm:$0xff]
  %v2077 = vld [vmem:[%s3 + $0x1b8] sm:$0xff]
  %v2078 = vld [vmem:[%s3 + $0x1c0] sm:$0x3f]
  %v2079 = vld [vmem:[%s3 + $0x1c8] sm:$0x3f]
  %s2080 = scalar_lea.vmem %s3, 464
  %v2081 = vld [vmem:[%s2080] sm:$0xff]
  %v2082 = vld [vmem:[%s2080 + $0x8] sm:$0xff]
  %v2083 = vld [vmem:[%s2080 + $0x10] sm:$0xff]
  %v2084 = vld [vmem:[%s2080 + $0x18] sm:$0xff]
  %v2085 = vld [vmem:[%s2080 + $0x20] sm:$0xff]
  %v2086 = vld [vmem:[%s2080 + $0x28] sm:$0xff]
  %v2087 = vld [vmem:[%s2080 + $0x30] sm:$0xff]
  %v2088 = vld [vmem:[%s2080 + $0x38] sm:$0xff]
  %v2089 = vld [vmem:[%s2080 + $0x40] sm:$0xff]
  %v2090 = vld [vmem:[%s2080 + $0x48] sm:$0xff]
  %v2091 = vld [vmem:[%s2080 + $0x50] sm:$0xff]
  %v2092 = vld [vmem:[%s2080 + $0x58] sm:$0xff]
  %v2093 = vld [vmem:[%s2080 + $0x60] sm:$0xff]
  %v2094 = vld [vmem:[%s2080 + $0x68] sm:$0xff]
  %v2095 = vld [vmem:[%s2080 + $0x70] sm:$0xff]
  %v2096 = vld [vmem:[%s2080 + $0x78] sm:$0xff]
  %v2097 = vld [vmem:[%s2080 + $0x80] sm:$0xff]
  %v2098 = vld [vmem:[%s2080 + $0x88] sm:$0xff]
  %v2099 = vld [vmem:[%s2080 + $0x90] sm:$0xff]
  %v2100 = vld [vmem:[%s2080 + $0x98] sm:$0xff]
  %v2101 = vld [vmem:[%s2080 + $0xa0] sm:$0xff]
  %v2102 = vld [vmem:[%s2080 + $0xa8] sm:$0xff]
  %v2103 = vld [vmem:[%s2080 + $0xb0] sm:$0xff]
  %v2104 = vld [vmem:[%s2080 + $0xb8] sm:$0xff]
  %v2105 = vld [vmem:[%s2080 + $0xc0] sm:$0xff]
  %v2106 = vld [vmem:[%s2080 + $0xc8] sm:$0xff]
  %v2107 = vld [vmem:[%s2080 + $0xd0] sm:$0xff]
  %v2108 = vld [vmem:[%s2080 + $0xd8] sm:$0xff]
  %v2109 = vld [vmem:[%s2080 + $0xe0] sm:$0xff]
  %v2110 = vld [vmem:[%s2080 + $0xe8] sm:$0xff]
  %v2111 = vld [vmem:[%s2080 + $0xf0] sm:$0xff]
  %v2112 = vld [vmem:[%s2080 + $0xf8] sm:$0xff]
  %v2113 = vld [vmem:[%s2080 + $0x100] sm:$0xff]
  %v2114 = vld [vmem:[%s2080 + $0x108] sm:$0xff]
  %v2115 = vld [vmem:[%s2080 + $0x110] sm:$0xff]
  %v2116 = vld [vmem:[%s2080 + $0x118] sm:$0xff]
  %v2117 = vld [vmem:[%s2080 + $0x120] sm:$0xff]
  %v2118 = vld [vmem:[%s2080 + $0x128] sm:$0xff]
  %v2119 = vld [vmem:[%s2080 + $0x130] sm:$0xff]
  %v2120 = vld [vmem:[%s2080 + $0x138] sm:$0xff]
  %v2121 = vld [vmem:[%s2080 + $0x140] sm:$0xff]
  %v2122 = vld [vmem:[%s2080 + $0x148] sm:$0xff]
  %v2123 = vld [vmem:[%s2080 + $0x150] sm:$0xff]
  %v2124 = vld [vmem:[%s2080 + $0x158] sm:$0xff]
  %v2125 = vld [vmem:[%s2080 + $0x160] sm:$0xff]
  %v2126 = vld [vmem:[%s2080 + $0x168] sm:$0xff]
  %v2127 = vld [vmem:[%s2080 + $0x170] sm:$0xff]
  %v2128 = vld [vmem:[%s2080 + $0x178] sm:$0xff]
  %v2129 = vld [vmem:[%s2080 + $0x180] sm:$0xff]
  %v2130 = vld [vmem:[%s2080 + $0x188] sm:$0xff]
  %v2131 = vld [vmem:[%s2080 + $0x190] sm:$0xff]
  %v2132 = vld [vmem:[%s2080 + $0x198] sm:$0xff]
  %v2133 = vld [vmem:[%s2080 + $0x1a0] sm:$0xff]
  %v2134 = vld [vmem:[%s2080 + $0x1a8] sm:$0xff]
  %v2135 = vld [vmem:[%s2080 + $0x1b0] sm:$0xff]
  %v2136 = vld [vmem:[%s2080 + $0x1b8] sm:$0xff]
  %v2137 = vld [vmem:[%s2080 + $0x1c0] sm:$0x3f]
  %v2138 = vld [vmem:[%s2080 + $0x1c8] sm:$0x3f]
  %vm2139 = vcmask 834560
  %v2141 = vsel %vm2139, %v2001, 0
  %v2144 = vsel %vm2139, %v2003, 0
  %v2147 = vsel %vm2139, %v2005, 0
  %v2150 = vsel %vm2139, %v2007, 0
  %v2153 = vsel %vm2139, %v2009, 0
  %v2156 = vsel %vm2139, %v2011, 0
  %v2159 = vsel %vm2139, %v2013, 0
  %v2162 = vsel %vm2139, %v2015, 0
  %vm2164 = vcmask 1045504
  %v2166 = vsel %vm2164, %v2137, 0
  %v2169 = vsel %vm2164, %v2138, 0
  %2171 = vmatprep.subr.mxu0 %v2112
  %2172 = vmatpush1.msra.mxu0 %v2111
  %2173 = vmatprep.subr.mxu0 %v2110
  %2174 = vmatpush1.msra.mxu0 %v2109
  %2175 = vmatprep.subr.mxu0 %v2108
  %2176 = vmatpush1.msra.mxu0 %v2107
  %2177 = vmatprep.subr.mxu0 %v2106
  %2178 = vmatpush1.msra.mxu0 %v2105
  %2179 = vmatprep.subr.mxu0 %v2104
  %2180 = vmatpush1.msra.mxu0 %v2103
  %2181 = vmatprep.subr.mxu0 %v2102
  %2182 = vmatpush1.msra.mxu0 %v2101
  %2183 = vmatprep.subr.mxu0 %v2100
  %2184 = vmatpush1.msra.mxu0 %v2099
  %2185 = vmatprep.subr.mxu0 %v2098
  %2186 = vmatpush1.msra.mxu0 %v2097
  %2187 = vmatprep.subr.mxu0 %v2096
  %2188 = vmatpush1.msra.mxu0 %v2095
  %2189 = vmatprep.subr.mxu0 %v2094
  %2190 = vmatpush1.msra.mxu0 %v2093
  %2191 = vmatprep.subr.mxu0 %v2092
  %2192 = vmatpush1.msra.mxu0 %v2091
  %2193 = vmatprep.subr.mxu0 %v2090
  %2194 = vmatpush1.msra.mxu0 %v2089
  %2195 = vmatprep.subr.mxu0 %v2088
  %2196 = vmatpush1.msra.mxu0 %v2087
  %2197 = vmatprep.subr.mxu0 %v2086
  %2198 = vmatpush1.msra.mxu0 %v2085
  %2199 = vmatprep.subr.mxu0 %v2084
  %2200 = vmatpush1.msra.mxu0 %v2083
  %2201 = vmatprep.subr.mxu0 %v2082
  %2202 = vmatpush1.msra.mxu0 %v2081
  %2203 = vmatprep.subr.mxu0 0.0
  %2204 = vmatpush2.msra.mxu0 0.0
  %2205 = vmatprep.subr.mxu0 0.0
  %2206 = vmatpush2.msra.mxu0 0.0
  %2207 = vmatprep.subr.mxu0 0.0
  %2208 = vmatpush2.msra.mxu0 0.0
  %2209 = vmatprep.subr.mxu0 %v2169
  %2210 = vmatpush2.msra.mxu0 %v2166
  %2211 = vmatprep.subr.mxu0 %v2136
  %2212 = vmatpush2.msra.mxu0 %v2135
  %2213 = vmatprep.subr.mxu0 %v2134
  %2214 = vmatpush2.msra.mxu0 %v2133
  %2215 = vmatprep.subr.mxu0 %v2132
  %2216 = vmatpush2.msra.mxu0 %v2131
  %2217 = vmatprep.subr.mxu0 %v2130
  %2218 = vmatpush2.msra.mxu0 %v2129
  %2219 = vmatprep.subr.mxu0 %v2128
  %2220 = vmatpush2.msra.mxu0 %v2127
  %2221 = vmatprep.subr.mxu0 %v2126
  %2222 = vmatpush2.msra.mxu0 %v2125
  %2223 = vmatprep.subr.mxu0 %v2124
  %2224 = vmatpush2.msra.mxu0 %v2123
  %2225 = vmatprep.subr.mxu0 %v2122
  %2226 = vmatpush2.msra.mxu0 %v2121
  %2227 = vmatprep.subr.mxu0 %v2120
  %2228 = vmatpush2.msra.mxu0 %v2119
  %2229 = vmatprep.subr.mxu0 %v2118
  %2230 = vmatpush2.msra.mxu0 %v2117
  %2231 = vmatprep.subr.mxu0 %v2116
  %2232 = vmatpush2.msra.mxu0 %v2115
  %2233 = vmatprep.subr.mxu0 %v2114
  %2234 = vmatpush2.msra.mxu0 %v2113
  %2235 = vmatprep.mubr.f32.mxu0 %v2141
  %2236 = vmatmul.mubr.f32.gmra.mxu0 %v2000
  %v2237 = vpop.f32.mrf.mxu0
  %v2238 = vadd.f32 0.0, %v2237
  %v2239 = vpop.f32.mrf.mxu0
  %v2240 = vadd.f32 0.0, %v2239
  %2241 = vmatprep.mubr.f32.mxu0 %v2144
  %2242 = vmatmul.mubr.f32.gmra.mxu0 %v2002
  %v2243 = vpop.f32.mrf.mxu0
  %v2244 = vadd.f32 0.0, %v2243
  %v2245 = vpop.f32.mrf.mxu0
  %v2246 = vadd.f32 0.0, %v2245
  %2247 = vmatprep.mubr.f32.mxu0 %v2147
  %2248 = vmatmul.mubr.f32.gmra.mxu0 %v2004
  %v2249 = vpop.f32.mrf.mxu0
  %v2250 = vadd.f32 0.0, %v2249
  %v2251 = vpop.f32.mrf.mxu0
  %v2252 = vadd.f32 0.0, %v2251
  %2253 = vmatprep.mubr.f32.mxu0 %v2150
  %2254 = vmatmul.mubr.f32.gmra.mxu0 %v2006
  %v2255 = vpop.f32.mrf.mxu0
  %v2256 = vadd.f32 0.0, %v2255
  %v2257 = vpop.f32.mrf.mxu0
  %v2258 = vadd.f32 0.0, %v2257
  %2259 = vmatprep.mubr.f32.mxu0 %v2153
  %2260 = vmatmul.mubr.f32.gmra.mxu0 %v2008
  %v2261 = vpop.f32.mrf.mxu0
  %v2262 = vadd.f32 0.0, %v2261
  %v2263 = vpop.f32.mrf.mxu0
  %v2264 = vadd.f32 0.0, %v2263
  %2265 = vmatprep.mubr.f32.mxu0 %v2156
  %2266 = vmatmul.mubr.f32.gmra.mxu0 %v2010
  %v2267 = vpop.f32.mrf.mxu0
  %v2268 = vadd.f32 0.0, %v2267
  %v2269 = vpop.f32.mrf.mxu0
  %v2270 = vadd.f32 0.0, %v2269
  %2271 = vmatprep.mubr.f32.mxu0 %v2159
  %2272 = vmatmul.mubr.f32.gmra.mxu0 %v2012
  %v2273 = vpop.f32.mrf.mxu0
  %v2274 = vadd.f32 0.0, %v2273
  %v2275 = vpop.f32.mrf.mxu0
  %v2276 = vadd.f32 0.0, %v2275
  %2277 = vmatprep.mubr.f32.mxu0 %v2162
  %2278 = vmatmul.mubr.f32.gmra.mxu0 %v2014
  %v2279 = vpop.f32.mrf.mxu0
  %v2280 = vadd.f32 0.0, %v2279
  %v2281 = vpop.f32.mrf.mxu0
  %v2282 = vadd.f32 0.0, %v2281
  %2283 = vdwg.mxu0
  %v2285 = vsel %vm2139, %v1999, 0
  %v2288 = vsel %vm2164, %v2078, 0
  %v2291 = vsel %vm2164, %v2079, 0
  %2293 = vmatprep.subr.mxu0 %v2053
  %2294 = vmatpush1.msra.mxu0 %v2052
  %2295 = vmatprep.subr.mxu0 %v2051
  %2296 = vmatpush1.msra.mxu0 %v2050
  %2297 = vmatprep.subr.mxu0 %v2049
  %2298 = vmatpush1.msra.mxu0 %v2048
  %2299 = vmatprep.subr.mxu0 %v2047
  %2300 = vmatpush1.msra.mxu0 %v2046
  %2301 = vmatprep.subr.mxu0 %v2045
  %2302 = vmatpush1.msra.mxu0 %v2044
  %2303 = vmatprep.subr.mxu0 %v2043
  %2304 = vmatpush1.msra.mxu0 %v2042
  %2305 = vmatprep.subr.mxu0 %v2041
  %2306 = vmatpush1.msra.mxu0 %v2040
  %2307 = vmatprep.subr.mxu0 %v2039
  %2308 = vmatpush1.msra.mxu0 %v2038
  %2309 = vmatprep.subr.mxu0 %v2037
  %2310 = vmatpush1.msra.mxu0 %v2036
  %2311 = vmatprep.subr.mxu0 %v2035
  %2312 = vmatpush1.msra.mxu0 %v2034
  %2313 = vmatprep.subr.mxu0 %v2033
  %2314 = vmatpush1.msra.mxu0 %v2032
  %2315 = vmatprep.subr.mxu0 %v2031
  %2316 = vmatpush1.msra.mxu0 %v2030
  %2317 = vmatprep.subr.mxu0 %v2029
  %2318 = vmatpush1.msra.mxu0 %v2028
  %2319 = vmatprep.subr.mxu0 %v2027
  %2320 = vmatpush1.msra.mxu0 %v2026
  %2321 = vmatprep.subr.mxu0 %v2025
  %2322 = vmatpush1.msra.mxu0 %v2024
  %2323 = vmatprep.subr.mxu0 %v2023
  %2324 = vmatpush1.msra.mxu0 %v2022
  %2325 = vmatprep.subr.mxu0 0.0
  %2326 = vmatpush2.msra.mxu0 0.0
  %2327 = vmatprep.subr.mxu0 0.0
  %2328 = vmatpush2.msra.mxu0 0.0
  %2329 = vmatprep.subr.mxu0 0.0
  %2330 = vmatpush2.msra.mxu0 0.0
  %2331 = vmatprep.subr.mxu0 %v2291
  %2332 = vmatpush2.msra.mxu0 %v2288
  %2333 = vmatprep.subr.mxu0 %v2077
  %2334 = vmatpush2.msra.mxu0 %v2076
  %2335 = vmatprep.subr.mxu0 %v2075
  %2336 = vmatpush2.msra.mxu0 %v2074
  %2337 = vmatprep.subr.mxu0 %v2073
  %2338 = vmatpush2.msra.mxu0 %v2072
  %2339 = vmatprep.subr.mxu0 %v2071
  %2340 = vmatpush2.msra.mxu0 %v2070
  %2341 = vmatprep.subr.mxu0 %v2069
  %2342 = vmatpush2.msra.mxu0 %v2068
  %2343 = vmatprep.subr.mxu0 %v2067
  %2344 = vmatpush2.msra.mxu0 %v2066
  %2345 = vmatprep.subr.mxu0 %v2065
  %2346 = vmatpush2.msra.mxu0 %v2064
  %2347 = vmatprep.subr.mxu0 %v2063
  %2348 = vmatpush2.msra.mxu0 %v2062
  %2349 = vmatprep.subr.mxu0 %v2061
  %2350 = vmatpush2.msra.mxu0 %v2060
  %2351 = vmatprep.subr.mxu0 %v2059
  %2352 = vmatpush2.msra.mxu0 %v2058
  %2353 = vmatprep.subr.mxu0 %v2057
  %2354 = vmatpush2.msra.mxu0 %v2056
  %2355 = vmatprep.subr.mxu0 %v2055
  %2356 = vmatpush2.msra.mxu0 %v2054
  %2357 = vmatprep.mubr.f32.mxu0 %v2285
  %2358 = vmatmul.mubr.f32.gmra.mxu0 %v1998
  %v2359 = vpop.f32.mrf.mxu0
  %v2360 = vadd.f32 %v2238, %v2359
  %v2361 = vpop.f32.mrf.mxu0
  %v2362 = vadd.f32 %v2240, %v2361
  %2363 = vmatprep.mubr.f32.mxu0 %v2141
  %2364 = vmatmul.mubr.f32.gmra.mxu0 %v2000
  %v2365 = vpop.f32.mrf.mxu0
  %v2366 = vadd.f32 %v2244, %v2365
  %v2367 = vpop.f32.mrf.mxu0
  %v2368 = vadd.f32 %v2246, %v2367
  %2369 = vmatprep.mubr.f32.mxu0 %v2144
  %2370 = vmatmul.mubr.f32.gmra.mxu0 %v2002
  %v2371 = vpop.f32.mrf.mxu0
  %v2372 = vadd.f32 %v2250, %v2371
  %v2373 = vpop.f32.mrf.mxu0
  %v2374 = vadd.f32 %v2252, %v2373
  %2375 = vmatprep.mubr.f32.mxu0 %v2147
  %2376 = vmatmul.mubr.f32.gmra.mxu0 %v2004
  %v2377 = vpop.f32.mrf.mxu0
  %v2378 = vadd.f32 %v2256, %v2377
  %v2379 = vpop.f32.mrf.mxu0
  %v2380 = vadd.f32 %v2258, %v2379
  %2381 = vmatprep.mubr.f32.mxu0 %v2150
  %2382 = vmatmul.mubr.f32.gmra.mxu0 %v2006
  %v2383 = vpop.f32.mrf.mxu0
  %v2384 = vadd.f32 %v2262, %v2383
  %v2385 = vpop.f32.mrf.mxu0
  %v2386 = vadd.f32 %v2264, %v2385
  %2387 = vmatprep.mubr.f32.mxu0 %v2153
  %2388 = vmatmul.mubr.f32.gmra.mxu0 %v2008
  %v2389 = vpop.f32.mrf.mxu0
  %v2390 = vadd.f32 %v2268, %v2389
  %v2391 = vpop.f32.mrf.mxu0
  %v2392 = vadd.f32 %v2270, %v2391
  %2393 = vmatprep.mubr.f32.mxu0 %v2156
  %2394 = vmatmul.mubr.f32.gmra.mxu0 %v2010
  %v2395 = vpop.f32.mrf.mxu0
  %v2396 = vadd.f32 %v2274, %v2395
  %v2397 = vpop.f32.mrf.mxu0
  %v2398 = vadd.f32 %v2276, %v2397
  %2399 = vmatprep.mubr.f32.mxu0 %v2159
  %2400 = vmatmul.mubr.f32.gmra.mxu0 %v2012
  %v2401 = vpop.f32.mrf.mxu0
  %v2402 = vadd.f32 %v2280, %v2401
  %v2403 = vpop.f32.mrf.mxu0
  %v2404 = vadd.f32 %v2282, %v2403
  %2405 = vdwg.mxu0
  %s2406 = scalar_lea.vmem %s3, 928
  %v2407 = vld [vmem:[%s2406] sm:$0xff]
  %v2408 = vld [vmem:[%s2406 + $0x8] sm:$0xff]
  %v2409 = vld [vmem:[%s2406 + $0x10] sm:$0xff]
  %v2410 = vld [vmem:[%s2406 + $0x18] sm:$0xff]
  %v2411 = vld [vmem:[%s2406 + $0x20] sm:$0xff]
  %v2412 = vld [vmem:[%s2406 + $0x28] sm:$0xff]
  %v2413 = vld [vmem:[%s2406 + $0x30] sm:$0xff]
  %v2414 = vld [vmem:[%s2406 + $0x38] sm:$0xff]
  %v2415 = vld [vmem:[%s2406 + $0x40] sm:$0xff]
  %v2416 = vld [vmem:[%s2406 + $0x48] sm:$0xff]
  %v2417 = vld [vmem:[%s2406 + $0x50] sm:$0xff]
  %v2418 = vld [vmem:[%s2406 + $0x58] sm:$0xff]
  %v2419 = vld [vmem:[%s2406 + $0x60] sm:$0xff]
  %v2420 = vld [vmem:[%s2406 + $0x68] sm:$0xff]
  %v2421 = vld [vmem:[%s2406 + $0x70] sm:$0xff]
  %v2422 = vld [vmem:[%s2406 + $0x78] sm:$0xff]
  %v2423 = vld [vmem:[%s2406 + $0x80] sm:$0xff]
  %v2424 = vld [vmem:[%s2406 + $0x88] sm:$0xff]
  %v2425 = vld [vmem:[%s2406 + $0x90] sm:$0xff]
  %v2426 = vld [vmem:[%s2406 + $0x98] sm:$0xff]
  %v2427 = vld [vmem:[%s2406 + $0xa0] sm:$0xff]
  %v2428 = vld [vmem:[%s2406 + $0xa8] sm:$0xff]
  %v2429 = vld [vmem:[%s2406 + $0xb0] sm:$0xff]
  %v2430 = vld [vmem:[%s2406 + $0xb8] sm:$0xff]
  %v2431 = vld [vmem:[%s2406 + $0xc0] sm:$0xff]
  %v2432 = vld [vmem:[%s2406 + $0xc8] sm:$0xff]
  %v2433 = vld [vmem:[%s2406 + $0xd0] sm:$0xff]
  %v2434 = vld [vmem:[%s2406 + $0xd8] sm:$0xff]
  %v2435 = vld [vmem:[%s2406 + $0xe0] sm:$0xff]
  %v2436 = vld [vmem:[%s2406 + $0xe8] sm:$0xff]
  %v2437 = vld [vmem:[%s2406 + $0xf0] sm:$0xff]
  %v2438 = vld [vmem:[%s2406 + $0xf8] sm:$0xff]
  %v2439 = vld [vmem:[%s2406 + $0x100] sm:$0xff]
  %v2440 = vld [vmem:[%s2406 + $0x108] sm:$0xff]
  %v2441 = vld [vmem:[%s2406 + $0x110] sm:$0xff]
  %v2442 = vld [vmem:[%s2406 + $0x118] sm:$0xff]
  %v2443 = vld [vmem:[%s2406 + $0x120] sm:$0xff]
  %v2444 = vld [vmem:[%s2406 + $0x128] sm:$0xff]
  %v2445 = vld [vmem:[%s2406 + $0x130] sm:$0xff]
  %v2446 = vld [vmem:[%s2406 + $0x138] sm:$0xff]
  %v2447 = vld [vmem:[%s2406 + $0x140] sm:$0xff]
  %v2448 = vld [vmem:[%s2406 + $0x148] sm:$0xff]
  %v2449 = vld [vmem:[%s2406 + $0x150] sm:$0xff]
  %v2450 = vld [vmem:[%s2406 + $0x158] sm:$0xff]
  %v2451 = vld [vmem:[%s2406 + $0x160] sm:$0xff]
  %v2452 = vld [vmem:[%s2406 + $0x168] sm:$0xff]
  %v2453 = vld [vmem:[%s2406 + $0x170] sm:$0xff]
  %v2454 = vld [vmem:[%s2406 + $0x178] sm:$0xff]
  %v2455 = vld [vmem:[%s2406 + $0x180] sm:$0xff]
  %v2456 = vld [vmem:[%s2406 + $0x188] sm:$0xff]
  %v2457 = vld [vmem:[%s2406 + $0x190] sm:$0xff]
  %v2458 = vld [vmem:[%s2406 + $0x198] sm:$0xff]
  %v2459 = vld [vmem:[%s2406 + $0x1a0] sm:$0xff]
  %v2460 = vld [vmem:[%s2406 + $0x1a8] sm:$0xff]
  %v2461 = vld [vmem:[%s2406 + $0x1b0] sm:$0xff]
  %v2462 = vld [vmem:[%s2406 + $0x1b8] sm:$0xff]
  %v2463 = vld [vmem:[%s2406 + $0x1c0] sm:$0x3f]
  %v2464 = vld [vmem:[%s2406 + $0x1c8] sm:$0x3f]
  %v2466 = vsel %vm2139, %v2017, 0
  %v2469 = vsel %vm2164, %v2463, 0
  %v2472 = vsel %vm2164, %v2464, 0
  %2474 = vmatprep.subr.mxu0 %v2438
  %2475 = vmatpush1.msra.mxu0 %v2437
  %2476 = vmatprep.subr.mxu0 %v2436
  %2477 = vmatpush1.msra.mxu0 %v2435
  %2478 = vmatprep.subr.mxu0 %v2434
  %2479 = vmatpush1.msra.mxu0 %v2433
  %2480 = vmatprep.subr.mxu0 %v2432
  %2481 = vmatpush1.msra.mxu0 %v2431
  %2482 = vmatprep.subr.mxu0 %v2430
  %2483 = vmatpush1.msra.mxu0 %v2429
  %2484 = vmatprep.subr.mxu0 %v2428
  %2485 = vmatpush1.msra.mxu0 %v2427
  %2486 = vmatprep.subr.mxu0 %v2426
  %2487 = vmatpush1.msra.mxu0 %v2425
  %2488 = vmatprep.subr.mxu0 %v2424
  %2489 = vmatpush1.msra.mxu0 %v2423
  %2490 = vmatprep.subr.mxu0 %v2422
  %2491 = vmatpush1.msra.mxu0 %v2421
  %2492 = vmatprep.subr.mxu0 %v2420
  %2493 = vmatpush1.msra.mxu0 %v2419
  %2494 = vmatprep.subr.mxu0 %v2418
  %2495 = vmatpush1.msra.mxu0 %v2417
  %2496 = vmatprep.subr.mxu0 %v2416
  %2497 = vmatpush1.msra.mxu0 %v2415
  %2498 = vmatprep.subr.mxu0 %v2414
  %2499 = vmatpush1.msra.mxu0 %v2413
  %2500 = vmatprep.subr.mxu0 %v2412
  %2501 = vmatpush1.msra.mxu0 %v2411
  %2502 = vmatprep.subr.mxu0 %v2410
  %2503 = vmatpush1.msra.mxu0 %v2409
  %2504 = vmatprep.subr.mxu0 %v2408
  %2505 = vmatpush1.msra.mxu0 %v2407
  %2506 = vmatprep.subr.mxu0 0.0
  %2507 = vmatpush2.msra.mxu0 0.0
  %2508 = vmatprep.subr.mxu0 0.0
  %2509 = vmatpush2.msra.mxu0 0.0
  %2510 = vmatprep.subr.mxu0 0.0
  %2511 = vmatpush2.msra.mxu0 0.0
  %2512 = vmatprep.subr.mxu0 %v2472
  %2513 = vmatpush2.msra.mxu0 %v2469
  %2514 = vmatprep.subr.mxu0 %v2462
  %2515 = vmatpush2.msra.mxu0 %v2461
  %2516 = vmatprep.subr.mxu0 %v2460
  %2517 = vmatpush2.msra.mxu0 %v2459
  %2518 = vmatprep.subr.mxu0 %v2458
  %2519 = vmatpush2.msra.mxu0 %v2457
  %2520 = vmatprep.subr.mxu0 %v2456
  %2521 = vmatpush2.msra.mxu0 %v2455
  %2522 = vmatprep.subr.mxu0 %v2454
  %2523 = vmatpush2.msra.mxu0 %v2453
  %2524 = vmatprep.subr.mxu0 %v2452
  %2525 = vmatpush2.msra.mxu0 %v2451
  %2526 = vmatprep.subr.mxu0 %v2450
  %2527 = vmatpush2.msra.mxu0 %v2449
  %2528 = vmatprep.subr.mxu0 %v2448
  %2529 = vmatpush2.msra.mxu0 %v2447
  %2530 = vmatprep.subr.mxu0 %v2446
  %2531 = vmatpush2.msra.mxu0 %v2445
  %2532 = vmatprep.subr.mxu0 %v2444
  %2533 = vmatpush2.msra.mxu0 %v2443
  %2534 = vmatprep.subr.mxu0 %v2442
  %2535 = vmatpush2.msra.mxu0 %v2441
  %2536 = vmatprep.subr.mxu0 %v2440
  %2537 = vmatpush2.msra.mxu0 %v2439
  %2538 = vmatprep.mubr.f32.mxu0 %v2144
  %2539 = vmatmul.mubr.f32.gmra.mxu0 %v2002
  %v2540 = vpop.f32.mrf.mxu0
  %v2541 = vadd.f32 0.0, %v2540
  %v2542 = vpop.f32.mrf.mxu0
  %v2543 = vadd.f32 0.0, %v2542
  %2544 = vmatprep.mubr.f32.mxu0 %v2147
  %2545 = vmatmul.mubr.f32.gmra.mxu0 %v2004
  %v2546 = vpop.f32.mrf.mxu0
  %v2547 = vadd.f32 0.0, %v2546
  %v2548 = vpop.f32.mrf.mxu0
  %v2549 = vadd.f32 0.0, %v2548
  %2550 = vmatprep.mubr.f32.mxu0 %v2150
  %2551 = vmatmul.mubr.f32.gmra.mxu0 %v2006
  %v2552 = vpop.f32.mrf.mxu0
  %v2553 = vadd.f32 0.0, %v2552
  %v2554 = vpop.f32.mrf.mxu0
  %v2555 = vadd.f32 0.0, %v2554
  %2556 = vmatprep.mubr.f32.mxu0 %v2153
  %2557 = vmatmul.mubr.f32.gmra.mxu0 %v2008
  %v2558 = vpop.f32.mrf.mxu0
  %v2559 = vadd.f32 0.0, %v2558
  %v2560 = vpop.f32.mrf.mxu0
  %v2561 = vadd.f32 0.0, %v2560
  %2562 = vmatprep.mubr.f32.mxu0 %v2156
  %2563 = vmatmul.mubr.f32.gmra.mxu0 %v2010
  %v2564 = vpop.f32.mrf.mxu0
  %v2565 = vadd.f32 0.0, %v2564
  %v2566 = vpop.f32.mrf.mxu0
  %v2567 = vadd.f32 0.0, %v2566
  %2568 = vmatprep.mubr.f32.mxu0 %v2159
  %2569 = vmatmul.mubr.f32.gmra.mxu0 %v2012
  %v2570 = vpop.f32.mrf.mxu0
  %v2571 = vadd.f32 0.0, %v2570
  %v2572 = vpop.f32.mrf.mxu0
  %v2573 = vadd.f32 0.0, %v2572
  %2574 = vmatprep.mubr.f32.mxu0 %v2162
  %2575 = vmatmul.mubr.f32.gmra.mxu0 %v2014
  %v2576 = vpop.f32.mrf.mxu0
  %v2577 = vadd.f32 0.0, %v2576
  %v2578 = vpop.f32.mrf.mxu0
  %v2579 = vadd.f32 0.0, %v2578
  %2580 = vmatprep.mubr.f32.mxu0 %v2466
  %2581 = vmatmul.mubr.f32.gmra.mxu0 %v2016
  %v2582 = vpop.f32.mrf.mxu0
  %v2583 = vadd.f32 0.0, %v2582
  %v2584 = vpop.f32.mrf.mxu0
  %v2585 = vadd.f32 0.0, %v2584
  %2586 = vdwg.mxu0
  %v2587 = vadd.f32 %v2360, %v2541
  %v2588 = vadd.f32 %v2362, %v2543
  %v2589 = vadd.f32 %v2366, %v2547
  %v2590 = vadd.f32 %v2368, %v2549
  %v2591 = vadd.f32 %v2372, %v2553
  %v2592 = vadd.f32 %v2374, %v2555
  %v2593 = vadd.f32 %v2378, %v2559
  %v2594 = vadd.f32 %v2380, %v2561
  %v2595 = vadd.f32 %v2384, %v2565
  %v2596 = vadd.f32 %v2386, %v2567
  %v2597 = vadd.f32 %v2390, %v2571
  %v2598 = vadd.f32 %v2392, %v2573
  %v2599 = vadd.f32 %v2396, %v2577
  %v2600 = vadd.f32 %v2398, %v2579
  %v2601 = vadd.f32 %v2402, %v2583
  %v2602 = vadd.f32 %v2404, %v2585
  %s2603 = scalar_lea.vmem %s3, 1392
  %v2604 = vld [vmem:[%s2603] sm:$0xff]
  %v2605 = vld [vmem:[%s2603 + $0x8] sm:$0xff]
  %v2606 = vld [vmem:[%s2603 + $0x10] sm:$0xff]
  %v2607 = vld [vmem:[%s2603 + $0x18] sm:$0xff]
  %v2608 = vld [vmem:[%s2603 + $0x20] sm:$0xff]
  %v2609 = vld [vmem:[%s2603 + $0x28] sm:$0xff]
  %v2610 = vld [vmem:[%s2603 + $0x30] sm:$0xff]
  %v2611 = vld [vmem:[%s2603 + $0x38] sm:$0xff]
  %v2612 = vld [vmem:[%s2603 + $0x40] sm:$0xff]
  %v2613 = vld [vmem:[%s2603 + $0x48] sm:$0xff]
  %v2614 = vld [vmem:[%s2603 + $0x50] sm:$0xff]
  %v2615 = vld [vmem:[%s2603 + $0x58] sm:$0xff]
  %v2616 = vld [vmem:[%s2603 + $0x60] sm:$0xff]
  %v2617 = vld [vmem:[%s2603 + $0x68] sm:$0xff]
  %v2618 = vld [vmem:[%s2603 + $0x70] sm:$0xff]
  %v2619 = vld [vmem:[%s2603 + $0x78] sm:$0xff]
  %v2620 = vld [vmem:[%s2603 + $0x80] sm:$0xff]
  %v2621 = vld [vmem:[%s2603 + $0x88] sm:$0xff]
  %v2622 = vld [vmem:[%s2603 + $0x90] sm:$0xff]
  %v2623 = vld [vmem:[%s2603 + $0x98] sm:$0xff]
  %v2624 = vld [vmem:[%s2603 + $0xa0] sm:$0xff]
  %v2625 = vld [vmem:[%s2603 + $0xa8] sm:$0xff]
  %v2626 = vld [vmem:[%s2603 + $0xb0] sm:$0xff]
  %v2627 = vld [vmem:[%s2603 + $0xb8] sm:$0xff]
  %v2628 = vld [vmem:[%s2603 + $0xc0] sm:$0xff]
  %v2629 = vld [vmem:[%s2603 + $0xc8] sm:$0xff]
  %v2630 = vld [vmem:[%s2603 + $0xd0] sm:$0xff]
  %v2631 = vld [vmem:[%s2603 + $0xd8] sm:$0xff]
  %v2632 = vld [vmem:[%s2603 + $0xe0] sm:$0xff]
  %v2633 = vld [vmem:[%s2603 + $0xe8] sm:$0xff]
  %v2634 = vld [vmem:[%s2603 + $0xf0] sm:$0xff]
  %v2635 = vld [vmem:[%s2603 + $0xf8] sm:$0xff]
  %v2636 = vld [vmem:[%s2603 + $0x100] sm:$0xff]
  %v2637 = vld [vmem:[%s2603 + $0x108] sm:$0xff]
  %v2638 = vld [vmem:[%s2603 + $0x110] sm:$0xff]
  %v2639 = vld [vmem:[%s2603 + $0x118] sm:$0xff]
  %v2640 = vld [vmem:[%s2603 + $0x120] sm:$0xff]
  %v2641 = vld [vmem:[%s2603 + $0x128] sm:$0xff]
  %v2642 = vld [vmem:[%s2603 + $0x130] sm:$0xff]
  %v2643 = vld [vmem:[%s2603 + $0x138] sm:$0xff]
  %v2644 = vld [vmem:[%s2603 + $0x140] sm:$0xff]
  %v2645 = vld [vmem:[%s2603 + $0x148] sm:$0xff]
  %v2646 = vld [vmem:[%s2603 + $0x150] sm:$0xff]
  %v2647 = vld [vmem:[%s2603 + $0x158] sm:$0xff]
  %v2648 = vld [vmem:[%s2603 + $0x160] sm:$0xff]
  %v2649 = vld [vmem:[%s2603 + $0x168] sm:$0xff]
  %v2650 = vld [vmem:[%s2603 + $0x170] sm:$0xff]
  %v2651 = vld [vmem:[%s2603 + $0x178] sm:$0xff]
  %v2652 = vld [vmem:[%s2603 + $0x180] sm:$0xff]
  %v2653 = vld [vmem:[%s2603 + $0x188] sm:$0xff]
  %v2654 = vld [vmem:[%s2603 + $0x190] sm:$0xff]
  %v2655 = vld [vmem:[%s2603 + $0x198] sm:$0xff]
  %v2656 = vld [vmem:[%s2603 + $0x1a0] sm:$0xff]
  %v2657 = vld [vmem:[%s2603 + $0x1a8] sm:$0xff]
  %v2658 = vld [vmem:[%s2603 + $0x1b0] sm:$0xff]
  %v2659 = vld [vmem:[%s2603 + $0x1b8] sm:$0xff]
  %v2660 = vld [vmem:[%s2603 + $0x1c0] sm:$0x3f]
  %v2661 = vld [vmem:[%s2603 + $0x1c8] sm:$0x3f]
  %v2663 = vsel %vm2139, %v2019, 0
  %v2666 = vsel %vm2164, %v2660, 0
  %v2669 = vsel %vm2164, %v2661, 0
  %2671 = vmatprep.subr.mxu0 %v2635
  %2672 = vmatpush1.msra.mxu0 %v2634
  %2673 = vmatprep.subr.mxu0 %v2633
  %2674 = vmatpush1.msra.mxu0 %v2632
  %2675 = vmatprep.subr.mxu0 %v2631
  %2676 = vmatpush1.msra.mxu0 %v2630
  %2677 = vmatprep.subr.mxu0 %v2629
  %2678 = vmatpush1.msra.mxu0 %v2628
  %2679 = vmatprep.subr.mxu0 %v2627
  %2680 = vmatpush1.msra.mxu0 %v2626
  %2681 = vmatprep.subr.mxu0 %v2625
  %2682 = vmatpush1.msra.mxu0 %v2624
  %2683 = vmatprep.subr.mxu0 %v2623
  %2684 = vmatpush1.msra.mxu0 %v2622
  %2685 = vmatprep.subr.mxu0 %v2621
  %2686 = vmatpush1.msra.mxu0 %v2620
  %2687 = vmatprep.subr.mxu0 %v2619
  %2688 = vmatpush1.msra.mxu0 %v2618
  %2689 = vmatprep.subr.mxu0 %v2617
  %2690 = vmatpush1.msra.mxu0 %v2616
  %2691 = vmatprep.subr.mxu0 %v2615
  %2692 = vmatpush1.msra.mxu0 %v2614
  %2693 = vmatprep.subr.mxu0 %v2613
  %2694 = vmatpush1.msra.mxu0 %v2612
  %2695 = vmatprep.subr.mxu0 %v2611
  %2696 = vmatpush1.msra.mxu0 %v2610
  %2697 = vmatprep.subr.mxu0 %v2609
  %2698 = vmatpush1.msra.mxu0 %v2608
  %2699 = vmatprep.subr.mxu0 %v2607
  %2700 = vmatpush1.msra.mxu0 %v2606
  %2701 = vmatprep.subr.mxu0 %v2605
  %2702 = vmatpush1.msra.mxu0 %v2604
  %2703 = vmatprep.subr.mxu0 0.0
  %2704 = vmatpush2.msra.mxu0 0.0
  %2705 = vmatprep.subr.mxu0 0.0
  %2706 = vmatpush2.msra.mxu0 0.0
  %2707 = vmatprep.subr.mxu0 0.0
  %2708 = vmatpush2.msra.mxu0 0.0
  %2709 = vmatprep.subr.mxu0 %v2669
  %2710 = vmatpush2.msra.mxu0 %v2666
  %2711 = vmatprep.subr.mxu0 %v2659
  %2712 = vmatpush2.msra.mxu0 %v2658
  %2713 = vmatprep.subr.mxu0 %v2657
  %2714 = vmatpush2.msra.mxu0 %v2656
  %2715 = vmatprep.subr.mxu0 %v2655
  %2716 = vmatpush2.msra.mxu0 %v2654
  %2717 = vmatprep.subr.mxu0 %v2653
  %2718 = vmatpush2.msra.mxu0 %v2652
  %2719 = vmatprep.subr.mxu0 %v2651
  %2720 = vmatpush2.msra.mxu0 %v2650
  %2721 = vmatprep.subr.mxu0 %v2649
  %2722 = vmatpush2.msra.mxu0 %v2648
  %2723 = vmatprep.subr.mxu0 %v2647
  %2724 = vmatpush2.msra.mxu0 %v2646
  %2725 = vmatprep.subr.mxu0 %v2645
  %2726 = vmatpush2.msra.mxu0 %v2644
  %2727 = vmatprep.subr.mxu0 %v2643
  %2728 = vmatpush2.msra.mxu0 %v2642
  %2729 = vmatprep.subr.mxu0 %v2641
  %2730 = vmatpush2.msra.mxu0 %v2640
  %2731 = vmatprep.subr.mxu0 %v2639
  %2732 = vmatpush2.msra.mxu0 %v2638
  %2733 = vmatprep.subr.mxu0 %v2637
  %2734 = vmatpush2.msra.mxu0 %v2636
  %2735 = vmatprep.mubr.f32.mxu0 %v2147
  %2736 = vmatmul.mubr.f32.gmra.mxu0 %v2004
  %v2737 = vpop.f32.mrf.mxu0
  %v2738 = vadd.f32 0.0, %v2737
  %v2739 = vpop.f32.mrf.mxu0
  %v2740 = vadd.f32 0.0, %v2739
  %2741 = vmatprep.mubr.f32.mxu0 %v2150
  %2742 = vmatmul.mubr.f32.gmra.mxu0 %v2006
  %v2743 = vpop.f32.mrf.mxu0
  %v2744 = vadd.f32 0.0, %v2743
  %v2745 = vpop.f32.mrf.mxu0
  %v2746 = vadd.f32 0.0, %v2745
  %2747 = vmatprep.mubr.f32.mxu0 %v2153
  %2748 = vmatmul.mubr.f32.gmra.mxu0 %v2008
  %v2749 = vpop.f32.mrf.mxu0
  %v2750 = vadd.f32 0.0, %v2749
  %v2751 = vpop.f32.mrf.mxu0
  %v2752 = vadd.f32 0.0, %v2751
  %2753 = vmatprep.mubr.f32.mxu0 %v2156
  %2754 = vmatmul.mubr.f32.gmra.mxu0 %v2010
  %v2755 = vpop.f32.mrf.mxu0
  %v2756 = vadd.f32 0.0, %v2755
  %v2757 = vpop.f32.mrf.mxu0
  %v2758 = vadd.f32 0.0, %v2757
  %2759 = vmatprep.mubr.f32.mxu0 %v2159
  %2760 = vmatmul.mubr.f32.gmra.mxu0 %v2012
  %v2761 = vpop.f32.mrf.mxu0
  %v2762 = vadd.f32 0.0, %v2761
  %v2763 = vpop.f32.mrf.mxu0
  %v2764 = vadd.f32 0.0, %v2763
  %2765 = vmatprep.mubr.f32.mxu0 %v2162
  %2766 = vmatmul.mubr.f32.gmra.mxu0 %v2014
  %v2767 = vpop.f32.mrf.mxu0
  %v2768 = vadd.f32 0.0, %v2767
  %v2769 = vpop.f32.mrf.mxu0
  %v2770 = vadd.f32 0.0, %v2769
  %2771 = vmatprep.mubr.f32.mxu0 %v2466
  %2772 = vmatmul.mubr.f32.gmra.mxu0 %v2016
  %v2773 = vpop.f32.mrf.mxu0
  %v2774 = vadd.f32 0.0, %v2773
  %v2775 = vpop.f32.mrf.mxu0
  %v2776 = vadd.f32 0.0, %v2775
  %2777 = vmatprep.mubr.f32.mxu0 %v2663
  %2778 = vmatmul.mubr.f32.gmra.mxu0 %v2018
  %v2779 = vpop.f32.mrf.mxu0
  %v2780 = vadd.f32 0.0, %v2779
  %v2781 = vpop.f32.mrf.mxu0
  %v2782 = vadd.f32 0.0, %v2781
  %2783 = vdwg.mxu0
  %v2784 = vadd.f32 %v2587, %v2738
  %v2785 = vadd.f32 %v2588, %v2740
  %v2786 = vadd.f32 %v2589, %v2744
  %v2787 = vadd.f32 %v2590, %v2746
  %v2788 = vadd.f32 %v2591, %v2750
  %v2789 = vadd.f32 %v2592, %v2752
  %v2790 = vadd.f32 %v2593, %v2756
  %v2791 = vadd.f32 %v2594, %v2758
  %v2792 = vadd.f32 %v2595, %v2762
  %v2793 = vadd.f32 %v2596, %v2764
  %v2794 = vadd.f32 %v2597, %v2768
  %v2795 = vadd.f32 %v2598, %v2770
  %v2796 = vadd.f32 %v2599, %v2774
  %v2797 = vadd.f32 %v2600, %v2776
  %v2798 = vadd.f32 %v2601, %v2780
  %v2799 = vadd.f32 %v2602, %v2782
  %s2800 = scalar_lea.vmem %s3, 1856
  %v2801 = vld [vmem:[%s2800] sm:$0xff]
  %v2802 = vld [vmem:[%s2800 + $0x8] sm:$0xff]
  %v2803 = vld [vmem:[%s2800 + $0x10] sm:$0xff]
  %v2804 = vld [vmem:[%s2800 + $0x18] sm:$0xff]
  %v2805 = vld [vmem:[%s2800 + $0x20] sm:$0xff]
  %v2806 = vld [vmem:[%s2800 + $0x28] sm:$0xff]
  %v2807 = vld [vmem:[%s2800 + $0x30] sm:$0xff]
  %v2808 = vld [vmem:[%s2800 + $0x38] sm:$0xff]
  %v2809 = vld [vmem:[%s2800 + $0x40] sm:$0xff]
  %v2810 = vld [vmem:[%s2800 + $0x48] sm:$0xff]
  %v2811 = vld [vmem:[%s2800 + $0x50] sm:$0xff]
  %v2812 = vld [vmem:[%s2800 + $0x58] sm:$0xff]
  %v2813 = vld [vmem:[%s2800 + $0x60] sm:$0xff]
  %v2814 = vld [vmem:[%s2800 + $0x68] sm:$0xff]
  %v2815 = vld [vmem:[%s2800 + $0x70] sm:$0xff]
  %v2816 = vld [vmem:[%s2800 + $0x78] sm:$0xff]
  %v2817 = vld [vmem:[%s2800 + $0x80] sm:$0xff]
  %v2818 = vld [vmem:[%s2800 + $0x88] sm:$0xff]
  %v2819 = vld [vmem:[%s2800 + $0x90] sm:$0xff]
  %v2820 = vld [vmem:[%s2800 + $0x98] sm:$0xff]
  %v2821 = vld [vmem:[%s2800 + $0xa0] sm:$0xff]
  %v2822 = vld [vmem:[%s2800 + $0xa8] sm:$0xff]
  %v2823 = vld [vmem:[%s2800 + $0xb0] sm:$0xff]
  %v2824 = vld [vmem:[%s2800 + $0xb8] sm:$0xff]
  %v2825 = vld [vmem:[%s2800 + $0xc0] sm:$0xff]
  %v2826 = vld [vmem:[%s2800 + $0xc8] sm:$0xff]
  %v2827 = vld [vmem:[%s2800 + $0xd0] sm:$0xff]
  %v2828 = vld [vmem:[%s2800 + $0xd8] sm:$0xff]
  %v2829 = vld [vmem:[%s2800 + $0xe0] sm:$0xff]
  %v2830 = vld [vmem:[%s2800 + $0xe8] sm:$0xff]
  %v2831 = vld [vmem:[%s2800 + $0xf0] sm:$0xff]
  %v2832 = vld [vmem:[%s2800 + $0xf8] sm:$0xff]
  %v2833 = vld [vmem:[%s2800 + $0x100] sm:$0xff]
  %v2834 = vld [vmem:[%s2800 + $0x108] sm:$0xff]
  %v2835 = vld [vmem:[%s2800 + $0x110] sm:$0xff]
  %v2836 = vld [vmem:[%s2800 + $0x118] sm:$0xff]
  %v2837 = vld [vmem:[%s2800 + $0x120] sm:$0xff]
  %v2838 = vld [vmem:[%s2800 + $0x128] sm:$0xff]
  %v2839 = vld [vmem:[%s2800 + $0x130] sm:$0xff]
  %v2840 = vld [vmem:[%s2800 + $0x138] sm:$0xff]
  %v2841 = vld [vmem:[%s2800 + $0x140] sm:$0xff]
  %v2842 = vld [vmem:[%s2800 + $0x148] sm:$0xff]
  %v2843 = vld [vmem:[%s2800 + $0x150] sm:$0xff]
  %v2844 = vld [vmem:[%s2800 + $0x158] sm:$0xff]
  %v2845 = vld [vmem:[%s2800 + $0x160] sm:$0xff]
  %v2846 = vld [vmem:[%s2800 + $0x168] sm:$0xff]
  %v2847 = vld [vmem:[%s2800 + $0x170] sm:$0xff]
  %v2848 = vld [vmem:[%s2800 + $0x178] sm:$0xff]
  %v2849 = vld [vmem:[%s2800 + $0x180] sm:$0xff]
  %v2850 = vld [vmem:[%s2800 + $0x188] sm:$0xff]
  %v2851 = vld [vmem:[%s2800 + $0x190] sm:$0xff]
  %v2852 = vld [vmem:[%s2800 + $0x198] sm:$0xff]
  %v2853 = vld [vmem:[%s2800 + $0x1a0] sm:$0xff]
  %v2854 = vld [vmem:[%s2800 + $0x1a8] sm:$0xff]
  %v2855 = vld [vmem:[%s2800 + $0x1b0] sm:$0xff]
  %v2856 = vld [vmem:[%s2800 + $0x1b8] sm:$0xff]
  %v2857 = vld [vmem:[%s2800 + $0x1c0] sm:$0x3f]
  %v2858 = vld [vmem:[%s2800 + $0x1c8] sm:$0x3f]
  %v2860 = vsel %vm2139, %v2021, 0
  %v2863 = vsel %vm2164, %v2857, 0
  %v2866 = vsel %vm2164, %v2858, 0
  %2868 = vmatprep.subr.mxu0 %v2832
  %2869 = vmatpush1.msra.mxu0 %v2831
  %2870 = vmatprep.subr.mxu0 %v2830
  %2871 = vmatpush1.msra.mxu0 %v2829
  %2872 = vmatprep.subr.mxu0 %v2828
  %2873 = vmatpush1.msra.mxu0 %v2827
  %2874 = vmatprep.subr.mxu0 %v2826
  %2875 = vmatpush1.msra.mxu0 %v2825
  %2876 = vmatprep.subr.mxu0 %v2824
  %2877 = vmatpush1.msra.mxu0 %v2823
  %2878 = vmatprep.subr.mxu0 %v2822
  %2879 = vmatpush1.msra.mxu0 %v2821
  %2880 = vmatprep.subr.mxu0 %v2820
  %2881 = vmatpush1.msra.mxu0 %v2819
  %2882 = vmatprep.subr.mxu0 %v2818
  %2883 = vmatpush1.msra.mxu0 %v2817
  %2884 = vmatprep.subr.mxu0 %v2816
  %2885 = vmatpush1.msra.mxu0 %v2815
  %2886 = vmatprep.subr.mxu0 %v2814
  %2887 = vmatpush1.msra.mxu0 %v2813
  %2888 = vmatprep.subr.mxu0 %v2812
  %2889 = vmatpush1.msra.mxu0 %v2811
  %2890 = vmatprep.subr.mxu0 %v2810
  %2891 = vmatpush1.msra.mxu0 %v2809
  %2892 = vmatprep.subr.mxu0 %v2808
  %2893 = vmatpush1.msra.mxu0 %v2807
  %2894 = vmatprep.subr.mxu0 %v2806
  %2895 = vmatpush1.msra.mxu0 %v2805
  %2896 = vmatprep.subr.mxu0 %v2804
  %2897 = vmatpush1.msra.mxu0 %v2803
  %2898 = vmatprep.subr.mxu0 %v2802
  %2899 = vmatpush1.msra.mxu0 %v2801
  %2900 = vmatprep.subr.mxu0 0.0
  %2901 = vmatpush2.msra.mxu0 0.0
  %2902 = vmatprep.subr.mxu0 0.0
  %2903 = vmatpush2.msra.mxu0 0.0
  %2904 = vmatprep.subr.mxu0 0.0
  %2905 = vmatpush2.msra.mxu0 0.0
  %2906 = vmatprep.subr.mxu0 %v2866
  %2907 = vmatpush2.msra.mxu0 %v2863
  %2908 = vmatprep.subr.mxu0 %v2856
  %2909 = vmatpush2.msra.mxu0 %v2855
  %2910 = vmatprep.subr.mxu0 %v2854
  %2911 = vmatpush2.msra.mxu0 %v2853
  %2912 = vmatprep.subr.mxu0 %v2852
  %2913 = vmatpush2.msra.mxu0 %v2851
  %2914 = vmatprep.subr.mxu0 %v2850
  %2915 = vmatpush2.msra.mxu0 %v2849
  %2916 = vmatprep.subr.mxu0 %v2848
  %2917 = vmatpush2.msra.mxu0 %v2847
  %2918 = vmatprep.subr.mxu0 %v2846
  %2919 = vmatpush2.msra.mxu0 %v2845
  %2920 = vmatprep.subr.mxu0 %v2844
  %2921 = vmatpush2.msra.mxu0 %v2843
  %2922 = vmatprep.subr.mxu0 %v2842
  %2923 = vmatpush2.msra.mxu0 %v2841
  %2924 = vmatprep.subr.mxu0 %v2840
  %2925 = vmatpush2.msra.mxu0 %v2839
  %2926 = vmatprep.subr.mxu0 %v2838
  %2927 = vmatpush2.msra.mxu0 %v2837
  %2928 = vmatprep.subr.mxu0 %v2836
  %2929 = vmatpush2.msra.mxu0 %v2835
  %2930 = vmatprep.subr.mxu0 %v2834
  %2931 = vmatpush2.msra.mxu0 %v2833
  %2932 = vmatprep.mubr.f32.mxu0 %v2150
  %2933 = vmatmul.mubr.f32.gmra.mxu0 %v2006
  %v2934 = vpop.f32.mrf.mxu0
  %v2935 = vadd.f32 0.0, %v2934
  %v2936 = vpop.f32.mrf.mxu0
  %v2937 = vadd.f32 0.0, %v2936
  %2938 = vmatprep.mubr.f32.mxu0 %v2153
  %2939 = vmatmul.mubr.f32.gmra.mxu0 %v2008
  %v2940 = vpop.f32.mrf.mxu0
  %v2941 = vadd.f32 0.0, %v2940
  %v2942 = vpop.f32.mrf.mxu0
  %v2943 = vadd.f32 0.0, %v2942
  %2944 = vmatprep.mubr.f32.mxu0 %v2156
  %2945 = vmatmul.mubr.f32.gmra.mxu0 %v2010
  %v2946 = vpop.f32.mrf.mxu0
  %v2947 = vadd.f32 0.0, %v2946
  %v2948 = vpop.f32.mrf.mxu0
  %v2949 = vadd.f32 0.0, %v2948
  %2950 = vmatprep.mubr.f32.mxu0 %v2159
  %2951 = vmatmul.mubr.f32.gmra.mxu0 %v2012
  %v2952 = vpop.f32.mrf.mxu0
  %v2953 = vadd.f32 0.0, %v2952
  %v2954 = vpop.f32.mrf.mxu0
  %v2955 = vadd.f32 0.0, %v2954
  %2956 = vmatprep.mubr.f32.mxu0 %v2162
  %2957 = vmatmul.mubr.f32.gmra.mxu0 %v2014
  %v2958 = vpop.f32.mrf.mxu0
  %v2959 = vadd.f32 0.0, %v2958
  %v2960 = vpop.f32.mrf.mxu0
  %v2961 = vadd.f32 0.0, %v2960
  %2962 = vmatprep.mubr.f32.mxu0 %v2466
  %2963 = vmatmul.mubr.f32.gmra.mxu0 %v2016
  %v2964 = vpop.f32.mrf.mxu0
  %v2965 = vadd.f32 0.0, %v2964
  %v2966 = vpop.f32.mrf.mxu0
  %v2967 = vadd.f32 0.0, %v2966
  %2968 = vmatprep.mubr.f32.mxu0 %v2663
  %2969 = vmatmul.mubr.f32.gmra.mxu0 %v2018
  %v2970 = vpop.f32.mrf.mxu0
  %v2971 = vadd.f32 0.0, %v2970
  %v2972 = vpop.f32.mrf.mxu0
  %v2973 = vadd.f32 0.0, %v2972
  %2974 = vmatprep.mubr.f32.mxu0 %v2860
  %2975 = vmatmul.mubr.f32.gmra.mxu0 %v2020
  %v2976 = vpop.f32.mrf.mxu0
  %v2977 = vadd.f32 0.0, %v2976
  %v2978 = vpop.f32.mrf.mxu0
  %v2979 = vadd.f32 0.0, %v2978
  %2980 = vdwg.mxu0
  %v2981 = vadd.f32 %v2784, %v2935
  %v2982 = vadd.f32 %v2785, %v2937
  %v2983 = vadd.f32 %v2786, %v2941
  %v2984 = vadd.f32 %v2787, %v2943
  %v2985 = vadd.f32 %v2788, %v2947
  %v2986 = vadd.f32 %v2789, %v2949
  %v2987 = vadd.f32 %v2790, %v2953
  %v2988 = vadd.f32 %v2791, %v2955
  %v2989 = vadd.f32 %v2792, %v2959
  %v2990 = vadd.f32 %v2793, %v2961
  %v2991 = vadd.f32 %v2794, %v2965
  %v2992 = vadd.f32 %v2795, %v2967
  %v2993 = vadd.f32 %v2796, %v2971
  %v2994 = vadd.f32 %v2797, %v2973
  %v2995 = vadd.f32 %v2798, %v2977
  %v2996 = vadd.f32 %v2799, %v2979
  %v2997 = vld [vmem:[%s4] sm:$0x3]
  %v2999 = vlaneseq
  %v3000 = vshrl.u32 %v2999, 7
  %v3001 = vsub.s32 0, %v3000
  %v3002 = vrot.slane %v2997, %v3001
  %v3003 = vlaneseq
  %v3004 = vshrl.u32 %v3003, 7
  %v3005 = vsub.s32 1, %v3004
  %v3006 = vrot.slane %v2997, %v3005
  %v3009 = vadd.f32 %v2981, %v3002
  %v3010 = vadd.f32 %v2982, %v3006
  %v3011 = vadd.f32 %v2983, %v3002
  %v3012 = vadd.f32 %v2984, %v3006
  %v3013 = vadd.f32 %v2985, %v3002
  %v3014 = vadd.f32 %v2986, %v3006
  %v3015 = vadd.f32 %v2987, %v3002
  %v3016 = vadd.f32 %v2988, %v3006
  %v3017 = vadd.f32 %v2989, %v3002
  %v3018 = vadd.f32 %v2990, %v3006
  %v3019 = vadd.f32 %v2991, %v3002
  %v3020 = vadd.f32 %v2992, %v3006
  %v3021 = vadd.f32 %v2993, %v3002
  %v3022 = vadd.f32 %v2994, %v3006
  %v3023 = vadd.f32 %v2995, %v3002
  %v3024 = vadd.f32 %v2996, %v3006
  %v3025 = vmax.f32 %v3009, %v3011
  %v3026 = vmax.f32 %v3010, %v3012
  %v3027 = vmax.f32 %v3013, %v3015
  %v3028 = vmax.f32 %v3014, %v3016
  %v3029 = vmax.f32 %v3017, %v3019
  %v3030 = vmax.f32 %v3018, %v3020
  %v3031 = vmax.f32 %v3021, %v3023
  %v3032 = vmax.f32 %v3022, %v3024
  %3041 = vrot.lane.b32.xlu0 %v3025, 108
  %v3042 = vpop.permute.xlu0 %3041
  %3043 = vrot.lane.b32.xlu0 %v3026, 108
  %v3044 = vpop.permute.xlu0 %3043
  %3045 = vrot.lane.b32.xlu0 %v3027, 108
  %v3046 = vpop.permute.xlu0 %3045
  %3047 = vrot.lane.b32.xlu0 %v3028, 108
  %v3048 = vpop.permute.xlu0 %3047
  %3049 = vrot.lane.b32.xlu0 %v3029, 108
  %v3050 = vpop.permute.xlu0 %3049
  %3051 = vrot.lane.b32.xlu0 %v3030, 108
  %v3052 = vpop.permute.xlu0 %3051
  %3053 = vrot.lane.b32.xlu0 %v3031, 108
  %v3054 = vpop.permute.xlu0 %3053
  %3055 = vrot.lane.b32.xlu0 %v3032, 108
  %v3056 = vpop.permute.xlu0 %3055
  %vm3057 = vcmask 883712
  %v3058 = vsel %vm3057, %v3042, %v3044
  %v3059 = vsel %vm3057, %v3046, %v3048
  %v3060 = vsel %vm3057, %v3050, %v3052
  %v3061 = vsel %vm3057, %v3054, %v3056
  %v3070 = vmax.f32 %v3025, %v3058
  %v3071 = vmax.f32 %v3026, %v3044
  %v3072 = vmax.f32 %v3027, %v3059
  %v3073 = vmax.f32 %v3028, %v3048
  %v3074 = vmax.f32 %v3029, %v3060
  %v3075 = vmax.f32 %v3030, %v3052
  %v3076 = vmax.f32 %v3031, %v3061
  %v3077 = vmax.f32 %v3032, %v3056
  %v3078 = vmax.f32 %v3070, 0.0
  %v3079 = vmax.f32 %v3071, 0.0
  %v3080 = vmax.f32 %v3072, 0.0
  %v3081 = vmax.f32 %v3073, 0.0
  %v3082 = vmax.f32 %v3074, 0.0
  %v3083 = vmax.f32 %v3075, 0.0
  %v3084 = vmax.f32 %v3076, 0.0
  %v3085 = vmax.f32 %v3077, 0.0
  %v3086 = vld [vmem:[%s5] sm:$0xff]
  %v3087 = vld [vmem:[%s5 + $0x8] sm:$0xff]
  %v3088 = vld [vmem:[%s5 + $0x10] sm:$0xff]
  %v3089 = vld [vmem:[%s5 + $0x18] sm:$0xff]
  %v3090 = vld [vmem:[%s5 + $0x20] sm:$0xff]
  %v3091 = vld [vmem:[%s5 + $0x28] sm:$0xff]
  %v3092 = vld [vmem:[%s5 + $0x30] sm:$0xff]
  %v3093 = vld [vmem:[%s5 + $0x38] sm:$0xff]
  %v3094 = vld [vmem:[%s5 + $0x40] sm:$0xff]
  %v3095 = vld [vmem:[%s5 + $0x48] sm:$0xff]
  %v3096 = vld [vmem:[%s5 + $0x50] sm:$0xff]
  %v3097 = vld [vmem:[%s5 + $0x58] sm:$0xff]
  %v3098 = vld [vmem:[%s5 + $0x60] sm:$0xff]
  %v3099 = vld [vmem:[%s5 + $0x68] sm:$0xff]
  %v3100 = vld [vmem:[%s5 + $0x70] sm:$0xff]
  %v3101 = vld [vmem:[%s5 + $0x78] sm:$0xff]
  %v3102 = vld [vmem:[%s5 + $0x80] sm:$0xff]
  %v3103 = vld [vmem:[%s5 + $0x88] sm:$0xf]
  %s3104 = scalar_lea.vmem %s5, 144
  %v3105 = vld [vmem:[%s3104] sm:$0xff]
  %v3106 = vld [vmem:[%s3104 + $0x8] sm:$0xff]
  %v3107 = vld [vmem:[%s3104 + $0x10] sm:$0xff]
  %v3108 = vld [vmem:[%s3104 + $0x18] sm:$0xff]
  %v3109 = vld [vmem:[%s3104 + $0x20] sm:$0xff]
  %v3110 = vld [vmem:[%s3104 + $0x28] sm:$0xff]
  %v3111 = vld [vmem:[%s3104 + $0x30] sm:$0xff]
  %v3112 = vld [vmem:[%s3104 + $0x38] sm:$0xff]
  %v3113 = vld [vmem:[%s3104 + $0x40] sm:$0xff]
  %v3114 = vld [vmem:[%s3104 + $0x48] sm:$0xff]
  %v3115 = vld [vmem:[%s3104 + $0x50] sm:$0xff]
  %v3116 = vld [vmem:[%s3104 + $0x58] sm:$0xff]
  %v3117 = vld [vmem:[%s3104 + $0x60] sm:$0xff]
  %v3118 = vld [vmem:[%s3104 + $0x68] sm:$0xff]
  %v3119 = vld [vmem:[%s3104 + $0x70] sm:$0xff]
  %v3120 = vld [vmem:[%s3104 + $0x78] sm:$0xff]
  %v3121 = vld [vmem:[%s3104 + $0x80] sm:$0xff]
  %v3122 = vld [vmem:[%s3104 + $0x88] sm:$0xf]
  %vm3123 = vcmask 97280
  %v3125 = vsel %vm3123, %v3081, 0
  %v3128 = vsel %vm171, %v3122, 0
  %3130 = vmatprep.subr.mxu0 0.0
  %3131 = vmatpush1.msra.mxu0 %v3120
  %3132 = vmatprep.subr.mxu0 0.0
  %3133 = vmatpush1.msra.mxu0 %v3119
  %3134 = vmatprep.subr.mxu0 0.0
  %3135 = vmatpush1.msra.mxu0 %v3118
  %3136 = vmatprep.subr.mxu0 0.0
  %3137 = vmatpush1.msra.mxu0 %v3117
  %3138 = vmatprep.subr.mxu0 0.0
  %3139 = vmatpush1.msra.mxu0 %v3116
  %3140 = vmatprep.subr.mxu0 0.0
  %3141 = vmatpush1.msra.mxu0 %v3115
  %3142 = vmatprep.subr.mxu0 0.0
  %3143 = vmatpush1.msra.mxu0 %v3114
  %3144 = vmatprep.subr.mxu0 0.0
  %3145 = vmatpush1.msra.mxu0 %v3113
  %3146 = vmatprep.subr.mxu0 0.0
  %3147 = vmatpush1.msra.mxu0 %v3112
  %3148 = vmatprep.subr.mxu0 0.0
  %3149 = vmatpush1.msra.mxu0 %v3111
  %3150 = vmatprep.subr.mxu0 0.0
  %3151 = vmatpush1.msra.mxu0 %v3110
  %3152 = vmatprep.subr.mxu0 0.0
  %3153 = vmatpush1.msra.mxu0 %v3109
  %3154 = vmatprep.subr.mxu0 0.0
  %3155 = vmatpush1.msra.mxu0 %v3108
  %3156 = vmatprep.subr.mxu0 0.0
  %3157 = vmatpush1.msra.mxu0 %v3107
  %3158 = vmatprep.subr.mxu0 0.0
  %3159 = vmatpush1.msra.mxu0 %v3106
  %3160 = vmatprep.subr.mxu0 0.0
  %3161 = vmatpush1.msra.mxu0 %v3105
  %3162 = vmatprep.subr.mxu0 0.0
  %3163 = vmatpush2.msra.mxu0 0.0
  %3164 = vmatprep.subr.mxu0 0.0
  %3165 = vmatpush2.msra.mxu0 0.0
  %3166 = vmatprep.subr.mxu0 0.0
  %3167 = vmatpush2.msra.mxu0 0.0
  %3168 = vmatprep.subr.mxu0 0.0
  %3169 = vmatpush2.msra.mxu0 0.0
  %3170 = vmatprep.subr.mxu0 0.0
  %3171 = vmatpush2.msra.mxu0 0.0
  %3172 = vmatprep.subr.mxu0 0.0
  %3173 = vmatpush2.msra.mxu0 0.0
  %3174 = vmatprep.subr.mxu0 0.0
  %3175 = vmatpush2.msra.mxu0 0.0
  %3176 = vmatprep.subr.mxu0 0.0
  %3177 = vmatpush2.msra.mxu0 0.0
  %3178 = vmatprep.subr.mxu0 0.0
  %3179 = vmatpush2.msra.mxu0 0.0
  %3180 = vmatprep.subr.mxu0 0.0
  %3181 = vmatpush2.msra.mxu0 0.0
  %3182 = vmatprep.subr.mxu0 0.0
  %3183 = vmatpush2.msra.mxu0 0.0
  %3184 = vmatprep.subr.mxu0 0.0
  %3185 = vmatpush2.msra.mxu0 0.0
  %3186 = vmatprep.subr.mxu0 0.0
  %3187 = vmatpush2.msra.mxu0 0.0
  %3188 = vmatprep.subr.mxu0 0.0
  %3189 = vmatpush2.msra.mxu0 0.0
  %3190 = vmatprep.subr.mxu0 0.0
  %3191 = vmatpush2.msra.mxu0 %v3128
  %3192 = vmatprep.subr.mxu0 0.0
  %3193 = vmatpush2.msra.mxu0 %v3121
  %3194 = vmatprep.mubr.f32.mxu0 %v3125
  %3195 = vmatmul.mubr.f32.gmra.mxu0 %v3080
  %v3196 = vpop.f32.mrf.mxu0
  %v3197 = vadd.f32 0.0, %v3196
  %v3198 = vpop.f32.mrf.mxu0
  %3199 = vdwg.mxu0
  %v3201 = vsel %vm3123, %v3079, 0
  %v3204 = vsel %vm171, %v3103, 0
  %3206 = vmatprep.subr.mxu0 0.0
  %3207 = vmatpush1.msra.mxu0 %v3101
  %3208 = vmatprep.subr.mxu0 0.0
  %3209 = vmatpush1.msra.mxu0 %v3100
  %3210 = vmatprep.subr.mxu0 0.0
  %3211 = vmatpush1.msra.mxu0 %v3099
  %3212 = vmatprep.subr.mxu0 0.0
  %3213 = vmatpush1.msra.mxu0 %v3098
  %3214 = vmatprep.subr.mxu0 0.0
  %3215 = vmatpush1.msra.mxu0 %v3097
  %3216 = vmatprep.subr.mxu0 0.0
  %3217 = vmatpush1.msra.mxu0 %v3096
  %3218 = vmatprep.subr.mxu0 0.0
  %3219 = vmatpush1.msra.mxu0 %v3095
  %3220 = vmatprep.subr.mxu0 0.0
  %3221 = vmatpush1.msra.mxu0 %v3094
  %3222 = vmatprep.subr.mxu0 0.0
  %3223 = vmatpush1.msra.mxu0 %v3093
  %3224 = vmatprep.subr.mxu0 0.0
  %3225 = vmatpush1.msra.mxu0 %v3092
  %3226 = vmatprep.subr.mxu0 0.0
  %3227 = vmatpush1.msra.mxu0 %v3091
  %3228 = vmatprep.subr.mxu0 0.0
  %3229 = vmatpush1.msra.mxu0 %v3090
  %3230 = vmatprep.subr.mxu0 0.0
  %3231 = vmatpush1.msra.mxu0 %v3089
  %3232 = vmatprep.subr.mxu0 0.0
  %3233 = vmatpush1.msra.mxu0 %v3088
  %3234 = vmatprep.subr.mxu0 0.0
  %3235 = vmatpush1.msra.mxu0 %v3087
  %3236 = vmatprep.subr.mxu0 0.0
  %3237 = vmatpush1.msra.mxu0 %v3086
  %3238 = vmatprep.subr.mxu0 0.0
  %3239 = vmatpush2.msra.mxu0 0.0
  %3240 = vmatprep.subr.mxu0 0.0
  %3241 = vmatpush2.msra.mxu0 0.0
  %3242 = vmatprep.subr.mxu0 0.0
  %3243 = vmatpush2.msra.mxu0 0.0
  %3244 = vmatprep.subr.mxu0 0.0
  %3245 = vmatpush2.msra.mxu0 0.0
  %3246 = vmatprep.subr.mxu0 0.0
  %3247 = vmatpush2.msra.mxu0 0.0
  %3248 = vmatprep.subr.mxu0 0.0
  %3249 = vmatpush2.msra.mxu0 0.0
  %3250 = vmatprep.subr.mxu0 0.0
  %3251 = vmatpush2.msra.mxu0 0.0
  %3252 = vmatprep.subr.mxu0 0.0
  %3253 = vmatpush2.msra.mxu0 0.0
  %3254 = vmatprep.subr.mxu0 0.0
  %3255 = vmatpush2.msra.mxu0 0.0
  %3256 = vmatprep.subr.mxu0 0.0
  %3257 = vmatpush2.msra.mxu0 0.0
  %3258 = vmatprep.subr.mxu0 0.0
  %3259 = vmatpush2.msra.mxu0 0.0
  %3260 = vmatprep.subr.mxu0 0.0
  %3261 = vmatpush2.msra.mxu0 0.0
  %3262 = vmatprep.subr.mxu0 0.0
  %3263 = vmatpush2.msra.mxu0 0.0
  %3264 = vmatprep.subr.mxu0 0.0
  %3265 = vmatpush2.msra.mxu0 0.0
  %3266 = vmatprep.subr.mxu0 0.0
  %3267 = vmatpush2.msra.mxu0 %v3204
  %3268 = vmatprep.subr.mxu0 0.0
  %3269 = vmatpush2.msra.mxu0 %v3102
  %3270 = vmatprep.mubr.f32.mxu0 %v3201
  %3271 = vmatmul.mubr.f32.gmra.mxu0 %v3078
  %v3272 = vpop.f32.mrf.mxu0
  %v3273 = vadd.f32 %v3197, %v3272
  %v3274 = vpop.f32.mrf.mxu0
  %3275 = vdwg.mxu0
  %s3276 = scalar_lea.vmem %s5, 288
  %v3277 = vld [vmem:[%s3276] sm:$0xff]
  %v3278 = vld [vmem:[%s3276 + $0x8] sm:$0xff]
  %v3279 = vld [vmem:[%s3276 + $0x10] sm:$0xff]
  %v3280 = vld [vmem:[%s3276 + $0x18] sm:$0xff]
  %v3281 = vld [vmem:[%s3276 + $0x20] sm:$0xff]
  %v3282 = vld [vmem:[%s3276 + $0x28] sm:$0xff]
  %v3283 = vld [vmem:[%s3276 + $0x30] sm:$0xff]
  %v3284 = vld [vmem:[%s3276 + $0x38] sm:$0xff]
  %v3285 = vld [vmem:[%s3276 + $0x40] sm:$0xff]
  %v3286 = vld [vmem:[%s3276 + $0x48] sm:$0xff]
  %v3287 = vld [vmem:[%s3276 + $0x50] sm:$0xff]
  %v3288 = vld [vmem:[%s3276 + $0x58] sm:$0xff]
  %v3289 = vld [vmem:[%s3276 + $0x60] sm:$0xff]
  %v3290 = vld [vmem:[%s3276 + $0x68] sm:$0xff]
  %v3291 = vld [vmem:[%s3276 + $0x70] sm:$0xff]
  %v3292 = vld [vmem:[%s3276 + $0x78] sm:$0xff]
  %v3293 = vld [vmem:[%s3276 + $0x80] sm:$0xff]
  %v3294 = vld [vmem:[%s3276 + $0x88] sm:$0xf]
  %v3296 = vsel %vm3123, %v3083, 0
  %v3299 = vsel %vm171, %v3294, 0
  %3301 = vmatprep.subr.mxu0 0.0
  %3302 = vmatpush1.msra.mxu0 %v3292
  %3303 = vmatprep.subr.mxu0 0.0
  %3304 = vmatpush1.msra.mxu0 %v3291
  %3305 = vmatprep.subr.mxu0 0.0
  %3306 = vmatpush1.msra.mxu0 %v3290
  %3307 = vmatprep.subr.mxu0 0.0
  %3308 = vmatpush1.msra.mxu0 %v3289
  %3309 = vmatprep.subr.mxu0 0.0
  %3310 = vmatpush1.msra.mxu0 %v3288
  %3311 = vmatprep.subr.mxu0 0.0
  %3312 = vmatpush1.msra.mxu0 %v3287
  %3313 = vmatprep.subr.mxu0 0.0
  %3314 = vmatpush1.msra.mxu0 %v3286
  %3315 = vmatprep.subr.mxu0 0.0
  %3316 = vmatpush1.msra.mxu0 %v3285
  %3317 = vmatprep.subr.mxu0 0.0
  %3318 = vmatpush1.msra.mxu0 %v3284
  %3319 = vmatprep.subr.mxu0 0.0
  %3320 = vmatpush1.msra.mxu0 %v3283
  %3321 = vmatprep.subr.mxu0 0.0
  %3322 = vmatpush1.msra.mxu0 %v3282
  %3323 = vmatprep.subr.mxu0 0.0
  %3324 = vmatpush1.msra.mxu0 %v3281
  %3325 = vmatprep.subr.mxu0 0.0
  %3326 = vmatpush1.msra.mxu0 %v3280
  %3327 = vmatprep.subr.mxu0 0.0
  %3328 = vmatpush1.msra.mxu0 %v3279
  %3329 = vmatprep.subr.mxu0 0.0
  %3330 = vmatpush1.msra.mxu0 %v3278
  %3331 = vmatprep.subr.mxu0 0.0
  %3332 = vmatpush1.msra.mxu0 %v3277
  %3333 = vmatprep.subr.mxu0 0.0
  %3334 = vmatpush2.msra.mxu0 0.0
  %3335 = vmatprep.subr.mxu0 0.0
  %3336 = vmatpush2.msra.mxu0 0.0
  %3337 = vmatprep.subr.mxu0 0.0
  %3338 = vmatpush2.msra.mxu0 0.0
  %3339 = vmatprep.subr.mxu0 0.0
  %3340 = vmatpush2.msra.mxu0 0.0
  %3341 = vmatprep.subr.mxu0 0.0
  %3342 = vmatpush2.msra.mxu0 0.0
  %3343 = vmatprep.subr.mxu0 0.0
  %3344 = vmatpush2.msra.mxu0 0.0
  %3345 = vmatprep.subr.mxu0 0.0
  %3346 = vmatpush2.msra.mxu0 0.0
  %3347 = vmatprep.subr.mxu0 0.0
  %3348 = vmatpush2.msra.mxu0 0.0
  %3349 = vmatprep.subr.mxu0 0.0
  %3350 = vmatpush2.msra.mxu0 0.0
  %3351 = vmatprep.subr.mxu0 0.0
  %3352 = vmatpush2.msra.mxu0 0.0
  %3353 = vmatprep.subr.mxu0 0.0
  %3354 = vmatpush2.msra.mxu0 0.0
  %3355 = vmatprep.subr.mxu0 0.0
  %3356 = vmatpush2.msra.mxu0 0.0
  %3357 = vmatprep.subr.mxu0 0.0
  %3358 = vmatpush2.msra.mxu0 0.0
  %3359 = vmatprep.subr.mxu0 0.0
  %3360 = vmatpush2.msra.mxu0 0.0
  %3361 = vmatprep.subr.mxu0 0.0
  %3362 = vmatpush2.msra.mxu0 %v3299
  %3363 = vmatprep.subr.mxu0 0.0
  %3364 = vmatpush2.msra.mxu0 %v3293
  %3365 = vmatprep.mubr.f32.mxu0 %v3296
  %3366 = vmatmul.mubr.f32.gmra.mxu0 %v3082
  %v3367 = vpop.f32.mrf.mxu0
  %v3368 = vadd.f32 0.0, %v3367
  %v3369 = vpop.f32.mrf.mxu0
  %3370 = vdwg.mxu0
  %v3371 = vadd.f32 %v3273, %v3368
  %s3372 = scalar_lea.vmem %s5, 432
  %v3373 = vld [vmem:[%s3372] sm:$0xff]
  %v3374 = vld [vmem:[%s3372 + $0x8] sm:$0xff]
  %v3375 = vld [vmem:[%s3372 + $0x10] sm:$0xff]
  %v3376 = vld [vmem:[%s3372 + $0x18] sm:$0xff]
  %v3377 = vld [vmem:[%s3372 + $0x20] sm:$0xff]
  %v3378 = vld [vmem:[%s3372 + $0x28] sm:$0xff]
  %v3379 = vld [vmem:[%s3372 + $0x30] sm:$0xff]
  %v3380 = vld [vmem:[%s3372 + $0x38] sm:$0xff]
  %v3381 = vld [vmem:[%s3372 + $0x40] sm:$0xff]
  %v3382 = vld [vmem:[%s3372 + $0x48] sm:$0xff]
  %v3383 = vld [vmem:[%s3372 + $0x50] sm:$0xff]
  %v3384 = vld [vmem:[%s3372 + $0x58] sm:$0xff]
  %v3385 = vld [vmem:[%s3372 + $0x60] sm:$0xff]
  %v3386 = vld [vmem:[%s3372 + $0x68] sm:$0xff]
  %v3387 = vld [vmem:[%s3372 + $0x70] sm:$0xff]
  %v3388 = vld [vmem:[%s3372 + $0x78] sm:$0xff]
  %v3389 = vld [vmem:[%s3372 + $0x80] sm:$0xff]
  %v3390 = vld [vmem:[%s3372 + $0x88] sm:$0xf]
  %v3392 = vsel %vm3123, %v3085, 0
  %v3395 = vsel %vm171, %v3390, 0
  %3397 = vmatprep.subr.mxu0 0.0
  %3398 = vmatpush1.msra.mxu0 %v3388
  %3399 = vmatprep.subr.mxu0 0.0
  %3400 = vmatpush1.msra.mxu0 %v3387
  %3401 = vmatprep.subr.mxu0 0.0
  %3402 = vmatpush1.msra.mxu0 %v3386
  %3403 = vmatprep.subr.mxu0 0.0
  %3404 = vmatpush1.msra.mxu0 %v3385
  %3405 = vmatprep.subr.mxu0 0.0
  %3406 = vmatpush1.msra.mxu0 %v3384
  %3407 = vmatprep.subr.mxu0 0.0
  %3408 = vmatpush1.msra.mxu0 %v3383
  %3409 = vmatprep.subr.mxu0 0.0
  %3410 = vmatpush1.msra.mxu0 %v3382
  %3411 = vmatprep.subr.mxu0 0.0
  %3412 = vmatpush1.msra.mxu0 %v3381
  %3413 = vmatprep.subr.mxu0 0.0
  %3414 = vmatpush1.msra.mxu0 %v3380
  %3415 = vmatprep.subr.mxu0 0.0
  %3416 = vmatpush1.msra.mxu0 %v3379
  %3417 = vmatprep.subr.mxu0 0.0
  %3418 = vmatpush1.msra.mxu0 %v3378
  %3419 = vmatprep.subr.mxu0 0.0
  %3420 = vmatpush1.msra.mxu0 %v3377
  %3421 = vmatprep.subr.mxu0 0.0
  %3422 = vmatpush1.msra.mxu0 %v3376
  %3423 = vmatprep.subr.mxu0 0.0
  %3424 = vmatpush1.msra.mxu0 %v3375
  %3425 = vmatprep.subr.mxu0 0.0
  %3426 = vmatpush1.msra.mxu0 %v3374
  %3427 = vmatprep.subr.mxu0 0.0
  %3428 = vmatpush1.msra.mxu0 %v3373
  %3429 = vmatprep.subr.mxu0 0.0
  %3430 = vmatpush2.msra.mxu0 0.0
  %3431 = vmatprep.subr.mxu0 0.0
  %3432 = vmatpush2.msra.mxu0 0.0
  %3433 = vmatprep.subr.mxu0 0.0
  %3434 = vmatpush2.msra.mxu0 0.0
  %3435 = vmatprep.subr.mxu0 0.0
  %3436 = vmatpush2.msra.mxu0 0.0
  %3437 = vmatprep.subr.mxu0 0.0
  %3438 = vmatpush2.msra.mxu0 0.0
  %3439 = vmatprep.subr.mxu0 0.0
  %3440 = vmatpush2.msra.mxu0 0.0
  %3441 = vmatprep.subr.mxu0 0.0
  %3442 = vmatpush2.msra.mxu0 0.0
  %3443 = vmatprep.subr.mxu0 0.0
  %3444 = vmatpush2.msra.mxu0 0.0
  %3445 = vmatprep.subr.mxu0 0.0
  %3446 = vmatpush2.msra.mxu0 0.0
  %3447 = vmatprep.subr.mxu0 0.0
  %3448 = vmatpush2.msra.mxu0 0.0
  %3449 = vmatprep.subr.mxu0 0.0
  %3450 = vmatpush2.msra.mxu0 0.0
  %3451 = vmatprep.subr.mxu0 0.0
  %3452 = vmatpush2.msra.mxu0 0.0
  %3453 = vmatprep.subr.mxu0 0.0
  %3454 = vmatpush2.msra.mxu0 0.0
  %3455 = vmatprep.subr.mxu0 0.0
  %3456 = vmatpush2.msra.mxu0 0.0
  %3457 = vmatprep.subr.mxu0 0.0
  %3458 = vmatpush2.msra.mxu0 %v3395
  %3459 = vmatprep.subr.mxu0 0.0
  %3460 = vmatpush2.msra.mxu0 %v3389
  %3461 = vmatprep.mubr.f32.mxu0 %v3392
  %3462 = vmatmul.mubr.f32.gmra.mxu0 %v3084
  %v3463 = vpop.f32.mrf.mxu0
  %v3464 = vadd.f32 0.0, %v3463
  %v3465 = vpop.f32.mrf.mxu0
  %3466 = vdwg.mxu0
  %v3467 = vadd.f32 %v3371, %v3464
  %v3468 = vld [vmem:[%s6] sm:$0x1]
  %v3470 = vlaneseq
  %v3471 = vshrl.u32 %v3470, 7
  %v3472 = vsub.s32 0, %v3471
  %v3473 = vrot.slane %v3468, %v3472
  %v3475 = vadd.f32 %v3467, %v3473
  %v3476 = vmax.f32 %v3475, 0.0
  %v3477 = vld [vmem:[%s7] sm:$0xff]
  %v3478 = vld [vmem:[%s7 + $0x8] sm:$0xff]
  %v3479 = vld [vmem:[%s7 + $0x10] sm:$0xff]
  %v3480 = vld [vmem:[%s7 + $0x18] sm:$0xff]
  %v3481 = vld [vmem:[%s7 + $0x20] sm:$0xff]
  %v3482 = vld [vmem:[%s7 + $0x28] sm:$0xff]
  %v3483 = vld [vmem:[%s7 + $0x30] sm:$0x3]
  %v3484 = vld [vmem:[%s8] sm:$0x1]
  %v3486 = vlaneseq
  %v3487 = vshrl.u32 %v3486, 7
  %v3488 = vsub.s32 0, %v3487
  %v3489 = vrot.slane %v3484, %v3488
  %vm3491 = vcmask 408576
  %v3493 = vsel %vm3491, %v3476, 0
  %vm3495 = vcmask 1041408
  %v3497 = vsel %vm3495, %v3483, 0
  %3499 = vmatprep.subr.mxu0 0.0
  %3500 = vmatpush1.msra.mxu0 0.0
  %3501 = vmatprep.subr.mxu0 0.0
  %3502 = vmatpush1.msra.mxu0 0.0
  %3503 = vmatprep.subr.mxu0 0.0
  %3504 = vmatpush1.msra.mxu0 0.0
  %3505 = vmatprep.subr.mxu0 0.0
  %3506 = vmatpush1.msra.mxu0 0.0
  %3507 = vmatprep.subr.mxu0 0.0
  %3508 = vmatpush1.msra.mxu0 0.0
  %3509 = vmatprep.subr.mxu0 0.0
  %3510 = vmatpush1.msra.mxu0 0.0
  %3511 = vmatprep.subr.mxu0 0.0
  %3512 = vmatpush1.msra.mxu0 0.0
  %3513 = vmatprep.subr.mxu0 0.0
  %3514 = vmatpush1.msra.mxu0 0.0
  %3515 = vmatprep.subr.mxu0 0.0
  %3516 = vmatpush1.msra.mxu0 0.0
  %3517 = vmatprep.subr.mxu0 0.0
  %3518 = vmatpush1.msra.mxu0 %v3497
  %3519 = vmatprep.subr.mxu0 0.0
  %3520 = vmatpush1.msra.mxu0 %v3482
  %3521 = vmatprep.subr.mxu0 0.0
  %3522 = vmatpush1.msra.mxu0 %v3481
  %3523 = vmatprep.subr.mxu0 0.0
  %3524 = vmatpush1.msra.mxu0 %v3480
  %3525 = vmatprep.subr.mxu0 0.0
  %3526 = vmatpush1.msra.mxu0 %v3479
  %3527 = vmatprep.subr.mxu0 0.0
  %3528 = vmatpush1.msra.mxu0 %v3478
  %3529 = vmatprep.subr.mxu0 0.0
  %3530 = vmatpush1.msra.mxu0 %v3477
  %3531 = vmatprep.subr.mxu0 0.0
  %3532 = vmatpush2.msra.mxu0 0.0
  %3533 = vmatprep.subr.mxu0 0.0
  %3534 = vmatpush2.msra.mxu0 0.0
  %3535 = vmatprep.subr.mxu0 0.0
  %3536 = vmatpush2.msra.mxu0 0.0
  %3537 = vmatprep.subr.mxu0 0.0
  %3538 = vmatpush2.msra.mxu0 0.0
  %3539 = vmatprep.subr.mxu0 0.0
  %3540 = vmatpush2.msra.mxu0 0.0
  %3541 = vmatprep.subr.mxu0 0.0
  %3542 = vmatpush2.msra.mxu0 0.0
  %3543 = vmatprep.subr.mxu0 0.0
  %3544 = vmatpush2.msra.mxu0 0.0
  %3545 = vmatprep.subr.mxu0 0.0
  %3546 = vmatpush2.msra.mxu0 0.0
  %3547 = vmatprep.subr.mxu0 0.0
  %3548 = vmatpush2.msra.mxu0 0.0
  %3549 = vmatprep.subr.mxu0 0.0
  %3550 = vmatpush2.msra.mxu0 0.0
  %3551 = vmatprep.subr.mxu0 0.0
  %3552 = vmatpush2.msra.mxu0 0.0
  %3553 = vmatprep.subr.mxu0 0.0
  %3554 = vmatpush2.msra.mxu0 0.0
  %3555 = vmatprep.subr.mxu0 0.0
  %3556 = vmatpush2.msra.mxu0 0.0
  %3557 = vmatprep.subr.mxu0 0.0
  %3558 = vmatpush2.msra.mxu0 0.0
  %3559 = vmatprep.subr.mxu0 0.0
  %3560 = vmatpush2.msra.mxu0 0.0
  %3561 = vmatprep.subr.mxu0 0.0
  %3562 = vmatpush2.msra.mxu0 0.0
  %3563 = vmatprep.mubr.f32.mxu0 0.0
  %3564 = vmatmul.mubr.f32.gmra.mxu0 %v3493
  %v3565 = vpop.f32.mrf.mxu0
  %v3566 = vadd.f32 %v3489, %v3565
  %v3567 = vpop.f32.mrf.mxu0
  %3568 = vdwg.mxu0
  %3569 = vmax.xlane.f32.xlu0 %v3566
  %v3570 = vpop.xlane.xlu0 %3569
  %v3571 = vsub.f32 %v3566, %v3570
  %v3572 = vmul.f32 %v3571, 1.442695
  %v3573 = vpow.pop %v3572
  %3574 = vadd.xlane.f32.xlu0 %v3573
  %v3575 = vpop.xlane.xlu0 %3574
  %v3576 = vlog2.pop %v3575
  %v3577 = vmul.f32 %v3576, 0.6931472
  %v3578 = vadd.f32 %v3570, %v3577
  %v3579 = vsub.f32 %v3566, %v3578
  %3580 = vst [vmem:[%s9] sm:$0xff] %v3579
  // Predicated region
  $region38: #{net_forward.1} parent=0 // pred_check
    _
  $region39: #{net_forward.1} parent=0 // pred_check_branch
    %3582 = sbr.rel (0) target = $region41
  $region40: #{net_forward.1} parent=0 // pred_region
    _
  $region41: #{net_forward.1} parent=0 // pred_fallthru
    _
  // Predicated region
  $region42: #{net_forward.1} parent=0 // pred_check
    _
  $region43: #{net_forward.1} parent=0 // pred_check_branch
    %3584 = sbr.rel (0) target = $region45
  $region44: #{net_forward.1} parent=0 // pred_region
    _
  $region45: #{net_forward.1} parent=0 // pred_fallthru
    _

</llo_original>
